<compile_context>
chip_gen: v6e
topology: v6e:2x2x1
jax: 0.10.0
libtpu: 0.0.40
codegen_flags: <defaults>
</compile_context>

<pallas_src>
import numpy as np
import jax
import jax.numpy as jnp
from jax.experimental import pallas as pl
from jax.experimental.pallas import tpu as pltpu

BN_EPS = 1e-5


def _vmem():
    return pl.BlockSpec(memory_space=pltpu.MemorySpace.VMEM)


def _bn_swish(y, gamma, beta):
    """Training-mode BatchNorm (biased var) + Swish on an (M, C) f32 slab.

    One-pass stats (sum / sum-of-squares); Swish = yn * 1/(1+exp(-yn)) with
    both exp and the reciprocal on the EUP slot.
    """
    inv_m = jnp.float32(1.0 / y.shape[0])
    s1 = jnp.sum(y, axis=0, keepdims=True)
    s2 = jnp.sum(y * y, axis=0, keepdims=True)
    mean = s1 * inv_m
    var = s2 * inv_m - mean * mean
    yn = (y - mean) * jax.lax.rsqrt(var + BN_EPS)
    yn = yn * gamma + beta
    return yn * pl.reciprocal(1.0 + jnp.exp(-yn), approx=True)


def convblock_kernel(xee_ref, xeo_ref, xoe_ref, xoo_ref,
                     w1_ref, b1_ref, g1_ref, bt1_ref,
                     w3_ref, b3_ref, g2_ref, bt2_ref,
                     o_ref):
    """Fused ConvBlock forward.

    x??_ref : (N, Ho+1, Wo+1, Cin) f32 -- (H,W)-parity blocks of the padded
              input: x_{pq}[n,i,j] = xpad[n, 2i+p, 2j+q].
    w1_ref  : (9*Cin, Chalf) bf16 -- conv3x3 weights with the 1x1 conv folded in.
    w3_ref  : (9*Chalf, Cout) bf16 -- stride-2 conv3x3 weights.
    o_ref   : (N, Ho, Wo, Cout) f32, Ho = H//2, Wo = W//2.
    """
    N, Ho, Wo, Cout = o_ref.shape
    Cin = xee_ref.shape[-1]
    Chalf = w1_ref.shape[1]
    Mq = N * Ho * Wo                      # rows per (H,W)-parity output group

    xblk = {(0, 0): xee_ref, (0, 1): xeo_ref, (1, 0): xoe_ref, (1, 1): xoo_ref}

    # ---- stage 1: folded conv3x3, in-kernel im2col ---------------------------
    # Output group (ph, pw) covers y at (h=2a+ph, w=2b+pw); tap (dh, dw) reads
    # xpad[2a+ph+dh, 2b+pw+dw] = x_{(ph+dh)%2,(pw+dw)%2}[a+(ph+dh)//2, b+(pw+dw)//2].
    def group_patches(ph, pw):
        taps = []
        for dh in range(3):
            for dw in range(3):
                r, c = ph + dh, pw + dw
                blk = xblk[(r % 2, c % 2)]
                di, dj = r // 2, c // 2
                taps.append(blk[:, di:di + Ho, dj:dj + Wo, :])
        return jnp.concatenate(taps, axis=-1)            # (N, Ho, Wo, 9*Cin)

    # Row order = 4-way parity blocks [ee, eo, oe, oo]: stage-2 views below are
    # contiguous row ranges of y (addressing only, no gather).
    p1 = jnp.concatenate(
        [group_patches(0, 0), group_patches(0, 1),
         group_patches(1, 0), group_patches(1, 1)], axis=0)   # (4N, Ho, Wo, 9Cin)
    p1 = p1.reshape(4 * Mq, 9 * Cin).astype(jnp.bfloat16)

    y = jnp.dot(p1, w1_ref[...], preferred_element_type=jnp.float32)
    y = y + b1_ref[...]
    y = _bn_swish(y, g1_ref[...], bt1_ref[...])               # (4*Mq, Chalf) f32

    # ---- stage 2: stride-2 conv3x3 via parity views + zero-border shifts -----
    y4 = y.reshape(4 * N, Ho, Wo, Chalf)
    ygrp = {(0, 0): y4[0 * N:1 * N],      # y at (even h, even w)
            (0, 1): y4[1 * N:2 * N],      # (even h, odd w)
            (1, 0): y4[2 * N:3 * N],      # (odd h, even w)
            (1, 1): y4[3 * N:4 * N]}      # (odd h, odd w)

    def shift_h(a):   # a[:, i-1, :, :] with a zero row at i == 0
        z = jnp.zeros((N, 1, Wo, Chalf), a.dtype)
        return jnp.concatenate([z, a[:, :Ho - 1, :, :]], axis=1)

    def shift_w(a):   # a[:, :, j-1, :] with a zero column at j == 0
        z = jnp.zeros((N, Ho, 1, Chalf), a.dtype)
        return jnp.concatenate([z, a[:, :, :Wo - 1, :]], axis=2)

    # Tap (dh, dw) of output (i, j) is y[n, 2i+dh-1, 2j+dw-1] (zero at the
    # implicit -1 padding row/column): parity ((dh+1)%2, (dw+1)%2), shifted
    # down/right by one only for dh==0 / dw==0.
    taps2 = []
    for dh in range(3):
        for dw in range(3):
            a = ygrp[((dh + 1) % 2, (dw + 1) % 2)]
            if dh == 0:
                a = shift_h(a)
            if dw == 0:
                a = shift_w(a)
            taps2.append(a)
    p2 = jnp.concatenate(taps2, axis=-1)                      # (N, Ho, Wo, 9*Chalf)
    p2 = p2.reshape(Mq, 9 * Chalf).astype(jnp.bfloat16)

    z = jnp.dot(p2, w3_ref[...], preferred_element_type=jnp.float32)
    z = z + b3_ref[...]
    z = _bn_swish(z, g2_ref[...], bt2_ref[...])
    o_ref[...] = z.reshape(N, Ho, Wo, Cout)


def conv_block_apply(x_nhwc, p):
    """One ConvBlock, NHWC in -> NHWC out (spatial halved, channels = Cout)."""
    N, H, W, Cin = x_nhwc.shape
    assert H % 2 == 0 and W % 2 == 0, "ConvBlock stride-2 path requires even H, W"
    Cout = p["w1"].shape[-1]
    Chalf = Cout // 2
    Ho, Wo = H // 2, W // 2

    # ---- wrapper glue: only on the weights and the (smallest) input ----------
    # fold conv1x1 into conv3x3:  (x*W1 + b1)*W2 + b2 == x*(W1@W2) + (b1@W2 + b2)
    w1f = jnp.einsum("hwic,cd->hwid", p["w1"], p["w2"])
    w1f = w1f.reshape(9 * Cin, Chalf).astype(jnp.bfloat16)
    b1f = (p["b1"] @ p["w2"] + p["b2"]).astype(jnp.float32)          # (1, Chalf)
    w3f = p["w3"].reshape(9 * Chalf, Cout).astype(jnp.bfloat16)

    # pad + 4-way (H,W)-parity split of the input; all im2col happens in-kernel
    # (no 9x-amplified HBM patch slab, no strided XLA gathers of activations).
    xpad = jnp.pad(x_nhwc, ((0, 0), (1, 1), (1, 1), (0, 0)))
    xq = xpad.reshape(N, Ho + 1, 2, Wo + 1, 2, Cin)
    x_ee = xq[:, :, 0, :, 0, :]
    x_eo = xq[:, :, 0, :, 1, :]
    x_oe = xq[:, :, 1, :, 0, :]
    x_oo = xq[:, :, 1, :, 1, :]

    return pl.pallas_call(
        convblock_kernel,
        out_shape=jax.ShapeDtypeStruct((N, Ho, Wo, Cout), jnp.float32),
        in_specs=[_vmem()] * 12,
        out_specs=_vmem(),
        compiler_params=pltpu.CompilerParams(vmem_limit_bytes=32 * 1024 * 1024),
    )(x_ee, x_eo, x_oe, x_oo,
      w1f, b1f, p["g1"], p["beta1"],
      w3f, p["b3"], p["g2"], p["beta2"])


# ------------------------------ parameters -----------------------------------
def init_conv_block_params(key, cin, cout):
    chalf = cout // 2
    ks = jax.random.split(key, 10)

    def nrm(k, shape, scale):
        return (scale * jax.random.normal(k, shape)).astype(jnp.float32)

    return {
        "w1": nrm(ks[0], (3, 3, cin, cout), 0.25),     # HWIO
        "b1": nrm(ks[1], (1, cout), 0.1),
        "w2": nrm(ks[2], (cout, chalf), 0.25),         # 1x1 conv as matmul
        "b2": nrm(ks[3], (1, chalf), 0.1),
        "g1": 1.0 + nrm(ks[4], (1, chalf), 0.1),
        "beta1": nrm(ks[5], (1, chalf), 0.1),
        "w3": nrm(ks[6], (3, 3, chalf, cout), 0.25),   # HWIO
        "b3": nrm(ks[7], (1, cout), 0.1),
        "g2": 1.0 + nrm(ks[8], (1, cout), 0.1),
        "beta2": nrm(ks[9], (1, cout), 0.1),
    }


# ------------------------------ top-level -------------------------------------
@jax.jit
def conv_block_forward(x_nchw, params):
    x = jnp.transpose(x_nchw, (0, 2, 3, 1))        # NCHW -> NHWC (boundary only)
    y = conv_block_apply(x, params)
    return jnp.transpose(y, (0, 3, 1, 2))          # NHWC -> NCHW


# ------------------------- pure-JAX reference (check) -------------------------
def _ref_bn_swish(y, gamma, beta):
    mean = jnp.mean(y, axis=(0, 1, 2), keepdims=True)
    var = jnp.mean((y - mean) ** 2, axis=(0, 1, 2), keepdims=True)
    yn = (y - mean) / jnp.sqrt(var + BN_EPS)
    yn = yn * gamma.reshape(1, 1, 1, -1) + beta.reshape(1, 1, 1, -1)
    return yn * jax.nn.sigmoid(yn)


def conv_block_reference(x_nchw, p):
    x = jnp.transpose(x_nchw, (0, 2, 3, 1))
    y = jax.lax.conv_general_dilated(
        x, p["w1"], (1, 1), ((1, 1), (1, 1)),
        dimension_numbers=("NHWC", "HWIO", "NHWC"))
    y = y + p["b1"].reshape(1, 1, 1, -1)
    y = jnp.einsum("nhwc,cd->nhwd", y, p["w2"]) + p["b2"].reshape(1, 1, 1, -1)
    y = _ref_bn_swish(y, p["g1"], p["beta1"])
    y = jax.lax.conv_general_dilated(
        y, p["w3"], (2, 2), ((1, 1), (1, 1)),
        dimension_numbers=("NHWC", "HWIO", "NHWC"))
    y = y + p["b3"].reshape(1, 1, 1, -1)
    y = _ref_bn_swish(y, p["g2"], p["beta2"])
    return jnp.transpose(y, (0, 3, 1, 2))


if __name__ == "__main__":
    key = jax.random.PRNGKey(0)
    kx, kp = jax.random.split(key)

    N, Cin, Cout, H, W = 2, 4, 16, 16, 16          # ConvBlock(4, 16)
    x = jax.random.normal(kx, (N, Cin, H, W), jnp.float32)
    params = init_conv_block_params(kp, Cin, Cout)

    out = conv_block_forward(x, params)
    out = jax.block_until_ready(out)
    assert out.shape == (N, Cout, H // 2, W // 2), out.shape

    ref = conv_block_reference(x, params)
    # bf16 MXU operands + approx reciprocal vs. an f32 reference -> loose
    # tolerance; structural errors (wrong tap / BN) would still be O(1).
    np.testing.assert_allclose(np.asarray(out), np.asarray(ref),
                               rtol=1e-1, atol=1e-1)
    print("KERNEL_OK")
</pallas_src>

<mosaic_0001>
module attributes {stable_mosaic.version = 11 : i64} {
  func.func @convblock_kernel(%arg0: memref<2x9x9x4xf32, #tpu.memory_space<vmem>>, %arg1: memref<2x9x9x4xf32, #tpu.memory_space<vmem>>, %arg2: memref<2x9x9x4xf32, #tpu.memory_space<vmem>>, %arg3: memref<2x9x9x4xf32, #tpu.memory_space<vmem>>, %arg4: memref<36x8xbf16, #tpu.memory_space<vmem>>, %arg5: memref<1x8xf32, #tpu.memory_space<vmem>>, %arg6: memref<1x8xf32, #tpu.memory_space<vmem>>, %arg7: memref<1x8xf32, #tpu.memory_space<vmem>>, %arg8: memref<72x16xbf16, #tpu.memory_space<vmem>>, %arg9: memref<1x16xf32, #tpu.memory_space<vmem>>, %arg10: memref<1x16xf32, #tpu.memory_space<vmem>>, %arg11: memref<1x16xf32, #tpu.memory_space<vmem>>, %arg12: memref<2x8x8x16xf32, #tpu.memory_space<vmem>>) attributes {dimension_semantics = [], scalar_prefetch = 0 : i64, scratch_operands = 0 : i64, tpu.core_type = #tpu.core_type<tc>} {
    %c0 = arith.constant 0 : index
    %c0_0 = arith.constant 0 : index
    %c0_1 = arith.constant 0 : index
    %c0_2 = arith.constant 0 : index
    %0 = vector.load %arg0[%c0, %c0_0, %c0_1, %c0_2] : memref<2x9x9x4xf32, #tpu.memory_space<vmem>>, vector<2x8x8x4xf32>
    %c0_3 = arith.constant 0 : index
    %c0_4 = arith.constant 0 : index
    %c0_5 = arith.constant 0 : index
    %c0_6 = arith.constant 0 : index
    %1 = vector.load %arg1[%c0_3, %c0_4, %c0_5, %c0_6] : memref<2x9x9x4xf32, #tpu.memory_space<vmem>>, vector<2x8x8x4xf32>
    %c0_7 = arith.constant 0 : index
    %c0_8 = arith.constant 0 : index
    %c1 = arith.constant 1 : index
    %c0_9 = arith.constant 0 : index
    %2 = vector.load %arg0[%c0_7, %c0_8, %c1, %c0_9] : memref<2x9x9x4xf32, #tpu.memory_space<vmem>>, vector<2x8x8x4xf32>
    %c0_10 = arith.constant 0 : index
    %c0_11 = arith.constant 0 : index
    %c0_12 = arith.constant 0 : index
    %c0_13 = arith.constant 0 : index
    %3 = vector.load %arg2[%c0_10, %c0_11, %c0_12, %c0_13] : memref<2x9x9x4xf32, #tpu.memory_space<vmem>>, vector<2x8x8x4xf32>
    %c0_14 = arith.constant 0 : index
    %c0_15 = arith.constant 0 : index
    %c0_16 = arith.constant 0 : index
    %c0_17 = arith.constant 0 : index
    %4 = vector.load %arg3[%c0_14, %c0_15, %c0_16, %c0_17] : memref<2x9x9x4xf32, #tpu.memory_space<vmem>>, vector<2x8x8x4xf32>
    %c0_18 = arith.constant 0 : index
    %c0_19 = arith.constant 0 : index
    %c1_20 = arith.constant 1 : index
    %c0_21 = arith.constant 0 : index
    %5 = vector.load %arg2[%c0_18, %c0_19, %c1_20, %c0_21] : memref<2x9x9x4xf32, #tpu.memory_space<vmem>>, vector<2x8x8x4xf32>
    %c0_22 = arith.constant 0 : index
    %c1_23 = arith.constant 1 : index
    %c0_24 = arith.constant 0 : index
    %c0_25 = arith.constant 0 : index
    %6 = vector.load %arg0[%c0_22, %c1_23, %c0_24, %c0_25] : memref<2x9x9x4xf32, #tpu.memory_space<vmem>>, vector<2x8x8x4xf32>
    %c0_26 = arith.constant 0 : index
    %c1_27 = arith.constant 1 : index
    %c0_28 = arith.constant 0 : index
    %c0_29 = arith.constant 0 : index
    %7 = vector.load %arg1[%c0_26, %c1_27, %c0_28, %c0_29] : memref<2x9x9x4xf32, #tpu.memory_space<vmem>>, vector<2x8x8x4xf32>
    %c0_30 = arith.constant 0 : index
    %c1_31 = arith.constant 1 : index
    %c1_32 = arith.constant 1 : index
    %c0_33 = arith.constant 0 : index
    %8 = vector.load %arg0[%c0_30, %c1_31, %c1_32, %c0_33] : memref<2x9x9x4xf32, #tpu.memory_space<vmem>>, vector<2x8x8x4xf32>
    %9 = tpu.concatenate %0, %1, %2, %3, %4, %5, %6, %7, %8 in 3 : vector<2x8x8x4xf32>, vector<2x8x8x4xf32>, vector<2x8x8x4xf32>, vector<2x8x8x4xf32>, vector<2x8x8x4xf32>, vector<2x8x8x4xf32>, vector<2x8x8x4xf32>, vector<2x8x8x4xf32>, vector<2x8x8x4xf32> -> vector<2x8x8x36xf32>
    %c0_34 = arith.constant 0 : index
    %c0_35 = arith.constant 0 : index
    %c0_36 = arith.constant 0 : index
    %c0_37 = arith.constant 0 : index
    %10 = vector.load %arg1[%c0_34, %c0_35, %c0_36, %c0_37] : memref<2x9x9x4xf32, #tpu.memory_space<vmem>>, vector<2x8x8x4xf32>
    %c0_38 = arith.constant 0 : index
    %c0_39 = arith.constant 0 : index
    %c1_40 = arith.constant 1 : index
    %c0_41 = arith.constant 0 : index
    %11 = vector.load %arg0[%c0_38, %c0_39, %c1_40, %c0_41] : memref<2x9x9x4xf32, #tpu.memory_space<vmem>>, vector<2x8x8x4xf32>
    %c0_42 = arith.constant 0 : index
    %c0_43 = arith.constant 0 : index
    %c1_44 = arith.constant 1 : index
    %c0_45 = arith.constant 0 : index
    %12 = vector.load %arg1[%c0_42, %c0_43, %c1_44, %c0_45] : memref<2x9x9x4xf32, #tpu.memory_space<vmem>>, vector<2x8x8x4xf32>
    %c0_46 = arith.constant 0 : index
    %c0_47 = arith.constant 0 : index
    %c0_48 = arith.constant 0 : index
    %c0_49 = arith.constant 0 : index
    %13 = vector.load %arg3[%c0_46, %c0_47, %c0_48, %c0_49] : memref<2x9x9x4xf32, #tpu.memory_space<vmem>>, vector<2x8x8x4xf32>
    %c0_50 = arith.constant 0 : index
    %c0_51 = arith.constant 0 : index
    %c1_52 = arith.constant 1 : index
    %c0_53 = arith.constant 0 : index
    %14 = vector.load %arg2[%c0_50, %c0_51, %c1_52, %c0_53] : memref<2x9x9x4xf32, #tpu.memory_space<vmem>>, vector<2x8x8x4xf32>
    %c0_54 = arith.constant 0 : index
    %c0_55 = arith.constant 0 : index
    %c1_56 = arith.constant 1 : index
    %c0_57 = arith.constant 0 : index
    %15 = vector.load %arg3[%c0_54, %c0_55, %c1_56, %c0_57] : memref<2x9x9x4xf32, #tpu.memory_space<vmem>>, vector<2x8x8x4xf32>
    %c0_58 = arith.constant 0 : index
    %c1_59 = arith.constant 1 : index
    %c0_60 = arith.constant 0 : index
    %c0_61 = arith.constant 0 : index
    %16 = vector.load %arg1[%c0_58, %c1_59, %c0_60, %c0_61] : memref<2x9x9x4xf32, #tpu.memory_space<vmem>>, vector<2x8x8x4xf32>
    %c0_62 = arith.constant 0 : index
    %c1_63 = arith.constant 1 : index
    %c1_64 = arith.constant 1 : index
    %c0_65 = arith.constant 0 : index
    %17 = vector.load %arg0[%c0_62, %c1_63, %c1_64, %c0_65] : memref<2x9x9x4xf32, #tpu.memory_space<vmem>>, vector<2x8x8x4xf32>
    %c0_66 = arith.constant 0 : index
    %c1_67 = arith.constant 1 : index
    %c1_68 = arith.constant 1 : index
    %c0_69 = arith.constant 0 : index
    %18 = vector.load %arg1[%c0_66, %c1_67, %c1_68, %c0_69] : memref<2x9x9x4xf32, #tpu.memory_space<vmem>>, vector<2x8x8x4xf32>
    %19 = tpu.concatenate %10, %11, %12, %13, %14, %15, %16, %17, %18 in 3 : vector<2x8x8x4xf32>, vector<2x8x8x4xf32>, vector<2x8x8x4xf32>, vector<2x8x8x4xf32>, vector<2x8x8x4xf32>, vector<2x8x8x4xf32>, vector<2x8x8x4xf32>, vector<2x8x8x4xf32>, vector<2x8x8x4xf32> -> vector<2x8x8x36xf32>
    %c0_70 = arith.constant 0 : index
    %c0_71 = arith.constant 0 : index
    %c0_72 = arith.constant 0 : index
    %c0_73 = arith.constant 0 : index
    %20 = vector.load %arg2[%c0_70, %c0_71, %c0_72, %c0_73] : memref<2x9x9x4xf32, #tpu.memory_space<vmem>>, vector<2x8x8x4xf32>
    %c0_74 = arith.constant 0 : index
    %c0_75 = arith.constant 0 : index
    %c0_76 = arith.constant 0 : index
    %c0_77 = arith.constant 0 : index
    %21 = vector.load %arg3[%c0_74, %c0_75, %c0_76, %c0_77] : memref<2x9x9x4xf32, #tpu.memory_space<vmem>>, vector<2x8x8x4xf32>
    %c0_78 = arith.constant 0 : index
    %c0_79 = arith.constant 0 : index
    %c1_80 = arith.constant 1 : index
    %c0_81 = arith.constant 0 : index
    %22 = vector.load %arg2[%c0_78, %c0_79, %c1_80, %c0_81] : memref<2x9x9x4xf32, #tpu.memory_space<vmem>>, vector<2x8x8x4xf32>
    %c0_82 = arith.constant 0 : index
    %c1_83 = arith.constant 1 : index
    %c0_84 = arith.constant 0 : index
    %c0_85 = arith.constant 0 : index
    %23 = vector.load %arg0[%c0_82, %c1_83, %c0_84, %c0_85] : memref<2x9x9x4xf32, #tpu.memory_space<vmem>>, vector<2x8x8x4xf32>
    %c0_86 = arith.constant 0 : index
    %c1_87 = arith.constant 1 : index
    %c0_88 = arith.constant 0 : index
    %c0_89 = arith.constant 0 : index
    %24 = vector.load %arg1[%c0_86, %c1_87, %c0_88, %c0_89] : memref<2x9x9x4xf32, #tpu.memory_space<vmem>>, vector<2x8x8x4xf32>
    %c0_90 = arith.constant 0 : index
    %c1_91 = arith.constant 1 : index
    %c1_92 = arith.constant 1 : index
    %c0_93 = arith.constant 0 : index
    %25 = vector.load %arg0[%c0_90, %c1_91, %c1_92, %c0_93] : memref<2x9x9x4xf32, #tpu.memory_space<vmem>>, vector<2x8x8x4xf32>
    %c0_94 = arith.constant 0 : index
    %c1_95 = arith.constant 1 : index
    %c0_96 = arith.constant 0 : index
    %c0_97 = arith.constant 0 : index
    %26 = vector.load %arg2[%c0_94, %c1_95, %c0_96, %c0_97] : memref<2x9x9x4xf32, #tpu.memory_space<vmem>>, vector<2x8x8x4xf32>
    %c0_98 = arith.constant 0 : index
    %c1_99 = arith.constant 1 : index
    %c0_100 = arith.constant 0 : index
    %c0_101 = arith.constant 0 : index
    %27 = vector.load %arg3[%c0_98, %c1_99, %c0_100, %c0_101] : memref<2x9x9x4xf32, #tpu.memory_space<vmem>>, vector<2x8x8x4xf32>
    %c0_102 = arith.constant 0 : index
    %c1_103 = arith.constant 1 : index
    %c1_104 = arith.constant 1 : index
    %c0_105 = arith.constant 0 : index
    %28 = vector.load %arg2[%c0_102, %c1_103, %c1_104, %c0_105] : memref<2x9x9x4xf32, #tpu.memory_space<vmem>>, vector<2x8x8x4xf32>
    %29 = tpu.concatenate %20, %21, %22, %23, %24, %25, %26, %27, %28 in 3 : vector<2x8x8x4xf32>, vector<2x8x8x4xf32>, vector<2x8x8x4xf32>, vector<2x8x8x4xf32>, vector<2x8x8x4xf32>, vector<2x8x8x4xf32>, vector<2x8x8x4xf32>, vector<2x8x8x4xf32>, vector<2x8x8x4xf32> -> vector<2x8x8x36xf32>
    %c0_106 = arith.constant 0 : index
    %c0_107 = arith.constant 0 : index
    %c0_108 = arith.constant 0 : index
    %c0_109 = arith.constant 0 : index
    %30 = vector.load %arg3[%c0_106, %c0_107, %c0_108, %c0_109] : memref<2x9x9x4xf32, #tpu.memory_space<vmem>>, vector<2x8x8x4xf32>
    %c0_110 = arith.constant 0 : index
    %c0_111 = arith.constant 0 : index
    %c1_112 = arith.constant 1 : index
    %c0_113 = arith.constant 0 : index
    %31 = vector.load %arg2[%c0_110, %c0_111, %c1_112, %c0_113] : memref<2x9x9x4xf32, #tpu.memory_space<vmem>>, vector<2x8x8x4xf32>
    %c0_114 = arith.constant 0 : index
    %c0_115 = arith.constant 0 : index
    %c1_116 = arith.constant 1 : index
    %c0_117 = arith.constant 0 : index
    %32 = vector.load %arg3[%c0_114, %c0_115, %c1_116, %c0_117] : memref<2x9x9x4xf32, #tpu.memory_space<vmem>>, vector<2x8x8x4xf32>
    %c0_118 = arith.constant 0 : index
    %c1_119 = arith.constant 1 : index
    %c0_120 = arith.constant 0 : index
    %c0_121 = arith.constant 0 : index
    %33 = vector.load %arg1[%c0_118, %c1_119, %c0_120, %c0_121] : memref<2x9x9x4xf32, #tpu.memory_space<vmem>>, vector<2x8x8x4xf32>
    %c0_122 = arith.constant 0 : index
    %c1_123 = arith.constant 1 : index
    %c1_124 = arith.constant 1 : index
    %c0_125 = arith.constant 0 : index
    %34 = vector.load %arg0[%c0_122, %c1_123, %c1_124, %c0_125] : memref<2x9x9x4xf32, #tpu.memory_space<vmem>>, vector<2x8x8x4xf32>
    %c0_126 = arith.constant 0 : index
    %c1_127 = arith.constant 1 : index
    %c1_128 = arith.constant 1 : index
    %c0_129 = arith.constant 0 : index
    %35 = vector.load %arg1[%c0_126, %c1_127, %c1_128, %c0_129] : memref<2x9x9x4xf32, #tpu.memory_space<vmem>>, vector<2x8x8x4xf32>
    %c0_130 = arith.constant 0 : index
    %c1_131 = arith.constant 1 : index
    %c0_132 = arith.constant 0 : index
    %c0_133 = arith.constant 0 : index
    %36 = vector.load %arg3[%c0_130, %c1_131, %c0_132, %c0_133] : memref<2x9x9x4xf32, #tpu.memory_space<vmem>>, vector<2x8x8x4xf32>
    %c0_134 = arith.constant 0 : index
    %c1_135 = arith.constant 1 : index
    %c1_136 = arith.constant 1 : index
    %c0_137 = arith.constant 0 : index
    %37 = vector.load %arg2[%c0_134, %c1_135, %c1_136, %c0_137] : memref<2x9x9x4xf32, #tpu.memory_space<vmem>>, vector<2x8x8x4xf32>
    %c0_138 = arith.constant 0 : index
    %c1_139 = arith.constant 1 : index
    %c1_140 = arith.constant 1 : index
    %c0_141 = arith.constant 0 : index
    %38 = vector.load %arg3[%c0_138, %c1_139, %c1_140, %c0_141] : memref<2x9x9x4xf32, #tpu.memory_space<vmem>>, vector<2x8x8x4xf32>
    %39 = tpu.concatenate %30, %31, %32, %33, %34, %35, %36, %37, %38 in 3 : vector<2x8x8x4xf32>, vector<2x8x8x4xf32>, vector<2x8x8x4xf32>, vector<2x8x8x4xf32>, vector<2x8x8x4xf32>, vector<2x8x8x4xf32>, vector<2x8x8x4xf32>, vector<2x8x8x4xf32>, vector<2x8x8x4xf32> -> vector<2x8x8x36xf32>
    %40 = tpu.concatenate %9, %19, %29, %39 in 0 : vector<2x8x8x36xf32>, vector<2x8x8x36xf32>, vector<2x8x8x36xf32>, vector<2x8x8x36xf32> -> vector<8x8x8x36xf32>
    %41 = vector.shape_cast %40 : vector<8x8x8x36xf32> to vector<512x36xf32>
    %42 = arith.truncf %41 : vector<512x36xf32> to vector<512x36xbf16>
    %c0_142 = arith.constant 0 : index
    %c0_143 = arith.constant 0 : index
    %43 = vector.load %arg4[%c0_142, %c0_143] : memref<36x8xbf16, #tpu.memory_space<vmem>>, vector<36x8xbf16>
    %cst = arith.constant dense<0.000000e+00> : vector<512x8xf32>
    %44 = tpu.matmul %42, %43, %cst {dimension_numbers = #tpu.dot_dimension_numbers<[1], [0], [0], [1], [0, 0, 1, 1], [], []>} : vector<512x36xbf16>, vector<36x8xbf16>, vector<512x8xf32> -> vector<512x8xf32>
    %c0_144 = arith.constant 0 : index
    %c0_145 = arith.constant 0 : index
    %45 = vector.load %arg5[%c0_144, %c0_145] : memref<1x8xf32, #tpu.memory_space<vmem>>, vector<1x8xf32>
    %46 = vector.broadcast %45 : vector<1x8xf32> to vector<512x8xf32>
    %47 = arith.addf %44, %46 : vector<512x8xf32>
    %c0_146 = arith.constant 0 : index
    %c0_147 = arith.constant 0 : index
    %48 = vector.load %arg6[%c0_146, %c0_147] : memref<1x8xf32, #tpu.memory_space<vmem>>, vector<1x8xf32>
    %c0_148 = arith.constant 0 : index
    %c0_149 = arith.constant 0 : index
    %49 = vector.load %arg7[%c0_148, %c0_149] : memref<1x8xf32, #tpu.memory_space<vmem>>, vector<1x8xf32>
    %cst_150 = arith.constant dense<0.000000e+00> : vector<8xf32>
    %50 = vector.multi_reduction <add>, %47, %cst_150 [0] : vector<512x8xf32> to vector<8xf32>
    %51 = vector.shape_cast %50 : vector<8xf32> to vector<1x8xf32>
    %52 = arith.mulf %47, %47 : vector<512x8xf32>
    %cst_151 = arith.constant dense<0.000000e+00> : vector<8xf32>
    %53 = vector.multi_reduction <add>, %52, %cst_151 [0] : vector<512x8xf32> to vector<8xf32>
    %54 = vector.shape_cast %53 : vector<8xf32> to vector<1x8xf32>
    %cst_152 = arith.constant 0.001953125 : f32
    %55 = vector.broadcast %cst_152 : f32 to vector<1x8xf32>
    %56 = arith.mulf %51, %55 : vector<1x8xf32>
    %cst_153 = arith.constant 0.001953125 : f32
    %57 = vector.broadcast %cst_153 : f32 to vector<1x8xf32>
    %58 = arith.mulf %54, %57 : vector<1x8xf32>
    %59 = arith.mulf %56, %56 : vector<1x8xf32>
    %60 = arith.subf %58, %59 : vector<1x8xf32>
    %61 = vector.broadcast %56 : vector<1x8xf32> to vector<512x8xf32>
    %62 = arith.subf %47, %61 : vector<512x8xf32>
    %cst_154 = arith.constant 9.99999974E-6 : f32
    %63 = vector.broadcast %cst_154 : f32 to vector<1x8xf32>
    %64 = arith.addf %60, %63 : vector<1x8xf32>
    %65 = math.rsqrt %64 : vector<1x8xf32>
    %66 = vector.broadcast %65 : vector<1x8xf32> to vector<512x8xf32>
    %67 = arith.mulf %62, %66 : vector<512x8xf32>
    %68 = vector.broadcast %48 : vector<1x8xf32> to vector<512x8xf32>
    %69 = arith.mulf %67, %68 : vector<512x8xf32>
    %70 = vector.broadcast %49 : vector<1x8xf32> to vector<512x8xf32>
    %71 = arith.addf %69, %70 : vector<512x8xf32>
    %cst_155 = arith.constant 0.000000e+00 : f32
    %72 = vector.broadcast %cst_155 : f32 to vector<512x8xf32>
    %73 = arith.subf %72, %71 : vector<512x8xf32>
    %74 = math.exp %73 : vector<512x8xf32>
    %cst_156 = arith.constant 1.000000e+00 : f32
    %75 = vector.broadcast %cst_156 : f32 to vector<512x8xf32>
    %76 = arith.addf %75, %74 : vector<512x8xf32>
    %77 = tpu.reciprocal %76 {approx = true} : vector<512x8xf32> -> vector<512x8xf32>
    %78 = arith.mulf %71, %77 : vector<512x8xf32>
    %79 = vector.shape_cast %78 : vector<512x8xf32> to vector<8x8x8x8xf32>
    %80 = vector.extract_strided_slice %79 {offsets = [0, 0, 0, 0], sizes = [2, 8, 8, 8], strides = [1, 1, 1, 1]} : vector<8x8x8x8xf32> to vector<2x8x8x8xf32>
    %81 = vector.extract_strided_slice %79 {offsets = [2, 0, 0, 0], sizes = [2, 8, 8, 8], strides = [1, 1, 1, 1]} : vector<8x8x8x8xf32> to vector<2x8x8x8xf32>
    %82 = vector.extract_strided_slice %79 {offsets = [4, 0, 0, 0], sizes = [2, 8, 8, 8], strides = [1, 1, 1, 1]} : vector<8x8x8x8xf32> to vector<2x8x8x8xf32>
    %83 = vector.extract_strided_slice %79 {offsets = [6, 0, 0, 0], sizes = [2, 8, 8, 8], strides = [1, 1, 1, 1]} : vector<8x8x8x8xf32> to vector<2x8x8x8xf32>
    %cst_157 = arith.constant 0.000000e+00 : f32
    %84 = vector.broadcast %cst_157 : f32 to vector<2x1x8x8xf32>
    %85 = vector.extract_strided_slice %83 {offsets = [0, 0, 0, 0], sizes = [2, 7, 8, 8], strides = [1, 1, 1, 1]} : vector<2x8x8x8xf32> to vector<2x7x8x8xf32>
    %86 = tpu.concatenate %84, %85 in 1 : vector<2x1x8x8xf32>, vector<2x7x8x8xf32> -> vector<2x8x8x8xf32>
    %cst_158 = arith.constant 0.000000e+00 : f32
    %87 = vector.broadcast %cst_158 : f32 to vector<2x8x1x8xf32>
    %88 = vector.extract_strided_slice %86 {offsets = [0, 0, 0, 0], sizes = [2, 8, 7, 8], strides = [1, 1, 1, 1]} : vector<2x8x8x8xf32> to vector<2x8x7x8xf32>
    %89 = tpu.concatenate %87, %88 in 2 : vector<2x8x1x8xf32>, vector<2x8x7x8xf32> -> vector<2x8x8x8xf32>
    %cst_159 = arith.constant 0.000000e+00 : f32
    %90 = vector.broadcast %cst_159 : f32 to vector<2x1x8x8xf32>
    %91 = vector.extract_strided_slice %82 {offsets = [0, 0, 0, 0], sizes = [2, 7, 8, 8], strides = [1, 1, 1, 1]} : vector<2x8x8x8xf32> to vector<2x7x8x8xf32>
    %92 = tpu.concatenate %90, %91 in 1 : vector<2x1x8x8xf32>, vector<2x7x8x8xf32> -> vector<2x8x8x8xf32>
    %cst_160 = arith.constant 0.000000e+00 : f32
    %93 = vector.broadcast %cst_160 : f32 to vector<2x1x8x8xf32>
    %94 = vector.extract_strided_slice %83 {offsets = [0, 0, 0, 0], sizes = [2, 7, 8, 8], strides = [1, 1, 1, 1]} : vector<2x8x8x8xf32> to vector<2x7x8x8xf32>
    %95 = tpu.concatenate %93, %94 in 1 : vector<2x1x8x8xf32>, vector<2x7x8x8xf32> -> vector<2x8x8x8xf32>
    %cst_161 = arith.constant 0.000000e+00 : f32
    %96 = vector.broadcast %cst_161 : f32 to vector<2x8x1x8xf32>
    %97 = vector.extract_strided_slice %81 {offsets = [0, 0, 0, 0], sizes = [2, 8, 7, 8], strides = [1, 1, 1, 1]} : vector<2x8x8x8xf32> to vector<2x8x7x8xf32>
    %98 = tpu.concatenate %96, %97 in 2 : vector<2x8x1x8xf32>, vector<2x8x7x8xf32> -> vector<2x8x8x8xf32>
    %cst_162 = arith.constant 0.000000e+00 : f32
    %99 = vector.broadcast %cst_162 : f32 to vector<2x8x1x8xf32>
    %100 = vector.extract_strided_slice %83 {offsets = [0, 0, 0, 0], sizes = [2, 8, 7, 8], strides = [1, 1, 1, 1]} : vector<2x8x8x8xf32> to vector<2x8x7x8xf32>
    %101 = tpu.concatenate %99, %100 in 2 : vector<2x8x1x8xf32>, vector<2x8x7x8xf32> -> vector<2x8x8x8xf32>
    %102 = tpu.concatenate %89, %92, %95, %98, %80, %81, %101, %82, %83 in 3 : vector<2x8x8x8xf32>, vector<2x8x8x8xf32>, vector<2x8x8x8xf32>, vector<2x8x8x8xf32>, vector<2x8x8x8xf32>, vector<2x8x8x8xf32>, vector<2x8x8x8xf32>, vector<2x8x8x8xf32>, vector<2x8x8x8xf32> -> vector<2x8x8x72xf32>
    %103 = vector.shape_cast %102 : vector<2x8x8x72xf32> to vector<128x72xf32>
    %104 = arith.truncf %103 : vector<128x72xf32> to vector<128x72xbf16>
    %c0_163 = arith.constant 0 : index
    %c0_164 = arith.constant 0 : index
    %105 = vector.load %arg8[%c0_163, %c0_164] : memref<72x16xbf16, #tpu.memory_space<vmem>>, vector<72x16xbf16>
    %cst_165 = arith.constant dense<0.000000e+00> : vector<128x16xf32>
    %106 = tpu.matmul %104, %105, %cst_165 {dimension_numbers = #tpu.dot_dimension_numbers<[1], [0], [0], [1], [0, 0, 1, 1], [], []>} : vector<128x72xbf16>, vector<72x16xbf16>, vector<128x16xf32> -> vector<128x16xf32>
    %c0_166 = arith.constant 0 : index
    %c0_167 = arith.constant 0 : index
    %107 = vector.load %arg9[%c0_166, %c0_167] : memref<1x16xf32, #tpu.memory_space<vmem>>, vector<1x16xf32>
    %108 = vector.broadcast %107 : vector<1x16xf32> to vector<128x16xf32>
    %109 = arith.addf %106, %108 : vector<128x16xf32>
    %c0_168 = arith.constant 0 : index
    %c0_169 = arith.constant 0 : index
    %110 = vector.load %arg10[%c0_168, %c0_169] : memref<1x16xf32, #tpu.memory_space<vmem>>, vector<1x16xf32>
    %c0_170 = arith.constant 0 : index
    %c0_171 = arith.constant 0 : index
    %111 = vector.load %arg11[%c0_170, %c0_171] : memref<1x16xf32, #tpu.memory_space<vmem>>, vector<1x16xf32>
    %cst_172 = arith.constant dense<0.000000e+00> : vector<16xf32>
    %112 = vector.multi_reduction <add>, %109, %cst_172 [0] : vector<128x16xf32> to vector<16xf32>
    %113 = vector.shape_cast %112 : vector<16xf32> to vector<1x16xf32>
    %114 = arith.mulf %109, %109 : vector<128x16xf32>
    %cst_173 = arith.constant dense<0.000000e+00> : vector<16xf32>
    %115 = vector.multi_reduction <add>, %114, %cst_173 [0] : vector<128x16xf32> to vector<16xf32>
    %116 = vector.shape_cast %115 : vector<16xf32> to vector<1x16xf32>
    %cst_174 = arith.constant 7.812500e-03 : f32
    %117 = vector.broadcast %cst_174 : f32 to vector<1x16xf32>
    %118 = arith.mulf %113, %117 : vector<1x16xf32>
    %cst_175 = arith.constant 7.812500e-03 : f32
    %119 = vector.broadcast %cst_175 : f32 to vector<1x16xf32>
    %120 = arith.mulf %116, %119 : vector<1x16xf32>
    %121 = arith.mulf %118, %118 : vector<1x16xf32>
    %122 = arith.subf %120, %121 : vector<1x16xf32>
    %123 = vector.broadcast %118 : vector<1x16xf32> to vector<128x16xf32>
    %124 = arith.subf %109, %123 : vector<128x16xf32>
    %cst_176 = arith.constant 9.99999974E-6 : f32
    %125 = vector.broadcast %cst_176 : f32 to vector<1x16xf32>
    %126 = arith.addf %122, %125 : vector<1x16xf32>
    %127 = math.rsqrt %126 : vector<1x16xf32>
    %128 = vector.broadcast %127 : vector<1x16xf32> to vector<128x16xf32>
    %129 = arith.mulf %124, %128 : vector<128x16xf32>
    %130 = vector.broadcast %110 : vector<1x16xf32> to vector<128x16xf32>
    %131 = arith.mulf %129, %130 : vector<128x16xf32>
    %132 = vector.broadcast %111 : vector<1x16xf32> to vector<128x16xf32>
    %133 = arith.addf %131, %132 : vector<128x16xf32>
    %cst_177 = arith.constant 0.000000e+00 : f32
    %134 = vector.broadcast %cst_177 : f32 to vector<128x16xf32>
    %135 = arith.subf %134, %133 : vector<128x16xf32>
    %136 = math.exp %135 : vector<128x16xf32>
    %cst_178 = arith.constant 1.000000e+00 : f32
    %137 = vector.broadcast %cst_178 : f32 to vector<128x16xf32>
    %138 = arith.addf %137, %136 : vector<128x16xf32>
    %139 = tpu.reciprocal %138 {approx = true} : vector<128x16xf32> -> vector<128x16xf32>
    %140 = arith.mulf %133, %139 : vector<128x16xf32>
    %141 = vector.shape_cast %140 : vector<128x16xf32> to vector<2x8x8x16xf32>
    %c0_179 = arith.constant 0 : index
    %c0_180 = arith.constant 0 : index
    %c0_181 = arith.constant 0 : index
    %c0_182 = arith.constant 0 : index
    %142 = vector.load %arg12[%c0_179, %c0_180, %c0_181, %c0_182] : memref<2x8x8x16xf32, #tpu.memory_space<vmem>>, vector<2x8x8x16xf32>
    tpu.vector_store %arg12[%c0_179, %c0_180, %c0_181, %c0_182], %141 {strides = array<i32>} : memref<2x8x8x16xf32, #tpu.memory_space<vmem>>, vector<2x8x8x16xf32>,
    return
  }
}

</mosaic_0001>

<llo_original>
// kernel: conv_block_forward.1
$region0: #{conv_block_forward.1}
  #allocation0 [shape = 'u32[]', space=smem, size = 0x4, offset = 0x4, fixed_abs, tag = 'smem constant byte address 0x4 - core index']
  #allocation1 [shape = 'u32[144,128]{1,0:T(1,128)}', space=vmem, size = 0x12000, scoped, tag = 'internal scratch']
  %s0 = inlined_call_operand.vmem [shape: f32[2,9,9,4], index: 0, kind: input, shape index: {}]
  %s1 = inlined_call_operand.vmem [shape: f32[2,9,9,4], index: 1, kind: input, shape index: {}]
  %s2 = inlined_call_operand.vmem [shape: f32[2,9,9,4], index: 2, kind: input, shape index: {}]
  %s3 = inlined_call_operand.vmem [shape: f32[2,9,9,4], index: 3, kind: input, shape index: {}]
  %s4 = inlined_call_operand.vmem [shape: bf16[36,8], index: 4, kind: input, shape index: {}]
  %s5 = inlined_call_operand.vmem [shape: f32[1,8], index: 5, kind: input, shape index: {}]
  %s6 = inlined_call_operand.vmem [shape: f32[1,8], index: 6, kind: input, shape index: {}]
  %s7 = inlined_call_operand.vmem [shape: f32[1,8], index: 7, kind: input, shape index: {}]
  %s8 = inlined_call_operand.vmem [shape: bf16[72,16], index: 8, kind: input, shape index: {}]
  %s9 = inlined_call_operand.vmem [shape: f32[1,16], index: 9, kind: input, shape index: {}]
  %s10 = inlined_call_operand.vmem [shape: f32[1,16], index: 10, kind: input, shape index: {}]
  %s11 = inlined_call_operand.vmem [shape: f32[1,16], index: 11, kind: input, shape index: {}]
  %s12 = inlined_call_operand.hbm [shape: f32[2,8,8,16], index: 12, kind: output, shape index: {}]
  %s13 = sld [smem:[#allocation0]]
  $region58: #{conv_block_forward.1} parent=0
    _
  %s15 = ssub.s32 1, %s13
  %s16 = scalar_select 0, %s15, %s13
  $region1: #{conv_block_forward.1} parent=0
    #allocation2 [shape = 'u8[65536]{0}', space=vmem, size = 0x10000, scoped, tag = 'output window, operand 0, single buffered']
    #allocation3 [shape = 's32[1]{0}', space=sflag, size = 0x4, scoped, tag = 'scoped memory for conv_block_forward.1']
    %17 = vsyncpa [#allocation3], 0
    // Predicated region
    $region2: #{conv_block_forward.1} parent=1 // pred_check
      _
    $region3: #{conv_block_forward.1} parent=1 // pred_check_branch
      %19 = sbr.rel (0) target = $region5
    $region4: #{conv_block_forward.1} parent=1 // pred_region
      _
    $region5: #{conv_block_forward.1} parent=1 // pred_fallthru
      _
    // Predicated region
    $region6: #{conv_block_forward.1} parent=1 // pred_check
      _
    $region7: #{conv_block_forward.1} parent=1 // pred_check_branch
      %21 = sbr.rel (0) target = $region9
    $region8: #{conv_block_forward.1} parent=1 // pred_region
      _
    $region9: #{conv_block_forward.1} parent=1 // pred_fallthru
      _
    // Predicated region
    $region10: #{conv_block_forward.1} parent=1 // pred_check
      _
    $region11: #{conv_block_forward.1} parent=1 // pred_check_branch
      %23 = sbr.rel (0) target = $region13
    $region12: #{conv_block_forward.1} parent=1 // pred_region
      _
    $region13: #{conv_block_forward.1} parent=1 // pred_fallthru
      _
    // Predicated region
    $region14: #{conv_block_forward.1} parent=1 // pred_check
      _
    $region15: #{conv_block_forward.1} parent=1 // pred_check_branch
      %25 = sbr.rel (0) target = $region17
    $region16: #{conv_block_forward.1} parent=1 // pred_region
      _
    $region17: #{conv_block_forward.1} parent=1 // pred_fallthru
      _
    // Predicated region
    $region18: #{conv_block_forward.1} parent=1 // pred_check
      _
    $region19: #{conv_block_forward.1} parent=1 // pred_check_branch
      %27 = sbr.rel (0) target = $region21
    $region20: #{conv_block_forward.1} parent=1 // pred_region
      _
    $region21: #{conv_block_forward.1} parent=1 // pred_fallthru
      _
    // Predicated region
    $region22: #{conv_block_forward.1} parent=1 // pred_check
      _
    $region23: #{conv_block_forward.1} parent=1 // pred_check_branch
      %29 = sbr.rel (0) target = $region25
    $region24: #{conv_block_forward.1} parent=1 // pred_region
      _
    $region25: #{conv_block_forward.1} parent=1 // pred_fallthru
      _
    // Predicated region
    $region26: #{conv_block_forward.1} parent=1 // pred_check
      _
    $region27: #{conv_block_forward.1} parent=1 // pred_check_branch
      %31 = sbr.rel (0) target = $region29
    $region28: #{conv_block_forward.1} parent=1 // pred_region
      _
    $region29: #{conv_block_forward.1} parent=1 // pred_fallthru
      _
    // Predicated region
    $region30: #{conv_block_forward.1} parent=1 // pred_check
      _
    $region31: #{conv_block_forward.1} parent=1 // pred_check_branch
      %33 = sbr.rel (0) target = $region33
    $region32: #{conv_block_forward.1} parent=1 // pred_region
      _
    $region33: #{conv_block_forward.1} parent=1 // pred_fallthru
      _
    // Predicated region
    $region34: #{conv_block_forward.1} parent=1 // pred_check
      _
    $region35: #{conv_block_forward.1} parent=1 // pred_check_branch
      %35 = sbr.rel (0) target = $region37
    $region36: #{conv_block_forward.1} parent=1 // pred_region
      _
    $region37: #{conv_block_forward.1} parent=1 // pred_fallthru
      _
    // Predicated region
    $region38: #{conv_block_forward.1} parent=1 // pred_check
      _
    $region39: #{conv_block_forward.1} parent=1 // pred_check_branch
      %37 = sbr.rel (0) target = $region41
    $region40: #{conv_block_forward.1} parent=1 // pred_region
      _
    $region41: #{conv_block_forward.1} parent=1 // pred_fallthru
      _
    // Predicated region
    $region42: #{conv_block_forward.1} parent=1 // pred_check
      _
    $region43: #{conv_block_forward.1} parent=1 // pred_check_branch
      %39 = sbr.rel (0) target = $region45
    $region44: #{conv_block_forward.1} parent=1 // pred_region
      _
    $region45: #{conv_block_forward.1} parent=1 // pred_fallthru
      _
    // Predicated region
    $region46: #{conv_block_forward.1} parent=1 // pred_check
      _
    $region47: #{conv_block_forward.1} parent=1 // pred_check_branch
      %41 = sbr.rel (0) target = $region49
    $region48: #{conv_block_forward.1} parent=1 // pred_region
      _
    $region49: #{conv_block_forward.1} parent=1 // pred_fallthru
      _
    %v43 = vld [vmem:[%s0] sm:$0xff]
    %v44 = vld [vmem:[%s0 + $0x10] sm:$0xff]
    %v45 = vld [vmem:[%s0 + $0x20] sm:$0xff]
    %v46 = vld [vmem:[%s0 + $0x30] sm:$0xff]
    %v47 = vld [vmem:[%s0 + $0x40] sm:$0xff]
    %v48 = vld [vmem:[%s0 + $0x50] sm:$0xff]
    %v49 = vld [vmem:[%s0 + $0x60] sm:$0xff]
    %v50 = vld [vmem:[%s0 + $0x70] sm:$0xff]
    %v51 = vld [vmem:[%s0 + $0x90] sm:$0xff]
    %v52 = vld [vmem:[%s0 + $0xa0] sm:$0xff]
    %v53 = vld [vmem:[%s0 + $0xb0] sm:$0xff]
    %v54 = vld [vmem:[%s0 + $0xc0] sm:$0xff]
    %v55 = vld [vmem:[%s0 + $0xd0] sm:$0xff]
    %v56 = vld [vmem:[%s0 + $0xe0] sm:$0xff]
    %v57 = vld [vmem:[%s0 + $0xf0] sm:$0xff]
    %v58 = vld [vmem:[%s0 + $0x100] sm:$0xff]
    %v59 = vld [vmem:[%s1] sm:$0xff]
    %v60 = vld [vmem:[%s1 + $0x10] sm:$0xff]
    %v61 = vld [vmem:[%s1 + $0x20] sm:$0xff]
    %v62 = vld [vmem:[%s1 + $0x30] sm:$0xff]
    %v63 = vld [vmem:[%s1 + $0x40] sm:$0xff]
    %v64 = vld [vmem:[%s1 + $0x50] sm:$0xff]
    %v65 = vld [vmem:[%s1 + $0x60] sm:$0xff]
    %v66 = vld [vmem:[%s1 + $0x70] sm:$0xff]
    %v67 = vld [vmem:[%s1 + $0x90] sm:$0xff]
    %v68 = vld [vmem:[%s1 + $0xa0] sm:$0xff]
    %v69 = vld [vmem:[%s1 + $0xb0] sm:$0xff]
    %v70 = vld [vmem:[%s1 + $0xc0] sm:$0xff]
    %v71 = vld [vmem:[%s1 + $0xd0] sm:$0xff]
    %v72 = vld [vmem:[%s1 + $0xe0] sm:$0xff]
    %v73 = vld [vmem:[%s1 + $0xf0] sm:$0xff]
    %v74 = vld [vmem:[%s1 + $0x100] sm:$0xff]
    %v75 = vld [vmem:[%s0 + $0x1] sm:$0xff]
    %v76 = vld [vmem:[%s0 + $0x11] sm:$0xff]
    %v77 = vld [vmem:[%s0 + $0x21] sm:$0xff]
    %v78 = vld [vmem:[%s0 + $0x31] sm:$0xff]
    %v79 = vld [vmem:[%s0 + $0x41] sm:$0xff]
    %v80 = vld [vmem:[%s0 + $0x51] sm:$0xff]
    %v81 = vld [vmem:[%s0 + $0x61] sm:$0xff]
    %v82 = vld [vmem:[%s0 + $0x71] sm:$0xff]
    %v83 = vld [vmem:[%s0 + $0x91] sm:$0xff]
    %v84 = vld [vmem:[%s0 + $0xa1] sm:$0xff]
    %v85 = vld [vmem:[%s0 + $0xb1] sm:$0xff]
    %v86 = vld [vmem:[%s0 + $0xc1] sm:$0xff]
    %v87 = vld [vmem:[%s0 + $0xd1] sm:$0xff]
    %v88 = vld [vmem:[%s0 + $0xe1] sm:$0xff]
    %v89 = vld [vmem:[%s0 + $0xf1] sm:$0xff]
    %v90 = vld [vmem:[%s0 + $0x101] sm:$0xff]
    %v91 = vld [vmem:[%s2] sm:$0xff]
    %v92 = vld [vmem:[%s2 + $0x10] sm:$0xff]
    %v93 = vld [vmem:[%s2 + $0x20] sm:$0xff]
    %v94 = vld [vmem:[%s2 + $0x30] sm:$0xff]
    %v95 = vld [vmem:[%s2 + $0x40] sm:$0xff]
    %v96 = vld [vmem:[%s2 + $0x50] sm:$0xff]
    %v97 = vld [vmem:[%s2 + $0x60] sm:$0xff]
    %v98 = vld [vmem:[%s2 + $0x70] sm:$0xff]
    %v99 = vld [vmem:[%s2 + $0x90] sm:$0xff]
    %v100 = vld [vmem:[%s2 + $0xa0] sm:$0xff]
    %v101 = vld [vmem:[%s2 + $0xb0] sm:$0xff]
    %v102 = vld [vmem:[%s2 + $0xc0] sm:$0xff]
    %v103 = vld [vmem:[%s2 + $0xd0] sm:$0xff]
    %v104 = vld [vmem:[%s2 + $0xe0] sm:$0xff]
    %v105 = vld [vmem:[%s2 + $0xf0] sm:$0xff]
    %v106 = vld [vmem:[%s2 + $0x100] sm:$0xff]
    %v107 = vld [vmem:[%s3] sm:$0xff]
    %v108 = vld [vmem:[%s3 + $0x10] sm:$0xff]
    %v109 = vld [vmem:[%s3 + $0x20] sm:$0xff]
    %v110 = vld [vmem:[%s3 + $0x30] sm:$0xff]
    %v111 = vld [vmem:[%s3 + $0x40] sm:$0xff]
    %v112 = vld [vmem:[%s3 + $0x50] sm:$0xff]
    %v113 = vld [vmem:[%s3 + $0x60] sm:$0xff]
    %v114 = vld [vmem:[%s3 + $0x70] sm:$0xff]
    %v115 = vld [vmem:[%s3 + $0x90] sm:$0xff]
    %v116 = vld [vmem:[%s3 + $0xa0] sm:$0xff]
    %v117 = vld [vmem:[%s3 + $0xb0] sm:$0xff]
    %v118 = vld [vmem:[%s3 + $0xc0] sm:$0xff]
    %v119 = vld [vmem:[%s3 + $0xd0] sm:$0xff]
    %v120 = vld [vmem:[%s3 + $0xe0] sm:$0xff]
    %v121 = vld [vmem:[%s3 + $0xf0] sm:$0xff]
    %v122 = vld [vmem:[%s3 + $0x100] sm:$0xff]
    %v123 = vld [vmem:[%s2 + $0x1] sm:$0xff]
    %v124 = vld [vmem:[%s2 + $0x11] sm:$0xff]
    %v125 = vld [vmem:[%s2 + $0x21] sm:$0xff]
    %v126 = vld [vmem:[%s2 + $0x31] sm:$0xff]
    %v127 = vld [vmem:[%s2 + $0x41] sm:$0xff]
    %v128 = vld [vmem:[%s2 + $0x51] sm:$0xff]
    %v129 = vld [vmem:[%s2 + $0x61] sm:$0xff]
    %v130 = vld [vmem:[%s2 + $0x71] sm:$0xff]
    %v131 = vld [vmem:[%s2 + $0x91] sm:$0xff]
    %v132 = vld [vmem:[%s2 + $0xa1] sm:$0xff]
    %v133 = vld [vmem:[%s2 + $0xb1] sm:$0xff]
    %v134 = vld [vmem:[%s2 + $0xc1] sm:$0xff]
    %v135 = vld [vmem:[%s2 + $0xd1] sm:$0xff]
    %v136 = vld [vmem:[%s2 + $0xe1] sm:$0xff]
    %v137 = vld [vmem:[%s2 + $0xf1] sm:$0xff]
    %v138 = vld [vmem:[%s2 + $0x101] sm:$0xff]
    %s139 = scalar_lea.vmem %s0, 16
    %v140 = vld [vmem:[%s139] sm:$0xff]
    %v141 = vld [vmem:[%s139 + $0x10] sm:$0xff]
    %v142 = vld [vmem:[%s139 + $0x20] sm:$0xff]
    %v143 = vld [vmem:[%s139 + $0x30] sm:$0xff]
    %v144 = vld [vmem:[%s139 + $0x40] sm:$0xff]
    %v145 = vld [vmem:[%s139 + $0x50] sm:$0xff]
    %v146 = vld [vmem:[%s139 + $0x60] sm:$0xff]
    %v147 = vld [vmem:[%s139 + $0x70] sm:$0xff]
    %v148 = vld [vmem:[%s139 + $0x90] sm:$0xff]
    %v149 = vld [vmem:[%s139 + $0xa0] sm:$0xff]
    %v150 = vld [vmem:[%s139 + $0xb0] sm:$0xff]
    %v151 = vld [vmem:[%s139 + $0xc0] sm:$0xff]
    %v152 = vld [vmem:[%s139 + $0xd0] sm:$0xff]
    %v153 = vld [vmem:[%s139 + $0xe0] sm:$0xff]
    %v154 = vld [vmem:[%s139 + $0xf0] sm:$0xff]
    %v155 = vld [vmem:[%s139 + $0x100] sm:$0xff]
    %s156 = scalar_lea.vmem %s1, 16
    %v157 = vld [vmem:[%s156] sm:$0xff]
    %v158 = vld [vmem:[%s156 + $0x10] sm:$0xff]
    %v159 = vld [vmem:[%s156 + $0x20] sm:$0xff]
    %v160 = vld [vmem:[%s156 + $0x30] sm:$0xff]
    %v161 = vld [vmem:[%s156 + $0x40] sm:$0xff]
    %v162 = vld [vmem:[%s156 + $0x50] sm:$0xff]
    %v163 = vld [vmem:[%s156 + $0x60] sm:$0xff]
    %v164 = vld [vmem:[%s156 + $0x70] sm:$0xff]
    %v165 = vld [vmem:[%s156 + $0x90] sm:$0xff]
    %v166 = vld [vmem:[%s156 + $0xa0] sm:$0xff]
    %v167 = vld [vmem:[%s156 + $0xb0] sm:$0xff]
    %v168 = vld [vmem:[%s156 + $0xc0] sm:$0xff]
    %v169 = vld [vmem:[%s156 + $0xd0] sm:$0xff]
    %v170 = vld [vmem:[%s156 + $0xe0] sm:$0xff]
    %v171 = vld [vmem:[%s156 + $0xf0] sm:$0xff]
    %v172 = vld [vmem:[%s156 + $0x100] sm:$0xff]
    %v173 = vld [vmem:[%s139 + $0x1] sm:$0xff]
    %v174 = vld [vmem:[%s139 + $0x11] sm:$0xff]
    %v175 = vld [vmem:[%s139 + $0x21] sm:$0xff]
    %v176 = vld [vmem:[%s139 + $0x31] sm:$0xff]
    %v177 = vld [vmem:[%s139 + $0x41] sm:$0xff]
    %v178 = vld [vmem:[%s139 + $0x51] sm:$0xff]
    %v179 = vld [vmem:[%s139 + $0x61] sm:$0xff]
    %v180 = vld [vmem:[%s139 + $0x71] sm:$0xff]
    %v181 = vld [vmem:[%s139 + $0x91] sm:$0xff]
    %v182 = vld [vmem:[%s139 + $0xa1] sm:$0xff]
    %v183 = vld [vmem:[%s139 + $0xb1] sm:$0xff]
    %v184 = vld [vmem:[%s139 + $0xc1] sm:$0xff]
    %v185 = vld [vmem:[%s139 + $0xd1] sm:$0xff]
    %v186 = vld [vmem:[%s139 + $0xe1] sm:$0xff]
    %v187 = vld [vmem:[%s139 + $0xf1] sm:$0xff]
    %v188 = vld [vmem:[%s139 + $0x101] sm:$0xff]
    %205 = vrot.lane.b32.xlu0 %v59, 4
    %v206 = vpop.permute.xlu0 %205
    %207 = vrot.lane.b32.xlu0 %v60, 4
    %v208 = vpop.permute.xlu0 %207
    %209 = vrot.lane.b32.xlu0 %v61, 4
    %v210 = vpop.permute.xlu0 %209
    %211 = vrot.lane.b32.xlu0 %v62, 4
    %v212 = vpop.permute.xlu0 %211
    %213 = vrot.lane.b32.xlu0 %v63, 4
    %v214 = vpop.permute.xlu0 %213
    %215 = vrot.lane.b32.xlu0 %v64, 4
    %v216 = vpop.permute.xlu0 %215
    %217 = vrot.lane.b32.xlu0 %v65, 4
    %v218 = vpop.permute.xlu0 %217
    %219 = vrot.lane.b32.xlu0 %v66, 4
    %v220 = vpop.permute.xlu0 %219
    %221 = vrot.lane.b32.xlu0 %v67, 4
    %v222 = vpop.permute.xlu0 %221
    %223 = vrot.lane.b32.xlu0 %v68, 4
    %v224 = vpop.permute.xlu0 %223
    %225 = vrot.lane.b32.xlu0 %v69, 4
    %v226 = vpop.permute.xlu0 %225
    %227 = vrot.lane.b32.xlu0 %v70, 4
    %v228 = vpop.permute.xlu0 %227
    %229 = vrot.lane.b32.xlu0 %v71, 4
    %v230 = vpop.permute.xlu0 %229
    %231 = vrot.lane.b32.xlu0 %v72, 4
    %v232 = vpop.permute.xlu0 %231
    %233 = vrot.lane.b32.xlu0 %v73, 4
    %v234 = vpop.permute.xlu0 %233
    %235 = vrot.lane.b32.xlu0 %v74, 4
    %v236 = vpop.permute.xlu0 %235
    %269 = vrot.lane.b32.xlu0 %v75, 8
    %v270 = vpop.permute.xlu0 %269
    %271 = vrot.lane.b32.xlu0 %v76, 8
    %v272 = vpop.permute.xlu0 %271
    %273 = vrot.lane.b32.xlu0 %v77, 8
    %v274 = vpop.permute.xlu0 %273
    %275 = vrot.lane.b32.xlu0 %v78, 8
    %v276 = vpop.permute.xlu0 %275
    %277 = vrot.lane.b32.xlu0 %v79, 8
    %v278 = vpop.permute.xlu0 %277
    %279 = vrot.lane.b32.xlu0 %v80, 8
    %v280 = vpop.permute.xlu0 %279
    %281 = vrot.lane.b32.xlu0 %v81, 8
    %v282 = vpop.permute.xlu0 %281
    %283 = vrot.lane.b32.xlu0 %v82, 8
    %v284 = vpop.permute.xlu0 %283
    %285 = vrot.lane.b32.xlu0 %v83, 8
    %v286 = vpop.permute.xlu0 %285
    %287 = vrot.lane.b32.xlu0 %v84, 8
    %v288 = vpop.permute.xlu0 %287
    %289 = vrot.lane.b32.xlu0 %v85, 8
    %v290 = vpop.permute.xlu0 %289
    %291 = vrot.lane.b32.xlu0 %v86, 8
    %v292 = vpop.permute.xlu0 %291
    %293 = vrot.lane.b32.xlu0 %v87, 8
    %v294 = vpop.permute.xlu0 %293
    %295 = vrot.lane.b32.xlu0 %v88, 8
    %v296 = vpop.permute.xlu0 %295
    %297 = vrot.lane.b32.xlu0 %v89, 8
    %v298 = vpop.permute.xlu0 %297
    %299 = vrot.lane.b32.xlu0 %v90, 8
    %v300 = vpop.permute.xlu0 %299
    %333 = vrot.lane.b32.xlu0 %v91, 12
    %v334 = vpop.permute.xlu0 %333
    %335 = vrot.lane.b32.xlu0 %v92, 12
    %v336 = vpop.permute.xlu0 %335
    %337 = vrot.lane.b32.xlu0 %v93, 12
    %v338 = vpop.permute.xlu0 %337
    %339 = vrot.lane.b32.xlu0 %v94, 12
    %v340 = vpop.permute.xlu0 %339
    %341 = vrot.lane.b32.xlu0 %v95, 12
    %v342 = vpop.permute.xlu0 %341
    %343 = vrot.lane.b32.xlu0 %v96, 12
    %v344 = vpop.permute.xlu0 %343
    %345 = vrot.lane.b32.xlu0 %v97, 12
    %v346 = vpop.permute.xlu0 %345
    %347 = vrot.lane.b32.xlu0 %v98, 12
    %v348 = vpop.permute.xlu0 %347
    %349 = vrot.lane.b32.xlu0 %v99, 12
    %v350 = vpop.permute.xlu0 %349
    %351 = vrot.lane.b32.xlu0 %v100, 12
    %v352 = vpop.permute.xlu0 %351
    %353 = vrot.lane.b32.xlu0 %v101, 12
    %v354 = vpop.permute.xlu0 %353
    %355 = vrot.lane.b32.xlu0 %v102, 12
    %v356 = vpop.permute.xlu0 %355
    %357 = vrot.lane.b32.xlu0 %v103, 12
    %v358 = vpop.permute.xlu0 %357
    %359 = vrot.lane.b32.xlu0 %v104, 12
    %v360 = vpop.permute.xlu0 %359
    %361 = vrot.lane.b32.xlu0 %v105, 12
    %v362 = vpop.permute.xlu0 %361
    %363 = vrot.lane.b32.xlu0 %v106, 12
    %v364 = vpop.permute.xlu0 %363
    %397 = vrot.lane.b32.xlu0 %v107, 16
    %v398 = vpop.permute.xlu0 %397
    %399 = vrot.lane.b32.xlu0 %v108, 16
    %v400 = vpop.permute.xlu0 %399
    %401 = vrot.lane.b32.xlu0 %v109, 16
    %v402 = vpop.permute.xlu0 %401
    %403 = vrot.lane.b32.xlu0 %v110, 16
    %v404 = vpop.permute.xlu0 %403
    %405 = vrot.lane.b32.xlu0 %v111, 16
    %v406 = vpop.permute.xlu0 %405
    %407 = vrot.lane.b32.xlu0 %v112, 16
    %v408 = vpop.permute.xlu0 %407
    %409 = vrot.lane.b32.xlu0 %v113, 16
    %v410 = vpop.permute.xlu0 %409
    %411 = vrot.lane.b32.xlu0 %v114, 16
    %v412 = vpop.permute.xlu0 %411
    %413 = vrot.lane.b32.xlu0 %v115, 16
    %v414 = vpop.permute.xlu0 %413
    %415 = vrot.lane.b32.xlu0 %v116, 16
    %v416 = vpop.permute.xlu0 %415
    %417 = vrot.lane.b32.xlu0 %v117, 16
    %v418 = vpop.permute.xlu0 %417
    %419 = vrot.lane.b32.xlu0 %v118, 16
    %v420 = vpop.permute.xlu0 %419
    %421 = vrot.lane.b32.xlu0 %v119, 16
    %v422 = vpop.permute.xlu0 %421
    %423 = vrot.lane.b32.xlu0 %v120, 16
    %v424 = vpop.permute.xlu0 %423
    %425 = vrot.lane.b32.xlu0 %v121, 16
    %v426 = vpop.permute.xlu0 %425
    %427 = vrot.lane.b32.xlu0 %v122, 16
    %v428 = vpop.permute.xlu0 %427
    %461 = vrot.lane.b32.xlu0 %v123, 20
    %v462 = vpop.permute.xlu0 %461
    %463 = vrot.lane.b32.xlu0 %v124, 20
    %v464 = vpop.permute.xlu0 %463
    %465 = vrot.lane.b32.xlu0 %v125, 20
    %v466 = vpop.permute.xlu0 %465
    %467 = vrot.lane.b32.xlu0 %v126, 20
    %v468 = vpop.permute.xlu0 %467
    %469 = vrot.lane.b32.xlu0 %v127, 20
    %v470 = vpop.permute.xlu0 %469
    %471 = vrot.lane.b32.xlu0 %v128, 20
    %v472 = vpop.permute.xlu0 %471
    %473 = vrot.lane.b32.xlu0 %v129, 20
    %v474 = vpop.permute.xlu0 %473
    %475 = vrot.lane.b32.xlu0 %v130, 20
    %v476 = vpop.permute.xlu0 %475
    %477 = vrot.lane.b32.xlu0 %v131, 20
    %v478 = vpop.permute.xlu0 %477
    %479 = vrot.lane.b32.xlu0 %v132, 20
    %v480 = vpop.permute.xlu0 %479
    %481 = vrot.lane.b32.xlu0 %v133, 20
    %v482 = vpop.permute.xlu0 %481
    %483 = vrot.lane.b32.xlu0 %v134, 20
    %v484 = vpop.permute.xlu0 %483
    %485 = vrot.lane.b32.xlu0 %v135, 20
    %v486 = vpop.permute.xlu0 %485
    %487 = vrot.lane.b32.xlu0 %v136, 20
    %v488 = vpop.permute.xlu0 %487
    %489 = vrot.lane.b32.xlu0 %v137, 20
    %v490 = vpop.permute.xlu0 %489
    %491 = vrot.lane.b32.xlu0 %v138, 20
    %v492 = vpop.permute.xlu0 %491
    %525 = vrot.lane.b32.xlu0 %v140, 24
    %v526 = vpop.permute.xlu0 %525
    %527 = vrot.lane.b32.xlu0 %v141, 24
    %v528 = vpop.permute.xlu0 %527
    %529 = vrot.lane.b32.xlu0 %v142, 24
    %v530 = vpop.permute.xlu0 %529
    %531 = vrot.lane.b32.xlu0 %v143, 24
    %v532 = vpop.permute.xlu0 %531
    %533 = vrot.lane.b32.xlu0 %v144, 24
    %v534 = vpop.permute.xlu0 %533
    %535 = vrot.lane.b32.xlu0 %v145, 24
    %v536 = vpop.permute.xlu0 %535
    %537 = vrot.lane.b32.xlu0 %v146, 24
    %v538 = vpop.permute.xlu0 %537
    %539 = vrot.lane.b32.xlu0 %v147, 24
    %v540 = vpop.permute.xlu0 %539
    %541 = vrot.lane.b32.xlu0 %v148, 24
    %v542 = vpop.permute.xlu0 %541
    %543 = vrot.lane.b32.xlu0 %v149, 24
    %v544 = vpop.permute.xlu0 %543
    %545 = vrot.lane.b32.xlu0 %v150, 24
    %v546 = vpop.permute.xlu0 %545
    %547 = vrot.lane.b32.xlu0 %v151, 24
    %v548 = vpop.permute.xlu0 %547
    %549 = vrot.lane.b32.xlu0 %v152, 24
    %v550 = vpop.permute.xlu0 %549
    %551 = vrot.lane.b32.xlu0 %v153, 24
    %v552 = vpop.permute.xlu0 %551
    %553 = vrot.lane.b32.xlu0 %v154, 24
    %v554 = vpop.permute.xlu0 %553
    %555 = vrot.lane.b32.xlu0 %v155, 24
    %v556 = vpop.permute.xlu0 %555
    %589 = vrot.lane.b32.xlu0 %v157, 28
    %v590 = vpop.permute.xlu0 %589
    %591 = vrot.lane.b32.xlu0 %v158, 28
    %v592 = vpop.permute.xlu0 %591
    %593 = vrot.lane.b32.xlu0 %v159, 28
    %v594 = vpop.permute.xlu0 %593
    %595 = vrot.lane.b32.xlu0 %v160, 28
    %v596 = vpop.permute.xlu0 %595
    %597 = vrot.lane.b32.xlu0 %v161, 28
    %v598 = vpop.permute.xlu0 %597
    %599 = vrot.lane.b32.xlu0 %v162, 28
    %v600 = vpop.permute.xlu0 %599
    %601 = vrot.lane.b32.xlu0 %v163, 28
    %v602 = vpop.permute.xlu0 %601
    %603 = vrot.lane.b32.xlu0 %v164, 28
    %v604 = vpop.permute.xlu0 %603
    %605 = vrot.lane.b32.xlu0 %v165, 28
    %v606 = vpop.permute.xlu0 %605
    %607 = vrot.lane.b32.xlu0 %v166, 28
    %v608 = vpop.permute.xlu0 %607
    %609 = vrot.lane.b32.xlu0 %v167, 28
    %v610 = vpop.permute.xlu0 %609
    %611 = vrot.lane.b32.xlu0 %v168, 28
    %v612 = vpop.permute.xlu0 %611
    %613 = vrot.lane.b32.xlu0 %v169, 28
    %v614 = vpop.permute.xlu0 %613
    %615 = vrot.lane.b32.xlu0 %v170, 28
    %v616 = vpop.permute.xlu0 %615
    %617 = vrot.lane.b32.xlu0 %v171, 28
    %v618 = vpop.permute.xlu0 %617
    %619 = vrot.lane.b32.xlu0 %v172, 28
    %v620 = vpop.permute.xlu0 %619
    %653 = vrot.lane.b32.xlu0 %v173, 32
    %v654 = vpop.permute.xlu0 %653
    %655 = vrot.lane.b32.xlu0 %v174, 32
    %v656 = vpop.permute.xlu0 %655
    %657 = vrot.lane.b32.xlu0 %v175, 32
    %v658 = vpop.permute.xlu0 %657
    %659 = vrot.lane.b32.xlu0 %v176, 32
    %v660 = vpop.permute.xlu0 %659
    %661 = vrot.lane.b32.xlu0 %v177, 32
    %v662 = vpop.permute.xlu0 %661
    %663 = vrot.lane.b32.xlu0 %v178, 32
    %v664 = vpop.permute.xlu0 %663
    %665 = vrot.lane.b32.xlu0 %v179, 32
    %v666 = vpop.permute.xlu0 %665
    %667 = vrot.lane.b32.xlu0 %v180, 32
    %v668 = vpop.permute.xlu0 %667
    %669 = vrot.lane.b32.xlu0 %v181, 32
    %v670 = vpop.permute.xlu0 %669
    %671 = vrot.lane.b32.xlu0 %v182, 32
    %v672 = vpop.permute.xlu0 %671
    %673 = vrot.lane.b32.xlu0 %v183, 32
    %v674 = vpop.permute.xlu0 %673
    %675 = vrot.lane.b32.xlu0 %v184, 32
    %v676 = vpop.permute.xlu0 %675
    %677 = vrot.lane.b32.xlu0 %v185, 32
    %v678 = vpop.permute.xlu0 %677
    %679 = vrot.lane.b32.xlu0 %v186, 32
    %v680 = vpop.permute.xlu0 %679
    %681 = vrot.lane.b32.xlu0 %v187, 32
    %v682 = vpop.permute.xlu0 %681
    %683 = vrot.lane.b32.xlu0 %v188, 32
    %v684 = vpop.permute.xlu0 %683
    %vm701 = vcmask 31744
    %v702 = vsel %vm701, %v43, %v206
    %v703 = vsel %vm701, %v44, %v208
    %v704 = vsel %vm701, %v45, %v210
    %v705 = vsel %vm701, %v46, %v212
    %v706 = vsel %vm701, %v47, %v214
    %v707 = vsel %vm701, %v48, %v216
    %v708 = vsel %vm701, %v49, %v218
    %v709 = vsel %vm701, %v50, %v220
    %v710 = vsel %vm701, %v51, %v222
    %v711 = vsel %vm701, %v52, %v224
    %v712 = vsel %vm701, %v53, %v226
    %v713 = vsel %vm701, %v54, %v228
    %v714 = vsel %vm701, %v55, %v230
    %v715 = vsel %vm701, %v56, %v232
    %v716 = vsel %vm701, %v57, %v234
    %v717 = vsel %vm701, %v58, %v236
    %vm718 = vcmask 64512
    %v719 = vsel %vm718, %v702, %v270
    %v720 = vsel %vm718, %v703, %v272
    %v721 = vsel %vm718, %v704, %v274
    %v722 = vsel %vm718, %v705, %v276
    %v723 = vsel %vm718, %v706, %v278
    %v724 = vsel %vm718, %v707, %v280
    %v725 = vsel %vm718, %v708, %v282
    %v726 = vsel %vm718, %v709, %v284
    %v727 = vsel %vm718, %v710, %v286
    %v728 = vsel %vm718, %v711, %v288
    %v729 = vsel %vm718, %v712, %v290
    %v730 = vsel %vm718, %v713, %v292
    %v731 = vsel %vm718, %v714, %v294
    %v732 = vsel %vm718, %v715, %v296
    %v733 = vsel %vm718, %v716, %v298
    %v734 = vsel %vm718, %v717, %v300
    %vm735 = vcmask 97280
    %v736 = vsel %vm735, %v719, %v334
    %v737 = vsel %vm735, %v720, %v336
    %v738 = vsel %vm735, %v721, %v338
    %v739 = vsel %vm735, %v722, %v340
    %v740 = vsel %vm735, %v723, %v342
    %v741 = vsel %vm735, %v724, %v344
    %v742 = vsel %vm735, %v725, %v346
    %v743 = vsel %vm735, %v726, %v348
    %v744 = vsel %vm735, %v727, %v350
    %v745 = vsel %vm735, %v728, %v352
    %v746 = vsel %vm735, %v729, %v354
    %v747 = vsel %vm735, %v730, %v356
    %v748 = vsel %vm735, %v731, %v358
    %v749 = vsel %vm735, %v732, %v360
    %v750 = vsel %vm735, %v733, %v362
    %v751 = vsel %vm735, %v734, %v364
    %vm752 = vcmask 130048
    %v753 = vsel %vm752, %v736, %v398
    %v754 = vsel %vm752, %v737, %v400
    %v755 = vsel %vm752, %v738, %v402
    %v756 = vsel %vm752, %v739, %v404
    %v757 = vsel %vm752, %v740, %v406
    %v758 = vsel %vm752, %v741, %v408
    %v759 = vsel %vm752, %v742, %v410
    %v760 = vsel %vm752, %v743, %v412
    %v761 = vsel %vm752, %v744, %v414
    %v762 = vsel %vm752, %v745, %v416
    %v763 = vsel %vm752, %v746, %v418
    %v764 = vsel %vm752, %v747, %v420
    %v765 = vsel %vm752, %v748, %v422
    %v766 = vsel %vm752, %v749, %v424
    %v767 = vsel %vm752, %v750, %v426
    %v768 = vsel %vm752, %v751, %v428
    %vm769 = vcmask 162816
    %v770 = vsel %vm769, %v753, %v462
    %v771 = vsel %vm769, %v754, %v464
    %v772 = vsel %vm769, %v755, %v466
    %v773 = vsel %vm769, %v756, %v468
    %v774 = vsel %vm769, %v757, %v470
    %v775 = vsel %vm769, %v758, %v472
    %v776 = vsel %vm769, %v759, %v474
    %v777 = vsel %vm769, %v760, %v476
    %v778 = vsel %vm769, %v761, %v478
    %v779 = vsel %vm769, %v762, %v480
    %v780 = vsel %vm769, %v763, %v482
    %v781 = vsel %vm769, %v764, %v484
    %v782 = vsel %vm769, %v765, %v486
    %v783 = vsel %vm769, %v766, %v488
    %v784 = vsel %vm769, %v767, %v490
    %v785 = vsel %vm769, %v768, %v492
    %vm786 = vcmask 195584
    %v787 = vsel %vm786, %v770, %v526
    %v788 = vsel %vm786, %v771, %v528
    %v789 = vsel %vm786, %v772, %v530
    %v790 = vsel %vm786, %v773, %v532
    %v791 = vsel %vm786, %v774, %v534
    %v792 = vsel %vm786, %v775, %v536
    %v793 = vsel %vm786, %v776, %v538
    %v794 = vsel %vm786, %v777, %v540
    %v795 = vsel %vm786, %v778, %v542
    %v796 = vsel %vm786, %v779, %v544
    %v797 = vsel %vm786, %v780, %v546
    %v798 = vsel %vm786, %v781, %v548
    %v799 = vsel %vm786, %v782, %v550
    %v800 = vsel %vm786, %v783, %v552
    %v801 = vsel %vm786, %v784, %v554
    %v802 = vsel %vm786, %v785, %v556
    %vm803 = vcmask 228352
    %v804 = vsel %vm803, %v787, %v590
    %v805 = vsel %vm803, %v788, %v592
    %v806 = vsel %vm803, %v789, %v594
    %v807 = vsel %vm803, %v790, %v596
    %v808 = vsel %vm803, %v791, %v598
    %v809 = vsel %vm803, %v792, %v600
    %v810 = vsel %vm803, %v793, %v602
    %v811 = vsel %vm803, %v794, %v604
    %v812 = vsel %vm803, %v795, %v606
    %v813 = vsel %vm803, %v796, %v608
    %v814 = vsel %vm803, %v797, %v610
    %v815 = vsel %vm803, %v798, %v612
    %v816 = vsel %vm803, %v799, %v614
    %v817 = vsel %vm803, %v800, %v616
    %v818 = vsel %vm803, %v801, %v618
    %v819 = vsel %vm803, %v802, %v620
    %vm820 = vcmask 261120
    %v821 = vsel %vm820, %v804, %v654
    %v822 = vsel %vm820, %v805, %v656
    %v823 = vsel %vm820, %v806, %v658
    %v824 = vsel %vm820, %v807, %v660
    %v825 = vsel %vm820, %v808, %v662
    %v826 = vsel %vm820, %v809, %v664
    %v827 = vsel %vm820, %v810, %v666
    %v828 = vsel %vm820, %v811, %v668
    %v829 = vsel %vm820, %v812, %v670
    %v830 = vsel %vm820, %v813, %v672
    %v831 = vsel %vm820, %v814, %v674
    %v832 = vsel %vm820, %v815, %v676
    %v833 = vsel %vm820, %v816, %v678
    %v834 = vsel %vm820, %v817, %v680
    %v835 = vsel %vm820, %v818, %v682
    %v836 = vsel %vm820, %v819, %v684
    %v837 = vld [vmem:[%s1 + $0x1] sm:$0xff]
    %v838 = vld [vmem:[%s1 + $0x11] sm:$0xff]
    %v839 = vld [vmem:[%s1 + $0x21] sm:$0xff]
    %v840 = vld [vmem:[%s1 + $0x31] sm:$0xff]
    %v841 = vld [vmem:[%s1 + $0x41] sm:$0xff]
    %v842 = vld [vmem:[%s1 + $0x51] sm:$0xff]
    %v843 = vld [vmem:[%s1 + $0x61] sm:$0xff]
    %v844 = vld [vmem:[%s1 + $0x71] sm:$0xff]
    %v845 = vld [vmem:[%s1 + $0x91] sm:$0xff]
    %v846 = vld [vmem:[%s1 + $0xa1] sm:$0xff]
    %v847 = vld [vmem:[%s1 + $0xb1] sm:$0xff]
    %v848 = vld [vmem:[%s1 + $0xc1] sm:$0xff]
    %v849 = vld [vmem:[%s1 + $0xd1] sm:$0xff]
    %v850 = vld [vmem:[%s1 + $0xe1] sm:$0xff]
    %v851 = vld [vmem:[%s1 + $0xf1] sm:$0xff]
    %v852 = vld [vmem:[%s1 + $0x101] sm:$0xff]
    %v853 = vld [vmem:[%s3 + $0x1] sm:$0xff]
    %v854 = vld [vmem:[%s3 + $0x11] sm:$0xff]
    %v855 = vld [vmem:[%s3 + $0x21] sm:$0xff]
    %v856 = vld [vmem:[%s3 + $0x31] sm:$0xff]
    %v857 = vld [vmem:[%s3 + $0x41] sm:$0xff]
    %v858 = vld [vmem:[%s3 + $0x51] sm:$0xff]
    %v859 = vld [vmem:[%s3 + $0x61] sm:$0xff]
    %v860 = vld [vmem:[%s3 + $0x71] sm:$0xff]
    %v861 = vld [vmem:[%s3 + $0x91] sm:$0xff]
    %v862 = vld [vmem:[%s3 + $0xa1] sm:$0xff]
    %v863 = vld [vmem:[%s3 + $0xb1] sm:$0xff]
    %v864 = vld [vmem:[%s3 + $0xc1] sm:$0xff]
    %v865 = vld [vmem:[%s3 + $0xd1] sm:$0xff]
    %v866 = vld [vmem:[%s3 + $0xe1] sm:$0xff]
    %v867 = vld [vmem:[%s3 + $0xf1] sm:$0xff]
    %v868 = vld [vmem:[%s3 + $0x101] sm:$0xff]
    %v869 = vld [vmem:[%s156 + $0x1] sm:$0xff]
    %v870 = vld [vmem:[%s156 + $0x11] sm:$0xff]
    %v871 = vld [vmem:[%s156 + $0x21] sm:$0xff]
    %v872 = vld [vmem:[%s156 + $0x31] sm:$0xff]
    %v873 = vld [vmem:[%s156 + $0x41] sm:$0xff]
    %v874 = vld [vmem:[%s156 + $0x51] sm:$0xff]
    %v875 = vld [vmem:[%s156 + $0x61] sm:$0xff]
    %v876 = vld [vmem:[%s156 + $0x71] sm:$0xff]
    %v877 = vld [vmem:[%s156 + $0x91] sm:$0xff]
    %v878 = vld [vmem:[%s156 + $0xa1] sm:$0xff]
    %v879 = vld [vmem:[%s156 + $0xb1] sm:$0xff]
    %v880 = vld [vmem:[%s156 + $0xc1] sm:$0xff]
    %v881 = vld [vmem:[%s156 + $0xd1] sm:$0xff]
    %v882 = vld [vmem:[%s156 + $0xe1] sm:$0xff]
    %v883 = vld [vmem:[%s156 + $0xf1] sm:$0xff]
    %v884 = vld [vmem:[%s156 + $0x101] sm:$0xff]
    %885 = vrot.lane.b32.xlu0 %v75, 4
    %v886 = vpop.permute.xlu0 %885
    %887 = vrot.lane.b32.xlu0 %v76, 4
    %v888 = vpop.permute.xlu0 %887
    %889 = vrot.lane.b32.xlu0 %v77, 4
    %v890 = vpop.permute.xlu0 %889
    %891 = vrot.lane.b32.xlu0 %v78, 4
    %v892 = vpop.permute.xlu0 %891
    %893 = vrot.lane.b32.xlu0 %v79, 4
    %v894 = vpop.permute.xlu0 %893
    %895 = vrot.lane.b32.xlu0 %v80, 4
    %v896 = vpop.permute.xlu0 %895
    %897 = vrot.lane.b32.xlu0 %v81, 4
    %v898 = vpop.permute.xlu0 %897
    %899 = vrot.lane.b32.xlu0 %v82, 4
    %v900 = vpop.permute.xlu0 %899
    %901 = vrot.lane.b32.xlu0 %v83, 4
    %v902 = vpop.permute.xlu0 %901
    %903 = vrot.lane.b32.xlu0 %v84, 4
    %v904 = vpop.permute.xlu0 %903
    %905 = vrot.lane.b32.xlu0 %v85, 4
    %v906 = vpop.permute.xlu0 %905
    %907 = vrot.lane.b32.xlu0 %v86, 4
    %v908 = vpop.permute.xlu0 %907
    %909 = vrot.lane.b32.xlu0 %v87, 4
    %v910 = vpop.permute.xlu0 %909
    %911 = vrot.lane.b32.xlu0 %v88, 4
    %v912 = vpop.permute.xlu0 %911
    %913 = vrot.lane.b32.xlu0 %v89, 4
    %v914 = vpop.permute.xlu0 %913
    %915 = vrot.lane.b32.xlu0 %v90, 4
    %v916 = vpop.permute.xlu0 %915
    %949 = vrot.lane.b32.xlu0 %v837, 8
    %v950 = vpop.permute.xlu0 %949
    %951 = vrot.lane.b32.xlu0 %v838, 8
    %v952 = vpop.permute.xlu0 %951
    %953 = vrot.lane.b32.xlu0 %v839, 8
    %v954 = vpop.permute.xlu0 %953
    %955 = vrot.lane.b32.xlu0 %v840, 8
    %v956 = vpop.permute.xlu0 %955
    %957 = vrot.lane.b32.xlu0 %v841, 8
    %v958 = vpop.permute.xlu0 %957
    %959 = vrot.lane.b32.xlu0 %v842, 8
    %v960 = vpop.permute.xlu0 %959
    %961 = vrot.lane.b32.xlu0 %v843, 8
    %v962 = vpop.permute.xlu0 %961
    %963 = vrot.lane.b32.xlu0 %v844, 8
    %v964 = vpop.permute.xlu0 %963
    %965 = vrot.lane.b32.xlu0 %v845, 8
    %v966 = vpop.permute.xlu0 %965
    %967 = vrot.lane.b32.xlu0 %v846, 8
    %v968 = vpop.permute.xlu0 %967
    %969 = vrot.lane.b32.xlu0 %v847, 8
    %v970 = vpop.permute.xlu0 %969
    %971 = vrot.lane.b32.xlu0 %v848, 8
    %v972 = vpop.permute.xlu0 %971
    %973 = vrot.lane.b32.xlu0 %v849, 8
    %v974 = vpop.permute.xlu0 %973
    %975 = vrot.lane.b32.xlu0 %v850, 8
    %v976 = vpop.permute.xlu0 %975
    %977 = vrot.lane.b32.xlu0 %v851, 8
    %v978 = vpop.permute.xlu0 %977
    %979 = vrot.lane.b32.xlu0 %v852, 8
    %v980 = vpop.permute.xlu0 %979
    %997 = vrot.lane.b32.xlu0 %v107, 12
    %v998 = vpop.permute.xlu0 %997
    %999 = vrot.lane.b32.xlu0 %v108, 12
    %v1000 = vpop.permute.xlu0 %999
    %1001 = vrot.lane.b32.xlu0 %v109, 12
    %v1002 = vpop.permute.xlu0 %1001
    %1003 = vrot.lane.b32.xlu0 %v110, 12
    %v1004 = vpop.permute.xlu0 %1003
    %1005 = vrot.lane.b32.xlu0 %v111, 12
    %v1006 = vpop.permute.xlu0 %1005
    %1007 = vrot.lane.b32.xlu0 %v112, 12
    %v1008 = vpop.permute.xlu0 %1007
    %1009 = vrot.lane.b32.xlu0 %v113, 12
    %v1010 = vpop.permute.xlu0 %1009
    %1011 = vrot.lane.b32.xlu0 %v114, 12
    %v1012 = vpop.permute.xlu0 %1011
    %1013 = vrot.lane.b32.xlu0 %v115, 12
    %v1014 = vpop.permute.xlu0 %1013
    %1015 = vrot.lane.b32.xlu0 %v116, 12
    %v1016 = vpop.permute.xlu0 %1015
    %1017 = vrot.lane.b32.xlu0 %v117, 12
    %v1018 = vpop.permute.xlu0 %1017
    %1019 = vrot.lane.b32.xlu0 %v118, 12
    %v1020 = vpop.permute.xlu0 %1019
    %1021 = vrot.lane.b32.xlu0 %v119, 12
    %v1022 = vpop.permute.xlu0 %1021
    %1023 = vrot.lane.b32.xlu0 %v120, 12
    %v1024 = vpop.permute.xlu0 %1023
    %1025 = vrot.lane.b32.xlu0 %v121, 12
    %v1026 = vpop.permute.xlu0 %1025
    %1027 = vrot.lane.b32.xlu0 %v122, 12
    %v1028 = vpop.permute.xlu0 %1027
    %1045 = vrot.lane.b32.xlu0 %v123, 16
    %v1046 = vpop.permute.xlu0 %1045
    %1047 = vrot.lane.b32.xlu0 %v124, 16
    %v1048 = vpop.permute.xlu0 %1047
    %1049 = vrot.lane.b32.xlu0 %v125, 16
    %v1050 = vpop.permute.xlu0 %1049
    %1051 = vrot.lane.b32.xlu0 %v126, 16
    %v1052 = vpop.permute.xlu0 %1051
    %1053 = vrot.lane.b32.xlu0 %v127, 16
    %v1054 = vpop.permute.xlu0 %1053
    %1055 = vrot.lane.b32.xlu0 %v128, 16
    %v1056 = vpop.permute.xlu0 %1055
    %1057 = vrot.lane.b32.xlu0 %v129, 16
    %v1058 = vpop.permute.xlu0 %1057
    %1059 = vrot.lane.b32.xlu0 %v130, 16
    %v1060 = vpop.permute.xlu0 %1059
    %1061 = vrot.lane.b32.xlu0 %v131, 16
    %v1062 = vpop.permute.xlu0 %1061
    %1063 = vrot.lane.b32.xlu0 %v132, 16
    %v1064 = vpop.permute.xlu0 %1063
    %1065 = vrot.lane.b32.xlu0 %v133, 16
    %v1066 = vpop.permute.xlu0 %1065
    %1067 = vrot.lane.b32.xlu0 %v134, 16
    %v1068 = vpop.permute.xlu0 %1067
    %1069 = vrot.lane.b32.xlu0 %v135, 16
    %v1070 = vpop.permute.xlu0 %1069
    %1071 = vrot.lane.b32.xlu0 %v136, 16
    %v1072 = vpop.permute.xlu0 %1071
    %1073 = vrot.lane.b32.xlu0 %v137, 16
    %v1074 = vpop.permute.xlu0 %1073
    %1075 = vrot.lane.b32.xlu0 %v138, 16
    %v1076 = vpop.permute.xlu0 %1075
    %1109 = vrot.lane.b32.xlu0 %v853, 20
    %v1110 = vpop.permute.xlu0 %1109
    %1111 = vrot.lane.b32.xlu0 %v854, 20
    %v1112 = vpop.permute.xlu0 %1111
    %1113 = vrot.lane.b32.xlu0 %v855, 20
    %v1114 = vpop.permute.xlu0 %1113
    %1115 = vrot.lane.b32.xlu0 %v856, 20
    %v1116 = vpop.permute.xlu0 %1115
    %1117 = vrot.lane.b32.xlu0 %v857, 20
    %v1118 = vpop.permute.xlu0 %1117
    %1119 = vrot.lane.b32.xlu0 %v858, 20
    %v1120 = vpop.permute.xlu0 %1119
    %1121 = vrot.lane.b32.xlu0 %v859, 20
    %v1122 = vpop.permute.xlu0 %1121
    %1123 = vrot.lane.b32.xlu0 %v860, 20
    %v1124 = vpop.permute.xlu0 %1123
    %1125 = vrot.lane.b32.xlu0 %v861, 20
    %v1126 = vpop.permute.xlu0 %1125
    %1127 = vrot.lane.b32.xlu0 %v862, 20
    %v1128 = vpop.permute.xlu0 %1127
    %1129 = vrot.lane.b32.xlu0 %v863, 20
    %v1130 = vpop.permute.xlu0 %1129
    %1131 = vrot.lane.b32.xlu0 %v864, 20
    %v1132 = vpop.permute.xlu0 %1131
    %1133 = vrot.lane.b32.xlu0 %v865, 20
    %v1134 = vpop.permute.xlu0 %1133
    %1135 = vrot.lane.b32.xlu0 %v866, 20
    %v1136 = vpop.permute.xlu0 %1135
    %1137 = vrot.lane.b32.xlu0 %v867, 20
    %v1138 = vpop.permute.xlu0 %1137
    %1139 = vrot.lane.b32.xlu0 %v868, 20
    %v1140 = vpop.permute.xlu0 %1139
    %1157 = vrot.lane.b32.xlu0 %v157, 24
    %v1158 = vpop.permute.xlu0 %1157
    %1159 = vrot.lane.b32.xlu0 %v158, 24
    %v1160 = vpop.permute.xlu0 %1159
    %1161 = vrot.lane.b32.xlu0 %v159, 24
    %v1162 = vpop.permute.xlu0 %1161
    %1163 = vrot.lane.b32.xlu0 %v160, 24
    %v1164 = vpop.permute.xlu0 %1163
    %1165 = vrot.lane.b32.xlu0 %v161, 24
    %v1166 = vpop.permute.xlu0 %1165
    %1167 = vrot.lane.b32.xlu0 %v162, 24
    %v1168 = vpop.permute.xlu0 %1167
    %1169 = vrot.lane.b32.xlu0 %v163, 24
    %v1170 = vpop.permute.xlu0 %1169
    %1171 = vrot.lane.b32.xlu0 %v164, 24
    %v1172 = vpop.permute.xlu0 %1171
    %1173 = vrot.lane.b32.xlu0 %v165, 24
    %v1174 = vpop.permute.xlu0 %1173
    %1175 = vrot.lane.b32.xlu0 %v166, 24
    %v1176 = vpop.permute.xlu0 %1175
    %1177 = vrot.lane.b32.xlu0 %v167, 24
    %v1178 = vpop.permute.xlu0 %1177
    %1179 = vrot.lane.b32.xlu0 %v168, 24
    %v1180 = vpop.permute.xlu0 %1179
    %1181 = vrot.lane.b32.xlu0 %v169, 24
    %v1182 = vpop.permute.xlu0 %1181
    %1183 = vrot.lane.b32.xlu0 %v170, 24
    %v1184 = vpop.permute.xlu0 %1183
    %1185 = vrot.lane.b32.xlu0 %v171, 24
    %v1186 = vpop.permute.xlu0 %1185
    %1187 = vrot.lane.b32.xlu0 %v172, 24
    %v1188 = vpop.permute.xlu0 %1187
    %1205 = vrot.lane.b32.xlu0 %v173, 28
    %v1206 = vpop.permute.xlu0 %1205
    %1207 = vrot.lane.b32.xlu0 %v174, 28
    %v1208 = vpop.permute.xlu0 %1207
    %1209 = vrot.lane.b32.xlu0 %v175, 28
    %v1210 = vpop.permute.xlu0 %1209
    %1211 = vrot.lane.b32.xlu0 %v176, 28
    %v1212 = vpop.permute.xlu0 %1211
    %1213 = vrot.lane.b32.xlu0 %v177, 28
    %v1214 = vpop.permute.xlu0 %1213
    %1215 = vrot.lane.b32.xlu0 %v178, 28
    %v1216 = vpop.permute.xlu0 %1215
    %1217 = vrot.lane.b32.xlu0 %v179, 28
    %v1218 = vpop.permute.xlu0 %1217
    %1219 = vrot.lane.b32.xlu0 %v180, 28
    %v1220 = vpop.permute.xlu0 %1219
    %1221 = vrot.lane.b32.xlu0 %v181, 28
    %v1222 = vpop.permute.xlu0 %1221
    %1223 = vrot.lane.b32.xlu0 %v182, 28
    %v1224 = vpop.permute.xlu0 %1223
    %1225 = vrot.lane.b32.xlu0 %v183, 28
    %v1226 = vpop.permute.xlu0 %1225
    %1227 = vrot.lane.b32.xlu0 %v184, 28
    %v1228 = vpop.permute.xlu0 %1227
    %1229 = vrot.lane.b32.xlu0 %v185, 28
    %v1230 = vpop.permute.xlu0 %1229
    %1231 = vrot.lane.b32.xlu0 %v186, 28
    %v1232 = vpop.permute.xlu0 %1231
    %1233 = vrot.lane.b32.xlu0 %v187, 28
    %v1234 = vpop.permute.xlu0 %1233
    %1235 = vrot.lane.b32.xlu0 %v188, 28
    %v1236 = vpop.permute.xlu0 %1235
    %1269 = vrot.lane.b32.xlu0 %v869, 32
    %v1270 = vpop.permute.xlu0 %1269
    %1271 = vrot.lane.b32.xlu0 %v870, 32
    %v1272 = vpop.permute.xlu0 %1271
    %1273 = vrot.lane.b32.xlu0 %v871, 32
    %v1274 = vpop.permute.xlu0 %1273
    %1275 = vrot.lane.b32.xlu0 %v872, 32
    %v1276 = vpop.permute.xlu0 %1275
    %1277 = vrot.lane.b32.xlu0 %v873, 32
    %v1278 = vpop.permute.xlu0 %1277
    %1279 = vrot.lane.b32.xlu0 %v874, 32
    %v1280 = vpop.permute.xlu0 %1279
    %1281 = vrot.lane.b32.xlu0 %v875, 32
    %v1282 = vpop.permute.xlu0 %1281
    %1283 = vrot.lane.b32.xlu0 %v876, 32
    %v1284 = vpop.permute.xlu0 %1283
    %1285 = vrot.lane.b32.xlu0 %v877, 32
    %v1286 = vpop.permute.xlu0 %1285
    %1287 = vrot.lane.b32.xlu0 %v878, 32
    %v1288 = vpop.permute.xlu0 %1287
    %1289 = vrot.lane.b32.xlu0 %v879, 32
    %v1290 = vpop.permute.xlu0 %1289
    %1291 = vrot.lane.b32.xlu0 %v880, 32
    %v1292 = vpop.permute.xlu0 %1291
    %1293 = vrot.lane.b32.xlu0 %v881, 32
    %v1294 = vpop.permute.xlu0 %1293
    %1295 = vrot.lane.b32.xlu0 %v882, 32
    %v1296 = vpop.permute.xlu0 %1295
    %1297 = vrot.lane.b32.xlu0 %v883, 32
    %v1298 = vpop.permute.xlu0 %1297
    %1299 = vrot.lane.b32.xlu0 %v884, 32
    %v1300 = vpop.permute.xlu0 %1299
    %v1317 = vsel %vm701, %v59, %v886
    %v1318 = vsel %vm701, %v60, %v888
    %v1319 = vsel %vm701, %v61, %v890
    %v1320 = vsel %vm701, %v62, %v892
    %v1321 = vsel %vm701, %v63, %v894
    %v1322 = vsel %vm701, %v64, %v896
    %v1323 = vsel %vm701, %v65, %v898
    %v1324 = vsel %vm701, %v66, %v900
    %v1325 = vsel %vm701, %v67, %v902
    %v1326 = vsel %vm701, %v68, %v904
    %v1327 = vsel %vm701, %v69, %v906
    %v1328 = vsel %vm701, %v70, %v908
    %v1329 = vsel %vm701, %v71, %v910
    %v1330 = vsel %vm701, %v72, %v912
    %v1331 = vsel %vm701, %v73, %v914
    %v1332 = vsel %vm701, %v74, %v916
    %v1333 = vsel %vm718, %v1317, %v950
    %v1334 = vsel %vm718, %v1318, %v952
    %v1335 = vsel %vm718, %v1319, %v954
    %v1336 = vsel %vm718, %v1320, %v956
    %v1337 = vsel %vm718, %v1321, %v958
    %v1338 = vsel %vm718, %v1322, %v960
    %v1339 = vsel %vm718, %v1323, %v962
    %v1340 = vsel %vm718, %v1324, %v964
    %v1341 = vsel %vm718, %v1325, %v966
    %v1342 = vsel %vm718, %v1326, %v968
    %v1343 = vsel %vm718, %v1327, %v970
    %v1344 = vsel %vm718, %v1328, %v972
    %v1345 = vsel %vm718, %v1329, %v974
    %v1346 = vsel %vm718, %v1330, %v976
    %v1347 = vsel %vm718, %v1331, %v978
    %v1348 = vsel %vm718, %v1332, %v980
    %v1349 = vsel %vm735, %v1333, %v998
    %v1350 = vsel %vm735, %v1334, %v1000
    %v1351 = vsel %vm735, %v1335, %v1002
    %v1352 = vsel %vm735, %v1336, %v1004
    %v1353 = vsel %vm735, %v1337, %v1006
    %v1354 = vsel %vm735, %v1338, %v1008
    %v1355 = vsel %vm735, %v1339, %v1010
    %v1356 = vsel %vm735, %v1340, %v1012
    %v1357 = vsel %vm735, %v1341, %v1014
    %v1358 = vsel %vm735, %v1342, %v1016
    %v1359 = vsel %vm735, %v1343, %v1018
    %v1360 = vsel %vm735, %v1344, %v1020
    %v1361 = vsel %vm735, %v1345, %v1022
    %v1362 = vsel %vm735, %v1346, %v1024
    %v1363 = vsel %vm735, %v1347, %v1026
    %v1364 = vsel %vm735, %v1348, %v1028
    %v1365 = vsel %vm752, %v1349, %v1046
    %v1366 = vsel %vm752, %v1350, %v1048
    %v1367 = vsel %vm752, %v1351, %v1050
    %v1368 = vsel %vm752, %v1352, %v1052
    %v1369 = vsel %vm752, %v1353, %v1054
    %v1370 = vsel %vm752, %v1354, %v1056
    %v1371 = vsel %vm752, %v1355, %v1058
    %v1372 = vsel %vm752, %v1356, %v1060
    %v1373 = vsel %vm752, %v1357, %v1062
    %v1374 = vsel %vm752, %v1358, %v1064
    %v1375 = vsel %vm752, %v1359, %v1066
    %v1376 = vsel %vm752, %v1360, %v1068
    %v1377 = vsel %vm752, %v1361, %v1070
    %v1378 = vsel %vm752, %v1362, %v1072
    %v1379 = vsel %vm752, %v1363, %v1074
    %v1380 = vsel %vm752, %v1364, %v1076
    %v1381 = vsel %vm769, %v1365, %v1110
    %v1382 = vsel %vm769, %v1366, %v1112
    %v1383 = vsel %vm769, %v1367, %v1114
    %v1384 = vsel %vm769, %v1368, %v1116
    %v1385 = vsel %vm769, %v1369, %v1118
    %v1386 = vsel %vm769, %v1370, %v1120
    %v1387 = vsel %vm769, %v1371, %v1122
    %v1388 = vsel %vm769, %v1372, %v1124
    %v1389 = vsel %vm769, %v1373, %v1126
    %v1390 = vsel %vm769, %v1374, %v1128
    %v1391 = vsel %vm769, %v1375, %v1130
    %v1392 = vsel %vm769, %v1376, %v1132
    %v1393 = vsel %vm769, %v1377, %v1134
    %v1394 = vsel %vm769, %v1378, %v1136
    %v1395 = vsel %vm769, %v1379, %v1138
    %v1396 = vsel %vm769, %v1380, %v1140
    %v1397 = vsel %vm786, %v1381, %v1158
    %v1398 = vsel %vm786, %v1382, %v1160
    %v1399 = vsel %vm786, %v1383, %v1162
    %v1400 = vsel %vm786, %v1384, %v1164
    %v1401 = vsel %vm786, %v1385, %v1166
    %v1402 = vsel %vm786, %v1386, %v1168
    %v1403 = vsel %vm786, %v1387, %v1170
    %v1404 = vsel %vm786, %v1388, %v1172
    %v1405 = vsel %vm786, %v1389, %v1174
    %v1406 = vsel %vm786, %v1390, %v1176
    %v1407 = vsel %vm786, %v1391, %v1178
    %v1408 = vsel %vm786, %v1392, %v1180
    %v1409 = vsel %vm786, %v1393, %v1182
    %v1410 = vsel %vm786, %v1394, %v1184
    %v1411 = vsel %vm786, %v1395, %v1186
    %v1412 = vsel %vm786, %v1396, %v1188
    %v1413 = vsel %vm803, %v1397, %v1206
    %v1414 = vsel %vm803, %v1398, %v1208
    %v1415 = vsel %vm803, %v1399, %v1210
    %v1416 = vsel %vm803, %v1400, %v1212
    %v1417 = vsel %vm803, %v1401, %v1214
    %v1418 = vsel %vm803, %v1402, %v1216
    %v1419 = vsel %vm803, %v1403, %v1218
    %v1420 = vsel %vm803, %v1404, %v1220
    %v1421 = vsel %vm803, %v1405, %v1222
    %v1422 = vsel %vm803, %v1406, %v1224
    %v1423 = vsel %vm803, %v1407, %v1226
    %v1424 = vsel %vm803, %v1408, %v1228
    %v1425 = vsel %vm803, %v1409, %v1230
    %v1426 = vsel %vm803, %v1410, %v1232
    %v1427 = vsel %vm803, %v1411, %v1234
    %v1428 = vsel %vm803, %v1412, %v1236
    %v1429 = vsel %vm820, %v1413, %v1270
    %v1430 = vsel %vm820, %v1414, %v1272
    %v1431 = vsel %vm820, %v1415, %v1274
    %v1432 = vsel %vm820, %v1416, %v1276
    %v1433 = vsel %vm820, %v1417, %v1278
    %v1434 = vsel %vm820, %v1418, %v1280
    %v1435 = vsel %vm820, %v1419, %v1282
    %v1436 = vsel %vm820, %v1420, %v1284
    %v1437 = vsel %vm820, %v1421, %v1286
    %v1438 = vsel %vm820, %v1422, %v1288
    %v1439 = vsel %vm820, %v1423, %v1290
    %v1440 = vsel %vm820, %v1424, %v1292
    %v1441 = vsel %vm820, %v1425, %v1294
    %v1442 = vsel %vm820, %v1426, %v1296
    %v1443 = vsel %vm820, %v1427, %v1298
    %v1444 = vsel %vm820, %v1428, %v1300
    %s1445 = scalar_lea.vmem %s2, 16
    %v1446 = vld [vmem:[%s1445] sm:$0xff]
    %v1447 = vld [vmem:[%s1445 + $0x10] sm:$0xff]
    %v1448 = vld [vmem:[%s1445 + $0x20] sm:$0xff]
    %v1449 = vld [vmem:[%s1445 + $0x30] sm:$0xff]
    %v1450 = vld [vmem:[%s1445 + $0x40] sm:$0xff]
    %v1451 = vld [vmem:[%s1445 + $0x50] sm:$0xff]
    %v1452 = vld [vmem:[%s1445 + $0x60] sm:$0xff]
    %v1453 = vld [vmem:[%s1445 + $0x70] sm:$0xff]
    %v1454 = vld [vmem:[%s1445 + $0x90] sm:$0xff]
    %v1455 = vld [vmem:[%s1445 + $0xa0] sm:$0xff]
    %v1456 = vld [vmem:[%s1445 + $0xb0] sm:$0xff]
    %v1457 = vld [vmem:[%s1445 + $0xc0] sm:$0xff]
    %v1458 = vld [vmem:[%s1445 + $0xd0] sm:$0xff]
    %v1459 = vld [vmem:[%s1445 + $0xe0] sm:$0xff]
    %v1460 = vld [vmem:[%s1445 + $0xf0] sm:$0xff]
    %v1461 = vld [vmem:[%s1445 + $0x100] sm:$0xff]
    %s1462 = scalar_lea.vmem %s3, 16
    %v1463 = vld [vmem:[%s1462] sm:$0xff]
    %v1464 = vld [vmem:[%s1462 + $0x10] sm:$0xff]
    %v1465 = vld [vmem:[%s1462 + $0x20] sm:$0xff]
    %v1466 = vld [vmem:[%s1462 + $0x30] sm:$0xff]
    %v1467 = vld [vmem:[%s1462 + $0x40] sm:$0xff]
    %v1468 = vld [vmem:[%s1462 + $0x50] sm:$0xff]
    %v1469 = vld [vmem:[%s1462 + $0x60] sm:$0xff]
    %v1470 = vld [vmem:[%s1462 + $0x70] sm:$0xff]
    %v1471 = vld [vmem:[%s1462 + $0x90] sm:$0xff]
    %v1472 = vld [vmem:[%s1462 + $0xa0] sm:$0xff]
    %v1473 = vld [vmem:[%s1462 + $0xb0] sm:$0xff]
    %v1474 = vld [vmem:[%s1462 + $0xc0] sm:$0xff]
    %v1475 = vld [vmem:[%s1462 + $0xd0] sm:$0xff]
    %v1476 = vld [vmem:[%s1462 + $0xe0] sm:$0xff]
    %v1477 = vld [vmem:[%s1462 + $0xf0] sm:$0xff]
    %v1478 = vld [vmem:[%s1462 + $0x100] sm:$0xff]
    %v1479 = vld [vmem:[%s1445 + $0x1] sm:$0xff]
    %v1480 = vld [vmem:[%s1445 + $0x11] sm:$0xff]
    %v1481 = vld [vmem:[%s1445 + $0x21] sm:$0xff]
    %v1482 = vld [vmem:[%s1445 + $0x31] sm:$0xff]
    %v1483 = vld [vmem:[%s1445 + $0x41] sm:$0xff]
    %v1484 = vld [vmem:[%s1445 + $0x51] sm:$0xff]
    %v1485 = vld [vmem:[%s1445 + $0x61] sm:$0xff]
    %v1486 = vld [vmem:[%s1445 + $0x71] sm:$0xff]
    %v1487 = vld [vmem:[%s1445 + $0x91] sm:$0xff]
    %v1488 = vld [vmem:[%s1445 + $0xa1] sm:$0xff]
    %v1489 = vld [vmem:[%s1445 + $0xb1] sm:$0xff]
    %v1490 = vld [vmem:[%s1445 + $0xc1] sm:$0xff]
    %v1491 = vld [vmem:[%s1445 + $0xd1] sm:$0xff]
    %v1492 = vld [vmem:[%s1445 + $0xe1] sm:$0xff]
    %v1493 = vld [vmem:[%s1445 + $0xf1] sm:$0xff]
    %v1494 = vld [vmem:[%s1445 + $0x101] sm:$0xff]
    %1495 = vrot.lane.b32.xlu0 %v107, 4
    %v1496 = vpop.permute.xlu0 %1495
    %1497 = vrot.lane.b32.xlu0 %v108, 4
    %v1498 = vpop.permute.xlu0 %1497
    %1499 = vrot.lane.b32.xlu0 %v109, 4
    %v1500 = vpop.permute.xlu0 %1499
    %1501 = vrot.lane.b32.xlu0 %v110, 4
    %v1502 = vpop.permute.xlu0 %1501
    %1503 = vrot.lane.b32.xlu0 %v111, 4
    %v1504 = vpop.permute.xlu0 %1503
    %1505 = vrot.lane.b32.xlu0 %v112, 4
    %v1506 = vpop.permute.xlu0 %1505
    %1507 = vrot.lane.b32.xlu0 %v113, 4
    %v1508 = vpop.permute.xlu0 %1507
    %1509 = vrot.lane.b32.xlu0 %v114, 4
    %v1510 = vpop.permute.xlu0 %1509
    %1511 = vrot.lane.b32.xlu0 %v115, 4
    %v1512 = vpop.permute.xlu0 %1511
    %1513 = vrot.lane.b32.xlu0 %v116, 4
    %v1514 = vpop.permute.xlu0 %1513
    %1515 = vrot.lane.b32.xlu0 %v117, 4
    %v1516 = vpop.permute.xlu0 %1515
    %1517 = vrot.lane.b32.xlu0 %v118, 4
    %v1518 = vpop.permute.xlu0 %1517
    %1519 = vrot.lane.b32.xlu0 %v119, 4
    %v1520 = vpop.permute.xlu0 %1519
    %1521 = vrot.lane.b32.xlu0 %v120, 4
    %v1522 = vpop.permute.xlu0 %1521
    %1523 = vrot.lane.b32.xlu0 %v121, 4
    %v1524 = vpop.permute.xlu0 %1523
    %1525 = vrot.lane.b32.xlu0 %v122, 4
    %v1526 = vpop.permute.xlu0 %1525
    %1543 = vrot.lane.b32.xlu0 %v123, 8
    %v1544 = vpop.permute.xlu0 %1543
    %1545 = vrot.lane.b32.xlu0 %v124, 8
    %v1546 = vpop.permute.xlu0 %1545
    %1547 = vrot.lane.b32.xlu0 %v125, 8
    %v1548 = vpop.permute.xlu0 %1547
    %1549 = vrot.lane.b32.xlu0 %v126, 8
    %v1550 = vpop.permute.xlu0 %1549
    %1551 = vrot.lane.b32.xlu0 %v127, 8
    %v1552 = vpop.permute.xlu0 %1551
    %1553 = vrot.lane.b32.xlu0 %v128, 8
    %v1554 = vpop.permute.xlu0 %1553
    %1555 = vrot.lane.b32.xlu0 %v129, 8
    %v1556 = vpop.permute.xlu0 %1555
    %1557 = vrot.lane.b32.xlu0 %v130, 8
    %v1558 = vpop.permute.xlu0 %1557
    %1559 = vrot.lane.b32.xlu0 %v131, 8
    %v1560 = vpop.permute.xlu0 %1559
    %1561 = vrot.lane.b32.xlu0 %v132, 8
    %v1562 = vpop.permute.xlu0 %1561
    %1563 = vrot.lane.b32.xlu0 %v133, 8
    %v1564 = vpop.permute.xlu0 %1563
    %1565 = vrot.lane.b32.xlu0 %v134, 8
    %v1566 = vpop.permute.xlu0 %1565
    %1567 = vrot.lane.b32.xlu0 %v135, 8
    %v1568 = vpop.permute.xlu0 %1567
    %1569 = vrot.lane.b32.xlu0 %v136, 8
    %v1570 = vpop.permute.xlu0 %1569
    %1571 = vrot.lane.b32.xlu0 %v137, 8
    %v1572 = vpop.permute.xlu0 %1571
    %1573 = vrot.lane.b32.xlu0 %v138, 8
    %v1574 = vpop.permute.xlu0 %1573
    %1591 = vrot.lane.b32.xlu0 %v140, 12
    %v1592 = vpop.permute.xlu0 %1591
    %1593 = vrot.lane.b32.xlu0 %v141, 12
    %v1594 = vpop.permute.xlu0 %1593
    %1595 = vrot.lane.b32.xlu0 %v142, 12
    %v1596 = vpop.permute.xlu0 %1595
    %1597 = vrot.lane.b32.xlu0 %v143, 12
    %v1598 = vpop.permute.xlu0 %1597
    %1599 = vrot.lane.b32.xlu0 %v144, 12
    %v1600 = vpop.permute.xlu0 %1599
    %1601 = vrot.lane.b32.xlu0 %v145, 12
    %v1602 = vpop.permute.xlu0 %1601
    %1603 = vrot.lane.b32.xlu0 %v146, 12
    %v1604 = vpop.permute.xlu0 %1603
    %1605 = vrot.lane.b32.xlu0 %v147, 12
    %v1606 = vpop.permute.xlu0 %1605
    %1607 = vrot.lane.b32.xlu0 %v148, 12
    %v1608 = vpop.permute.xlu0 %1607
    %1609 = vrot.lane.b32.xlu0 %v149, 12
    %v1610 = vpop.permute.xlu0 %1609
    %1611 = vrot.lane.b32.xlu0 %v150, 12
    %v1612 = vpop.permute.xlu0 %1611
    %1613 = vrot.lane.b32.xlu0 %v151, 12
    %v1614 = vpop.permute.xlu0 %1613
    %1615 = vrot.lane.b32.xlu0 %v152, 12
    %v1616 = vpop.permute.xlu0 %1615
    %1617 = vrot.lane.b32.xlu0 %v153, 12
    %v1618 = vpop.permute.xlu0 %1617
    %1619 = vrot.lane.b32.xlu0 %v154, 12
    %v1620 = vpop.permute.xlu0 %1619
    %1621 = vrot.lane.b32.xlu0 %v155, 12
    %v1622 = vpop.permute.xlu0 %1621
    %1639 = vrot.lane.b32.xlu0 %v157, 16
    %v1640 = vpop.permute.xlu0 %1639
    %1641 = vrot.lane.b32.xlu0 %v158, 16
    %v1642 = vpop.permute.xlu0 %1641
    %1643 = vrot.lane.b32.xlu0 %v159, 16
    %v1644 = vpop.permute.xlu0 %1643
    %1645 = vrot.lane.b32.xlu0 %v160, 16
    %v1646 = vpop.permute.xlu0 %1645
    %1647 = vrot.lane.b32.xlu0 %v161, 16
    %v1648 = vpop.permute.xlu0 %1647
    %1649 = vrot.lane.b32.xlu0 %v162, 16
    %v1650 = vpop.permute.xlu0 %1649
    %1651 = vrot.lane.b32.xlu0 %v163, 16
    %v1652 = vpop.permute.xlu0 %1651
    %1653 = vrot.lane.b32.xlu0 %v164, 16
    %v1654 = vpop.permute.xlu0 %1653
    %1655 = vrot.lane.b32.xlu0 %v165, 16
    %v1656 = vpop.permute.xlu0 %1655
    %1657 = vrot.lane.b32.xlu0 %v166, 16
    %v1658 = vpop.permute.xlu0 %1657
    %1659 = vrot.lane.b32.xlu0 %v167, 16
    %v1660 = vpop.permute.xlu0 %1659
    %1661 = vrot.lane.b32.xlu0 %v168, 16
    %v1662 = vpop.permute.xlu0 %1661
    %1663 = vrot.lane.b32.xlu0 %v169, 16
    %v1664 = vpop.permute.xlu0 %1663
    %1665 = vrot.lane.b32.xlu0 %v170, 16
    %v1666 = vpop.permute.xlu0 %1665
    %1667 = vrot.lane.b32.xlu0 %v171, 16
    %v1668 = vpop.permute.xlu0 %1667
    %1669 = vrot.lane.b32.xlu0 %v172, 16
    %v1670 = vpop.permute.xlu0 %1669
    %1687 = vrot.lane.b32.xlu0 %v173, 20
    %v1688 = vpop.permute.xlu0 %1687
    %1689 = vrot.lane.b32.xlu0 %v174, 20
    %v1690 = vpop.permute.xlu0 %1689
    %1691 = vrot.lane.b32.xlu0 %v175, 20
    %v1692 = vpop.permute.xlu0 %1691
    %1693 = vrot.lane.b32.xlu0 %v176, 20
    %v1694 = vpop.permute.xlu0 %1693
    %1695 = vrot.lane.b32.xlu0 %v177, 20
    %v1696 = vpop.permute.xlu0 %1695
    %1697 = vrot.lane.b32.xlu0 %v178, 20
    %v1698 = vpop.permute.xlu0 %1697
    %1699 = vrot.lane.b32.xlu0 %v179, 20
    %v1700 = vpop.permute.xlu0 %1699
    %1701 = vrot.lane.b32.xlu0 %v180, 20
    %v1702 = vpop.permute.xlu0 %1701
    %1703 = vrot.lane.b32.xlu0 %v181, 20
    %v1704 = vpop.permute.xlu0 %1703
    %1705 = vrot.lane.b32.xlu0 %v182, 20
    %v1706 = vpop.permute.xlu0 %1705
    %1707 = vrot.lane.b32.xlu0 %v183, 20
    %v1708 = vpop.permute.xlu0 %1707
    %1709 = vrot.lane.b32.xlu0 %v184, 20
    %v1710 = vpop.permute.xlu0 %1709
    %1711 = vrot.lane.b32.xlu0 %v185, 20
    %v1712 = vpop.permute.xlu0 %1711
    %1713 = vrot.lane.b32.xlu0 %v186, 20
    %v1714 = vpop.permute.xlu0 %1713
    %1715 = vrot.lane.b32.xlu0 %v187, 20
    %v1716 = vpop.permute.xlu0 %1715
    %1717 = vrot.lane.b32.xlu0 %v188, 20
    %v1718 = vpop.permute.xlu0 %1717
    %1751 = vrot.lane.b32.xlu0 %v1446, 24
    %v1752 = vpop.permute.xlu0 %1751
    %1753 = vrot.lane.b32.xlu0 %v1447, 24
    %v1754 = vpop.permute.xlu0 %1753
    %1755 = vrot.lane.b32.xlu0 %v1448, 24
    %v1756 = vpop.permute.xlu0 %1755
    %1757 = vrot.lane.b32.xlu0 %v1449, 24
    %v1758 = vpop.permute.xlu0 %1757
    %1759 = vrot.lane.b32.xlu0 %v1450, 24
    %v1760 = vpop.permute.xlu0 %1759
    %1761 = vrot.lane.b32.xlu0 %v1451, 24
    %v1762 = vpop.permute.xlu0 %1761
    %1763 = vrot.lane.b32.xlu0 %v1452, 24
    %v1764 = vpop.permute.xlu0 %1763
    %1765 = vrot.lane.b32.xlu0 %v1453, 24
    %v1766 = vpop.permute.xlu0 %1765
    %1767 = vrot.lane.b32.xlu0 %v1454, 24
    %v1768 = vpop.permute.xlu0 %1767
    %1769 = vrot.lane.b32.xlu0 %v1455, 24
    %v1770 = vpop.permute.xlu0 %1769
    %1771 = vrot.lane.b32.xlu0 %v1456, 24
    %v1772 = vpop.permute.xlu0 %1771
    %1773 = vrot.lane.b32.xlu0 %v1457, 24
    %v1774 = vpop.permute.xlu0 %1773
    %1775 = vrot.lane.b32.xlu0 %v1458, 24
    %v1776 = vpop.permute.xlu0 %1775
    %1777 = vrot.lane.b32.xlu0 %v1459, 24
    %v1778 = vpop.permute.xlu0 %1777
    %1779 = vrot.lane.b32.xlu0 %v1460, 24
    %v1780 = vpop.permute.xlu0 %1779
    %1781 = vrot.lane.b32.xlu0 %v1461, 24
    %v1782 = vpop.permute.xlu0 %1781
    %1815 = vrot.lane.b32.xlu0 %v1463, 28
    %v1816 = vpop.permute.xlu0 %1815
    %1817 = vrot.lane.b32.xlu0 %v1464, 28
    %v1818 = vpop.permute.xlu0 %1817
    %1819 = vrot.lane.b32.xlu0 %v1465, 28
    %v1820 = vpop.permute.xlu0 %1819
    %1821 = vrot.lane.b32.xlu0 %v1466, 28
    %v1822 = vpop.permute.xlu0 %1821
    %1823 = vrot.lane.b32.xlu0 %v1467, 28
    %v1824 = vpop.permute.xlu0 %1823
    %1825 = vrot.lane.b32.xlu0 %v1468, 28
    %v1826 = vpop.permute.xlu0 %1825
    %1827 = vrot.lane.b32.xlu0 %v1469, 28
    %v1828 = vpop.permute.xlu0 %1827
    %1829 = vrot.lane.b32.xlu0 %v1470, 28
    %v1830 = vpop.permute.xlu0 %1829
    %1831 = vrot.lane.b32.xlu0 %v1471, 28
    %v1832 = vpop.permute.xlu0 %1831
    %1833 = vrot.lane.b32.xlu0 %v1472, 28
    %v1834 = vpop.permute.xlu0 %1833
    %1835 = vrot.lane.b32.xlu0 %v1473, 28
    %v1836 = vpop.permute.xlu0 %1835
    %1837 = vrot.lane.b32.xlu0 %v1474, 28
    %v1838 = vpop.permute.xlu0 %1837
    %1839 = vrot.lane.b32.xlu0 %v1475, 28
    %v1840 = vpop.permute.xlu0 %1839
    %1841 = vrot.lane.b32.xlu0 %v1476, 28
    %v1842 = vpop.permute.xlu0 %1841
    %1843 = vrot.lane.b32.xlu0 %v1477, 28
    %v1844 = vpop.permute.xlu0 %1843
    %1845 = vrot.lane.b32.xlu0 %v1478, 28
    %v1846 = vpop.permute.xlu0 %1845
    %1879 = vrot.lane.b32.xlu0 %v1479, 32
    %v1880 = vpop.permute.xlu0 %1879
    %1881 = vrot.lane.b32.xlu0 %v1480, 32
    %v1882 = vpop.permute.xlu0 %1881
    %1883 = vrot.lane.b32.xlu0 %v1481, 32
    %v1884 = vpop.permute.xlu0 %1883
    %1885 = vrot.lane.b32.xlu0 %v1482, 32
    %v1886 = vpop.permute.xlu0 %1885
    %1887 = vrot.lane.b32.xlu0 %v1483, 32
    %v1888 = vpop.permute.xlu0 %1887
    %1889 = vrot.lane.b32.xlu0 %v1484, 32
    %v1890 = vpop.permute.xlu0 %1889
    %1891 = vrot.lane.b32.xlu0 %v1485, 32
    %v1892 = vpop.permute.xlu0 %1891
    %1893 = vrot.lane.b32.xlu0 %v1486, 32
    %v1894 = vpop.permute.xlu0 %1893
    %1895 = vrot.lane.b32.xlu0 %v1487, 32
    %v1896 = vpop.permute.xlu0 %1895
    %1897 = vrot.lane.b32.xlu0 %v1488, 32
    %v1898 = vpop.permute.xlu0 %1897
    %1899 = vrot.lane.b32.xlu0 %v1489, 32
    %v1900 = vpop.permute.xlu0 %1899
    %1901 = vrot.lane.b32.xlu0 %v1490, 32
    %v1902 = vpop.permute.xlu0 %1901
    %1903 = vrot.lane.b32.xlu0 %v1491, 32
    %v1904 = vpop.permute.xlu0 %1903
    %1905 = vrot.lane.b32.xlu0 %v1492, 32
    %v1906 = vpop.permute.xlu0 %1905
    %1907 = vrot.lane.b32.xlu0 %v1493, 32
    %v1908 = vpop.permute.xlu0 %1907
    %1909 = vrot.lane.b32.xlu0 %v1494, 32
    %v1910 = vpop.permute.xlu0 %1909
    %v1927 = vsel %vm701, %v91, %v1496
    %v1928 = vsel %vm701, %v92, %v1498
    %v1929 = vsel %vm701, %v93, %v1500
    %v1930 = vsel %vm701, %v94, %v1502
    %v1931 = vsel %vm701, %v95, %v1504
    %v1932 = vsel %vm701, %v96, %v1506
    %v1933 = vsel %vm701, %v97, %v1508
    %v1934 = vsel %vm701, %v98, %v1510
    %v1935 = vsel %vm701, %v99, %v1512
    %v1936 = vsel %vm701, %v100, %v1514
    %v1937 = vsel %vm701, %v101, %v1516
    %v1938 = vsel %vm701, %v102, %v1518
    %v1939 = vsel %vm701, %v103, %v1520
    %v1940 = vsel %vm701, %v104, %v1522
    %v1941 = vsel %vm701, %v105, %v1524
    %v1942 = vsel %vm701, %v106, %v1526
    %v1943 = vsel %vm718, %v1927, %v1544
    %v1944 = vsel %vm718, %v1928, %v1546
    %v1945 = vsel %vm718, %v1929, %v1548
    %v1946 = vsel %vm718, %v1930, %v1550
    %v1947 = vsel %vm718, %v1931, %v1552
    %v1948 = vsel %vm718, %v1932, %v1554
    %v1949 = vsel %vm718, %v1933, %v1556
    %v1950 = vsel %vm718, %v1934, %v1558
    %v1951 = vsel %vm718, %v1935, %v1560
    %v1952 = vsel %vm718, %v1936, %v1562
    %v1953 = vsel %vm718, %v1937, %v1564
    %v1954 = vsel %vm718, %v1938, %v1566
    %v1955 = vsel %vm718, %v1939, %v1568
    %v1956 = vsel %vm718, %v1940, %v1570
    %v1957 = vsel %vm718, %v1941, %v1572
    %v1958 = vsel %vm718, %v1942, %v1574
    %v1959 = vsel %vm735, %v1943, %v1592
    %v1960 = vsel %vm735, %v1944, %v1594
    %v1961 = vsel %vm735, %v1945, %v1596
    %v1962 = vsel %vm735, %v1946, %v1598
    %v1963 = vsel %vm735, %v1947, %v1600
    %v1964 = vsel %vm735, %v1948, %v1602
    %v1965 = vsel %vm735, %v1949, %v1604
    %v1966 = vsel %vm735, %v1950, %v1606
    %v1967 = vsel %vm735, %v1951, %v1608
    %v1968 = vsel %vm735, %v1952, %v1610
    %v1969 = vsel %vm735, %v1953, %v1612
    %v1970 = vsel %vm735, %v1954, %v1614
    %v1971 = vsel %vm735, %v1955, %v1616
    %v1972 = vsel %vm735, %v1956, %v1618
    %v1973 = vsel %vm735, %v1957, %v1620
    %v1974 = vsel %vm735, %v1958, %v1622
    %v1975 = vsel %vm752, %v1959, %v1640
    %v1976 = vsel %vm752, %v1960, %v1642
    %v1977 = vsel %vm752, %v1961, %v1644
    %v1978 = vsel %vm752, %v1962, %v1646
    %v1979 = vsel %vm752, %v1963, %v1648
    %v1980 = vsel %vm752, %v1964, %v1650
    %v1981 = vsel %vm752, %v1965, %v1652
    %v1982 = vsel %vm752, %v1966, %v1654
    %v1983 = vsel %vm752, %v1967, %v1656
    %v1984 = vsel %vm752, %v1968, %v1658
    %v1985 = vsel %vm752, %v1969, %v1660
    %v1986 = vsel %vm752, %v1970, %v1662
    %v1987 = vsel %vm752, %v1971, %v1664
    %v1988 = vsel %vm752, %v1972, %v1666
    %v1989 = vsel %vm752, %v1973, %v1668
    %v1990 = vsel %vm752, %v1974, %v1670
    %v1991 = vsel %vm769, %v1975, %v1688
    %v1992 = vsel %vm769, %v1976, %v1690
    %v1993 = vsel %vm769, %v1977, %v1692
    %v1994 = vsel %vm769, %v1978, %v1694
    %v1995 = vsel %vm769, %v1979, %v1696
    %v1996 = vsel %vm769, %v1980, %v1698
    %v1997 = vsel %vm769, %v1981, %v1700
    %v1998 = vsel %vm769, %v1982, %v1702
    %v1999 = vsel %vm769, %v1983, %v1704
    %v2000 = vsel %vm769, %v1984, %v1706
    %v2001 = vsel %vm769, %v1985, %v1708
    %v2002 = vsel %vm769, %v1986, %v1710
    %v2003 = vsel %vm769, %v1987, %v1712
    %v2004 = vsel %vm769, %v1988, %v1714
    %v2005 = vsel %vm769, %v1989, %v1716
    %v2006 = vsel %vm769, %v1990, %v1718
    %v2007 = vsel %vm786, %v1991, %v1752
    %v2008 = vsel %vm786, %v1992, %v1754
    %v2009 = vsel %vm786, %v1993, %v1756
    %v2010 = vsel %vm786, %v1994, %v1758
    %v2011 = vsel %vm786, %v1995, %v1760
    %v2012 = vsel %vm786, %v1996, %v1762
    %v2013 = vsel %vm786, %v1997, %v1764
    %v2014 = vsel %vm786, %v1998, %v1766
    %v2015 = vsel %vm786, %v1999, %v1768
    %v2016 = vsel %vm786, %v2000, %v1770
    %v2017 = vsel %vm786, %v2001, %v1772
    %v2018 = vsel %vm786, %v2002, %v1774
    %v2019 = vsel %vm786, %v2003, %v1776
    %v2020 = vsel %vm786, %v2004, %v1778
    %v2021 = vsel %vm786, %v2005, %v1780
    %v2022 = vsel %vm786, %v2006, %v1782
    %v2023 = vsel %vm803, %v2007, %v1816
    %v2024 = vsel %vm803, %v2008, %v1818
    %v2025 = vsel %vm803, %v2009, %v1820
    %v2026 = vsel %vm803, %v2010, %v1822
    %v2027 = vsel %vm803, %v2011, %v1824
    %v2028 = vsel %vm803, %v2012, %v1826
    %v2029 = vsel %vm803, %v2013, %v1828
    %v2030 = vsel %vm803, %v2014, %v1830
    %v2031 = vsel %vm803, %v2015, %v1832
    %v2032 = vsel %vm803, %v2016, %v1834
    %v2033 = vsel %vm803, %v2017, %v1836
    %v2034 = vsel %vm803, %v2018, %v1838
    %v2035 = vsel %vm803, %v2019, %v1840
    %v2036 = vsel %vm803, %v2020, %v1842
    %v2037 = vsel %vm803, %v2021, %v1844
    %v2038 = vsel %vm803, %v2022, %v1846
    %v2039 = vsel %vm820, %v2023, %v1880
    %v2040 = vsel %vm820, %v2024, %v1882
    %v2041 = vsel %vm820, %v2025, %v1884
    %v2042 = vsel %vm820, %v2026, %v1886
    %v2043 = vsel %vm820, %v2027, %v1888
    %v2044 = vsel %vm820, %v2028, %v1890
    %v2045 = vsel %vm820, %v2029, %v1892
    %v2046 = vsel %vm820, %v2030, %v1894
    %v2047 = vsel %vm820, %v2031, %v1896
    %v2048 = vsel %vm820, %v2032, %v1898
    %v2049 = vsel %vm820, %v2033, %v1900
    %v2050 = vsel %vm820, %v2034, %v1902
    %v2051 = vsel %vm820, %v2035, %v1904
    %v2052 = vsel %vm820, %v2036, %v1906
    %v2053 = vsel %vm820, %v2037, %v1908
    %v2054 = vsel %vm820, %v2038, %v1910
    %v2055 = vld [vmem:[%s1462 + $0x1] sm:$0xff]
    %v2056 = vld [vmem:[%s1462 + $0x11] sm:$0xff]
    %v2057 = vld [vmem:[%s1462 + $0x21] sm:$0xff]
    %v2058 = vld [vmem:[%s1462 + $0x31] sm:$0xff]
    %v2059 = vld [vmem:[%s1462 + $0x41] sm:$0xff]
    %v2060 = vld [vmem:[%s1462 + $0x51] sm:$0xff]
    %v2061 = vld [vmem:[%s1462 + $0x61] sm:$0xff]
    %v2062 = vld [vmem:[%s1462 + $0x71] sm:$0xff]
    %v2063 = vld [vmem:[%s1462 + $0x91] sm:$0xff]
    %v2064 = vld [vmem:[%s1462 + $0xa1] sm:$0xff]
    %v2065 = vld [vmem:[%s1462 + $0xb1] sm:$0xff]
    %v2066 = vld [vmem:[%s1462 + $0xc1] sm:$0xff]
    %v2067 = vld [vmem:[%s1462 + $0xd1] sm:$0xff]
    %v2068 = vld [vmem:[%s1462 + $0xe1] sm:$0xff]
    %v2069 = vld [vmem:[%s1462 + $0xf1] sm:$0xff]
    %v2070 = vld [vmem:[%s1462 + $0x101] sm:$0xff]
    %2071 = vrot.lane.b32.xlu0 %v123, 4
    %v2072 = vpop.permute.xlu0 %2071
    %2073 = vrot.lane.b32.xlu0 %v124, 4
    %v2074 = vpop.permute.xlu0 %2073
    %2075 = vrot.lane.b32.xlu0 %v125, 4
    %v2076 = vpop.permute.xlu0 %2075
    %2077 = vrot.lane.b32.xlu0 %v126, 4
    %v2078 = vpop.permute.xlu0 %2077
    %2079 = vrot.lane.b32.xlu0 %v127, 4
    %v2080 = vpop.permute.xlu0 %2079
    %2081 = vrot.lane.b32.xlu0 %v128, 4
    %v2082 = vpop.permute.xlu0 %2081
    %2083 = vrot.lane.b32.xlu0 %v129, 4
    %v2084 = vpop.permute.xlu0 %2083
    %2085 = vrot.lane.b32.xlu0 %v130, 4
    %v2086 = vpop.permute.xlu0 %2085
    %2087 = vrot.lane.b32.xlu0 %v131, 4
    %v2088 = vpop.permute.xlu0 %2087
    %2089 = vrot.lane.b32.xlu0 %v132, 4
    %v2090 = vpop.permute.xlu0 %2089
    %2091 = vrot.lane.b32.xlu0 %v133, 4
    %v2092 = vpop.permute.xlu0 %2091
    %2093 = vrot.lane.b32.xlu0 %v134, 4
    %v2094 = vpop.permute.xlu0 %2093
    %2095 = vrot.lane.b32.xlu0 %v135, 4
    %v2096 = vpop.permute.xlu0 %2095
    %2097 = vrot.lane.b32.xlu0 %v136, 4
    %v2098 = vpop.permute.xlu0 %2097
    %2099 = vrot.lane.b32.xlu0 %v137, 4
    %v2100 = vpop.permute.xlu0 %2099
    %2101 = vrot.lane.b32.xlu0 %v138, 4
    %v2102 = vpop.permute.xlu0 %2101
    %2119 = vrot.lane.b32.xlu0 %v853, 8
    %v2120 = vpop.permute.xlu0 %2119
    %2121 = vrot.lane.b32.xlu0 %v854, 8
    %v2122 = vpop.permute.xlu0 %2121
    %2123 = vrot.lane.b32.xlu0 %v855, 8
    %v2124 = vpop.permute.xlu0 %2123
    %2125 = vrot.lane.b32.xlu0 %v856, 8
    %v2126 = vpop.permute.xlu0 %2125
    %2127 = vrot.lane.b32.xlu0 %v857, 8
    %v2128 = vpop.permute.xlu0 %2127
    %2129 = vrot.lane.b32.xlu0 %v858, 8
    %v2130 = vpop.permute.xlu0 %2129
    %2131 = vrot.lane.b32.xlu0 %v859, 8
    %v2132 = vpop.permute.xlu0 %2131
    %2133 = vrot.lane.b32.xlu0 %v860, 8
    %v2134 = vpop.permute.xlu0 %2133
    %2135 = vrot.lane.b32.xlu0 %v861, 8
    %v2136 = vpop.permute.xlu0 %2135
    %2137 = vrot.lane.b32.xlu0 %v862, 8
    %v2138 = vpop.permute.xlu0 %2137
    %2139 = vrot.lane.b32.xlu0 %v863, 8
    %v2140 = vpop.permute.xlu0 %2139
    %2141 = vrot.lane.b32.xlu0 %v864, 8
    %v2142 = vpop.permute.xlu0 %2141
    %2143 = vrot.lane.b32.xlu0 %v865, 8
    %v2144 = vpop.permute.xlu0 %2143
    %2145 = vrot.lane.b32.xlu0 %v866, 8
    %v2146 = vpop.permute.xlu0 %2145
    %2147 = vrot.lane.b32.xlu0 %v867, 8
    %v2148 = vpop.permute.xlu0 %2147
    %2149 = vrot.lane.b32.xlu0 %v868, 8
    %v2150 = vpop.permute.xlu0 %2149
    %2167 = vrot.lane.b32.xlu0 %v157, 12
    %v2168 = vpop.permute.xlu0 %2167
    %2169 = vrot.lane.b32.xlu0 %v158, 12
    %v2170 = vpop.permute.xlu0 %2169
    %2171 = vrot.lane.b32.xlu0 %v159, 12
    %v2172 = vpop.permute.xlu0 %2171
    %2173 = vrot.lane.b32.xlu0 %v160, 12
    %v2174 = vpop.permute.xlu0 %2173
    %2175 = vrot.lane.b32.xlu0 %v161, 12
    %v2176 = vpop.permute.xlu0 %2175
    %2177 = vrot.lane.b32.xlu0 %v162, 12
    %v2178 = vpop.permute.xlu0 %2177
    %2179 = vrot.lane.b32.xlu0 %v163, 12
    %v2180 = vpop.permute.xlu0 %2179
    %2181 = vrot.lane.b32.xlu0 %v164, 12
    %v2182 = vpop.permute.xlu0 %2181
    %2183 = vrot.lane.b32.xlu0 %v165, 12
    %v2184 = vpop.permute.xlu0 %2183
    %2185 = vrot.lane.b32.xlu0 %v166, 12
    %v2186 = vpop.permute.xlu0 %2185
    %2187 = vrot.lane.b32.xlu0 %v167, 12
    %v2188 = vpop.permute.xlu0 %2187
    %2189 = vrot.lane.b32.xlu0 %v168, 12
    %v2190 = vpop.permute.xlu0 %2189
    %2191 = vrot.lane.b32.xlu0 %v169, 12
    %v2192 = vpop.permute.xlu0 %2191
    %2193 = vrot.lane.b32.xlu0 %v170, 12
    %v2194 = vpop.permute.xlu0 %2193
    %2195 = vrot.lane.b32.xlu0 %v171, 12
    %v2196 = vpop.permute.xlu0 %2195
    %2197 = vrot.lane.b32.xlu0 %v172, 12
    %v2198 = vpop.permute.xlu0 %2197
    %2215 = vrot.lane.b32.xlu0 %v173, 16
    %v2216 = vpop.permute.xlu0 %2215
    %2217 = vrot.lane.b32.xlu0 %v174, 16
    %v2218 = vpop.permute.xlu0 %2217
    %2219 = vrot.lane.b32.xlu0 %v175, 16
    %v2220 = vpop.permute.xlu0 %2219
    %2221 = vrot.lane.b32.xlu0 %v176, 16
    %v2222 = vpop.permute.xlu0 %2221
    %2223 = vrot.lane.b32.xlu0 %v177, 16
    %v2224 = vpop.permute.xlu0 %2223
    %2225 = vrot.lane.b32.xlu0 %v178, 16
    %v2226 = vpop.permute.xlu0 %2225
    %2227 = vrot.lane.b32.xlu0 %v179, 16
    %v2228 = vpop.permute.xlu0 %2227
    %2229 = vrot.lane.b32.xlu0 %v180, 16
    %v2230 = vpop.permute.xlu0 %2229
    %2231 = vrot.lane.b32.xlu0 %v181, 16
    %v2232 = vpop.permute.xlu0 %2231
    %2233 = vrot.lane.b32.xlu0 %v182, 16
    %v2234 = vpop.permute.xlu0 %2233
    %2235 = vrot.lane.b32.xlu0 %v183, 16
    %v2236 = vpop.permute.xlu0 %2235
    %2237 = vrot.lane.b32.xlu0 %v184, 16
    %v2238 = vpop.permute.xlu0 %2237
    %2239 = vrot.lane.b32.xlu0 %v185, 16
    %v2240 = vpop.permute.xlu0 %2239
    %2241 = vrot.lane.b32.xlu0 %v186, 16
    %v2242 = vpop.permute.xlu0 %2241
    %2243 = vrot.lane.b32.xlu0 %v187, 16
    %v2244 = vpop.permute.xlu0 %2243
    %2245 = vrot.lane.b32.xlu0 %v188, 16
    %v2246 = vpop.permute.xlu0 %2245
    %2263 = vrot.lane.b32.xlu0 %v869, 20
    %v2264 = vpop.permute.xlu0 %2263
    %2265 = vrot.lane.b32.xlu0 %v870, 20
    %v2266 = vpop.permute.xlu0 %2265
    %2267 = vrot.lane.b32.xlu0 %v871, 20
    %v2268 = vpop.permute.xlu0 %2267
    %2269 = vrot.lane.b32.xlu0 %v872, 20
    %v2270 = vpop.permute.xlu0 %2269
    %2271 = vrot.lane.b32.xlu0 %v873, 20
    %v2272 = vpop.permute.xlu0 %2271
    %2273 = vrot.lane.b32.xlu0 %v874, 20
    %v2274 = vpop.permute.xlu0 %2273
    %2275 = vrot.lane.b32.xlu0 %v875, 20
    %v2276 = vpop.permute.xlu0 %2275
    %2277 = vrot.lane.b32.xlu0 %v876, 20
    %v2278 = vpop.permute.xlu0 %2277
    %2279 = vrot.lane.b32.xlu0 %v877, 20
    %v2280 = vpop.permute.xlu0 %2279
    %2281 = vrot.lane.b32.xlu0 %v878, 20
    %v2282 = vpop.permute.xlu0 %2281
    %2283 = vrot.lane.b32.xlu0 %v879, 20
    %v2284 = vpop.permute.xlu0 %2283
    %2285 = vrot.lane.b32.xlu0 %v880, 20
    %v2286 = vpop.permute.xlu0 %2285
    %2287 = vrot.lane.b32.xlu0 %v881, 20
    %v2288 = vpop.permute.xlu0 %2287
    %2289 = vrot.lane.b32.xlu0 %v882, 20
    %v2290 = vpop.permute.xlu0 %2289
    %2291 = vrot.lane.b32.xlu0 %v883, 20
    %v2292 = vpop.permute.xlu0 %2291
    %2293 = vrot.lane.b32.xlu0 %v884, 20
    %v2294 = vpop.permute.xlu0 %2293
    %2311 = vrot.lane.b32.xlu0 %v1463, 24
    %v2312 = vpop.permute.xlu0 %2311
    %2313 = vrot.lane.b32.xlu0 %v1464, 24
    %v2314 = vpop.permute.xlu0 %2313
    %2315 = vrot.lane.b32.xlu0 %v1465, 24
    %v2316 = vpop.permute.xlu0 %2315
    %2317 = vrot.lane.b32.xlu0 %v1466, 24
    %v2318 = vpop.permute.xlu0 %2317
    %2319 = vrot.lane.b32.xlu0 %v1467, 24
    %v2320 = vpop.permute.xlu0 %2319
    %2321 = vrot.lane.b32.xlu0 %v1468, 24
    %v2322 = vpop.permute.xlu0 %2321
    %2323 = vrot.lane.b32.xlu0 %v1469, 24
    %v2324 = vpop.permute.xlu0 %2323
    %2325 = vrot.lane.b32.xlu0 %v1470, 24
    %v2326 = vpop.permute.xlu0 %2325
    %2327 = vrot.lane.b32.xlu0 %v1471, 24
    %v2328 = vpop.permute.xlu0 %2327
    %2329 = vrot.lane.b32.xlu0 %v1472, 24
    %v2330 = vpop.permute.xlu0 %2329
    %2331 = vrot.lane.b32.xlu0 %v1473, 24
    %v2332 = vpop.permute.xlu0 %2331
    %2333 = vrot.lane.b32.xlu0 %v1474, 24
    %v2334 = vpop.permute.xlu0 %2333
    %2335 = vrot.lane.b32.xlu0 %v1475, 24
    %v2336 = vpop.permute.xlu0 %2335
    %2337 = vrot.lane.b32.xlu0 %v1476, 24
    %v2338 = vpop.permute.xlu0 %2337
    %2339 = vrot.lane.b32.xlu0 %v1477, 24
    %v2340 = vpop.permute.xlu0 %2339
    %2341 = vrot.lane.b32.xlu0 %v1478, 24
    %v2342 = vpop.permute.xlu0 %2341
    %2359 = vrot.lane.b32.xlu0 %v1479, 28
    %v2360 = vpop.permute.xlu0 %2359
    %2361 = vrot.lane.b32.xlu0 %v1480, 28
    %v2362 = vpop.permute.xlu0 %2361
    %2363 = vrot.lane.b32.xlu0 %v1481, 28
    %v2364 = vpop.permute.xlu0 %2363
    %2365 = vrot.lane.b32.xlu0 %v1482, 28
    %v2366 = vpop.permute.xlu0 %2365
    %2367 = vrot.lane.b32.xlu0 %v1483, 28
    %v2368 = vpop.permute.xlu0 %2367
    %2369 = vrot.lane.b32.xlu0 %v1484, 28
    %v2370 = vpop.permute.xlu0 %2369
    %2371 = vrot.lane.b32.xlu0 %v1485, 28
    %v2372 = vpop.permute.xlu0 %2371
    %2373 = vrot.lane.b32.xlu0 %v1486, 28
    %v2374 = vpop.permute.xlu0 %2373
    %2375 = vrot.lane.b32.xlu0 %v1487, 28
    %v2376 = vpop.permute.xlu0 %2375
    %2377 = vrot.lane.b32.xlu0 %v1488, 28
    %v2378 = vpop.permute.xlu0 %2377
    %2379 = vrot.lane.b32.xlu0 %v1489, 28
    %v2380 = vpop.permute.xlu0 %2379
    %2381 = vrot.lane.b32.xlu0 %v1490, 28
    %v2382 = vpop.permute.xlu0 %2381
    %2383 = vrot.lane.b32.xlu0 %v1491, 28
    %v2384 = vpop.permute.xlu0 %2383
    %2385 = vrot.lane.b32.xlu0 %v1492, 28
    %v2386 = vpop.permute.xlu0 %2385
    %2387 = vrot.lane.b32.xlu0 %v1493, 28
    %v2388 = vpop.permute.xlu0 %2387
    %2389 = vrot.lane.b32.xlu0 %v1494, 28
    %v2390 = vpop.permute.xlu0 %2389
    %2423 = vrot.lane.b32.xlu0 %v2055, 32
    %v2424 = vpop.permute.xlu0 %2423
    %2425 = vrot.lane.b32.xlu0 %v2056, 32
    %v2426 = vpop.permute.xlu0 %2425
    %2427 = vrot.lane.b32.xlu0 %v2057, 32
    %v2428 = vpop.permute.xlu0 %2427
    %2429 = vrot.lane.b32.xlu0 %v2058, 32
    %v2430 = vpop.permute.xlu0 %2429
    %2431 = vrot.lane.b32.xlu0 %v2059, 32
    %v2432 = vpop.permute.xlu0 %2431
    %2433 = vrot.lane.b32.xlu0 %v2060, 32
    %v2434 = vpop.permute.xlu0 %2433
    %2435 = vrot.lane.b32.xlu0 %v2061, 32
    %v2436 = vpop.permute.xlu0 %2435
    %2437 = vrot.lane.b32.xlu0 %v2062, 32
    %v2438 = vpop.permute.xlu0 %2437
    %2439 = vrot.lane.b32.xlu0 %v2063, 32
    %v2440 = vpop.permute.xlu0 %2439
    %2441 = vrot.lane.b32.xlu0 %v2064, 32
    %v2442 = vpop.permute.xlu0 %2441
    %2443 = vrot.lane.b32.xlu0 %v2065, 32
    %v2444 = vpop.permute.xlu0 %2443
    %2445 = vrot.lane.b32.xlu0 %v2066, 32
    %v2446 = vpop.permute.xlu0 %2445
    %2447 = vrot.lane.b32.xlu0 %v2067, 32
    %v2448 = vpop.permute.xlu0 %2447
    %2449 = vrot.lane.b32.xlu0 %v2068, 32
    %v2450 = vpop.permute.xlu0 %2449
    %2451 = vrot.lane.b32.xlu0 %v2069, 32
    %v2452 = vpop.permute.xlu0 %2451
    %2453 = vrot.lane.b32.xlu0 %v2070, 32
    %v2454 = vpop.permute.xlu0 %2453
    %v2471 = vsel %vm701, %v107, %v2072
    %v2472 = vsel %vm701, %v108, %v2074
    %v2473 = vsel %vm701, %v109, %v2076
    %v2474 = vsel %vm701, %v110, %v2078
    %v2475 = vsel %vm701, %v111, %v2080
    %v2476 = vsel %vm701, %v112, %v2082
    %v2477 = vsel %vm701, %v113, %v2084
    %v2478 = vsel %vm701, %v114, %v2086
    %v2479 = vsel %vm701, %v115, %v2088
    %v2480 = vsel %vm701, %v116, %v2090
    %v2481 = vsel %vm701, %v117, %v2092
    %v2482 = vsel %vm701, %v118, %v2094
    %v2483 = vsel %vm701, %v119, %v2096
    %v2484 = vsel %vm701, %v120, %v2098
    %v2485 = vsel %vm701, %v121, %v2100
    %v2486 = vsel %vm701, %v122, %v2102
    %v2487 = vsel %vm718, %v2471, %v2120
    %v2488 = vsel %vm718, %v2472, %v2122
    %v2489 = vsel %vm718, %v2473, %v2124
    %v2490 = vsel %vm718, %v2474, %v2126
    %v2491 = vsel %vm718, %v2475, %v2128
    %v2492 = vsel %vm718, %v2476, %v2130
    %v2493 = vsel %vm718, %v2477, %v2132
    %v2494 = vsel %vm718, %v2478, %v2134
    %v2495 = vsel %vm718, %v2479, %v2136
    %v2496 = vsel %vm718, %v2480, %v2138
    %v2497 = vsel %vm718, %v2481, %v2140
    %v2498 = vsel %vm718, %v2482, %v2142
    %v2499 = vsel %vm718, %v2483, %v2144
    %v2500 = vsel %vm718, %v2484, %v2146
    %v2501 = vsel %vm718, %v2485, %v2148
    %v2502 = vsel %vm718, %v2486, %v2150
    %v2503 = vsel %vm735, %v2487, %v2168
    %v2504 = vsel %vm735, %v2488, %v2170
    %v2505 = vsel %vm735, %v2489, %v2172
    %v2506 = vsel %vm735, %v2490, %v2174
    %v2507 = vsel %vm735, %v2491, %v2176
    %v2508 = vsel %vm735, %v2492, %v2178
    %v2509 = vsel %vm735, %v2493, %v2180
    %v2510 = vsel %vm735, %v2494, %v2182
    %v2511 = vsel %vm735, %v2495, %v2184
    %v2512 = vsel %vm735, %v2496, %v2186
    %v2513 = vsel %vm735, %v2497, %v2188
    %v2514 = vsel %vm735, %v2498, %v2190
    %v2515 = vsel %vm735, %v2499, %v2192
    %v2516 = vsel %vm735, %v2500, %v2194
    %v2517 = vsel %vm735, %v2501, %v2196
    %v2518 = vsel %vm735, %v2502, %v2198
    %v2519 = vsel %vm752, %v2503, %v2216
    %v2520 = vsel %vm752, %v2504, %v2218
    %v2521 = vsel %vm752, %v2505, %v2220
    %v2522 = vsel %vm752, %v2506, %v2222
    %v2523 = vsel %vm752, %v2507, %v2224
    %v2524 = vsel %vm752, %v2508, %v2226
    %v2525 = vsel %vm752, %v2509, %v2228
    %v2526 = vsel %vm752, %v2510, %v2230
    %v2527 = vsel %vm752, %v2511, %v2232
    %v2528 = vsel %vm752, %v2512, %v2234
    %v2529 = vsel %vm752, %v2513, %v2236
    %v2530 = vsel %vm752, %v2514, %v2238
    %v2531 = vsel %vm752, %v2515, %v2240
    %v2532 = vsel %vm752, %v2516, %v2242
    %v2533 = vsel %vm752, %v2517, %v2244
    %v2534 = vsel %vm752, %v2518, %v2246
    %v2535 = vsel %vm769, %v2519, %v2264
    %v2536 = vsel %vm769, %v2520, %v2266
    %v2537 = vsel %vm769, %v2521, %v2268
    %v2538 = vsel %vm769, %v2522, %v2270
    %v2539 = vsel %vm769, %v2523, %v2272
    %v2540 = vsel %vm769, %v2524, %v2274
    %v2541 = vsel %vm769, %v2525, %v2276
    %v2542 = vsel %vm769, %v2526, %v2278
    %v2543 = vsel %vm769, %v2527, %v2280
    %v2544 = vsel %vm769, %v2528, %v2282
    %v2545 = vsel %vm769, %v2529, %v2284
    %v2546 = vsel %vm769, %v2530, %v2286
    %v2547 = vsel %vm769, %v2531, %v2288
    %v2548 = vsel %vm769, %v2532, %v2290
    %v2549 = vsel %vm769, %v2533, %v2292
    %v2550 = vsel %vm769, %v2534, %v2294
    %v2551 = vsel %vm786, %v2535, %v2312
    %v2552 = vsel %vm786, %v2536, %v2314
    %v2553 = vsel %vm786, %v2537, %v2316
    %v2554 = vsel %vm786, %v2538, %v2318
    %v2555 = vsel %vm786, %v2539, %v2320
    %v2556 = vsel %vm786, %v2540, %v2322
    %v2557 = vsel %vm786, %v2541, %v2324
    %v2558 = vsel %vm786, %v2542, %v2326
    %v2559 = vsel %vm786, %v2543, %v2328
    %v2560 = vsel %vm786, %v2544, %v2330
    %v2561 = vsel %vm786, %v2545, %v2332
    %v2562 = vsel %vm786, %v2546, %v2334
    %v2563 = vsel %vm786, %v2547, %v2336
    %v2564 = vsel %vm786, %v2548, %v2338
    %v2565 = vsel %vm786, %v2549, %v2340
    %v2566 = vsel %vm786, %v2550, %v2342
    %v2567 = vsel %vm803, %v2551, %v2360
    %v2568 = vsel %vm803, %v2552, %v2362
    %v2569 = vsel %vm803, %v2553, %v2364
    %v2570 = vsel %vm803, %v2554, %v2366
    %v2571 = vsel %vm803, %v2555, %v2368
    %v2572 = vsel %vm803, %v2556, %v2370
    %v2573 = vsel %vm803, %v2557, %v2372
    %v2574 = vsel %vm803, %v2558, %v2374
    %v2575 = vsel %vm803, %v2559, %v2376
    %v2576 = vsel %vm803, %v2560, %v2378
    %v2577 = vsel %vm803, %v2561, %v2380
    %v2578 = vsel %vm803, %v2562, %v2382
    %v2579 = vsel %vm803, %v2563, %v2384
    %v2580 = vsel %vm803, %v2564, %v2386
    %v2581 = vsel %vm803, %v2565, %v2388
    %v2582 = vsel %vm803, %v2566, %v2390
    %v2583 = vsel %vm820, %v2567, %v2424
    %v2584 = vsel %vm820, %v2568, %v2426
    %v2585 = vsel %vm820, %v2569, %v2428
    %v2586 = vsel %vm820, %v2570, %v2430
    %v2587 = vsel %vm820, %v2571, %v2432
    %v2588 = vsel %vm820, %v2572, %v2434
    %v2589 = vsel %vm820, %v2573, %v2436
    %v2590 = vsel %vm820, %v2574, %v2438
    %v2591 = vsel %vm820, %v2575, %v2440
    %v2592 = vsel %vm820, %v2576, %v2442
    %v2593 = vsel %vm820, %v2577, %v2444
    %v2594 = vsel %vm820, %v2578, %v2446
    %v2595 = vsel %vm820, %v2579, %v2448
    %v2596 = vsel %vm820, %v2580, %v2450
    %v2597 = vsel %vm820, %v2581, %v2452
    %v2598 = vsel %vm820, %v2582, %v2454
    %v2599 = vpack.c.bf16 %v822, %v821
    %v2600 = vpack.c.bf16 %v824, %v823
    %v2601 = vpack.c.bf16 %v826, %v825
    %v2602 = vpack.c.bf16 %v828, %v827
    %v2603 = vpack.c.bf16 %v830, %v829
    %v2604 = vpack.c.bf16 %v832, %v831
    %v2605 = vpack.c.bf16 %v834, %v833
    %v2606 = vpack.c.bf16 %v836, %v835
    %v2607 = vpack.c.bf16 %v1430, %v1429
    %v2608 = vpack.c.bf16 %v1432, %v1431
    %v2609 = vpack.c.bf16 %v1434, %v1433
    %v2610 = vpack.c.bf16 %v1436, %v1435
    %v2611 = vpack.c.bf16 %v1438, %v1437
    %v2612 = vpack.c.bf16 %v1440, %v1439
    %v2613 = vpack.c.bf16 %v1442, %v1441
    %v2614 = vpack.c.bf16 %v1444, %v1443
    %v2615 = vpack.c.bf16 %v2040, %v2039
    %v2616 = vpack.c.bf16 %v2042, %v2041
    %v2617 = vpack.c.bf16 %v2044, %v2043
    %v2618 = vpack.c.bf16 %v2046, %v2045
    %v2619 = vpack.c.bf16 %v2048, %v2047
    %v2620 = vpack.c.bf16 %v2050, %v2049
    %v2621 = vpack.c.bf16 %v2052, %v2051
    %v2622 = vpack.c.bf16 %v2054, %v2053
    %v2623 = vpack.c.bf16 %v2584, %v2583
    %v2624 = vpack.c.bf16 %v2586, %v2585
    %v2625 = vpack.c.bf16 %v2588, %v2587
    %v2626 = vpack.c.bf16 %v2590, %v2589
    %v2627 = vpack.c.bf16 %v2592, %v2591
    %v2628 = vpack.c.bf16 %v2594, %v2593
    %v2629 = vpack.c.bf16 %v2596, %v2595
    %v2630 = vpack.c.bf16 %v2598, %v2597
    %v2631 = vld [vmem:[%s4] sm:$0xf]
    %v2632 = vld [vmem:[%s4 + $0x4] sm:$0xf]
    %v2633 = vld [vmem:[%s4 + $0x8] sm:$0xf]
    %v2634 = vld [vmem:[%s4 + $0xc] sm:$0xf]
    %v2635 = vld [vmem:[%s4 + $0x10] sm:$0x3]
    %v2636 = vld [vmem:[%s5] sm:$0x1]
    %v2638 = vlaneseq
    %v2639 = vshrl.u32 %v2638, 7
    %v2640 = vsub.s32 0, %v2639
    %v2641 = vrot.slane %v2636, %v2640
    %v2648 = vunpack.c.l.b16 %v2631
    %v2649 = vunpack.c.l.b16 %v2632
    %v2650 = vunpack.c.l.b16 %v2633
    %v2651 = vunpack.c.l.b16 %v2634
    %v2652 = vunpack.c.l.b16 %v2635
    %v2653 = vpack.c.b16 %v2649, %v2648
    %v2654 = vpack.c.b16 %v2651, %v2650
    %v2655 = vpack.c.b16 %v2652, %v2652
    %vm2658 = vcmask 293888
    %v2660 = vsel %vm2658, %v2599, 0
    %v2663 = vsel %vm2658, %v2600, 0
    %v2666 = vsel %vm2658, %v2601, 0
    %v2669 = vsel %vm2658, %v2602, 0
    %v2672 = vsel %vm2658, %v2603, 0
    %v2675 = vsel %vm2658, %v2604, 0
    %v2678 = vsel %vm2658, %v2605, 0
    %v2681 = vsel %vm2658, %v2606, 0
    %v2684 = vsel %vm2658, %v2607, 0
    %v2687 = vsel %vm2658, %v2608, 0
    %v2690 = vsel %vm2658, %v2609, 0
    %v2693 = vsel %vm2658, %v2610, 0
    %v2696 = vsel %vm2658, %v2611, 0
    %v2699 = vsel %vm2658, %v2612, 0
    %v2702 = vsel %vm2658, %v2613, 0
    %v2705 = vsel %vm2658, %v2614, 0
    %v2708 = vsel %vm2658, %v2615, 0
    %v2711 = vsel %vm2658, %v2616, 0
    %v2714 = vsel %vm2658, %v2617, 0
    %v2717 = vsel %vm2658, %v2618, 0
    %v2720 = vsel %vm2658, %v2619, 0
    %v2723 = vsel %vm2658, %v2620, 0
    %v2726 = vsel %vm2658, %v2621, 0
    %v2729 = vsel %vm2658, %v2622, 0
    %v2732 = vsel %vm2658, %v2623, 0
    %v2735 = vsel %vm2658, %v2624, 0
    %v2738 = vsel %vm2658, %v2625, 0
    %v2741 = vsel %vm2658, %v2626, 0
    %v2744 = vsel %vm2658, %v2627, 0
    %v2747 = vsel %vm2658, %v2628, 0
    %v2750 = vsel %vm2658, %v2629, 0
    %v2753 = vsel %vm2658, %v2630, 0
    %vm2755 = vcmask 1041408
    %v2757 = vsel %vm2755, %v2655, 0
    %2759 = vmatprep.subr.bf16.mxu0 0
    %2760 = vmatpush1.bf16.msra.mxu0 0
    %2761 = vmatprep.subr.bf16.mxu0 0
    %2762 = vmatpush1.bf16.msra.mxu0 0
    %2763 = vmatprep.subr.bf16.mxu0 0
    %2764 = vmatpush1.bf16.msra.mxu0 0
    %2765 = vmatprep.subr.bf16.mxu0 0
    %2766 = vmatpush1.bf16.msra.mxu0 0
    %2767 = vmatprep.subr.bf16.mxu0 0
    %2768 = vmatpush1.bf16.msra.mxu0 0
    %2769 = vmatprep.subr.bf16.mxu0 0
    %2770 = vmatpush1.bf16.msra.mxu0 %v2757
    %2771 = vmatprep.subr.bf16.mxu0 0
    %2772 = vmatpush1.bf16.msra.mxu0 %v2654
    %2773 = vmatprep.subr.bf16.mxu0 0
    %2774 = vmatpush1.bf16.msra.mxu0 %v2653
    %2775 = vmatprep.subr.bf16.mxu0 0
    %2776 = vmatpush2.bf16.msra.mxu0 0
    %2777 = vmatprep.subr.bf16.mxu0 0
    %2778 = vmatpush2.bf16.msra.mxu0 0
    %2779 = vmatprep.subr.bf16.mxu0 0
    %2780 = vmatpush2.bf16.msra.mxu0 0
    %2781 = vmatprep.subr.bf16.mxu0 0
    %2782 = vmatpush2.bf16.msra.mxu0 0
    %2783 = vmatprep.subr.bf16.mxu0 0
    %2784 = vmatpush2.bf16.msra.mxu0 0
    %2785 = vmatprep.subr.bf16.mxu0 0
    %2786 = vmatpush2.bf16.msra.mxu0 0
    %2787 = vmatprep.subr.bf16.mxu0 0
    %2788 = vmatpush2.bf16.msra.mxu0 0
    %2789 = vmatprep.subr.bf16.mxu0 0
    %2790 = vmatpush2.bf16.msra.mxu0 0
    %2791 = vmatprep.mubr.bf16.mxu0 0
    %2792 = vmatmul.mubr.bf16.gmra.mxu0 %v2660
    %v2793 = vpop.f32.mrf.mxu0
    %v2794 = vadd.f32 %v2641, %v2793
    %v2795 = vpop.f32.mrf.mxu0
    %v2796 = vpop.f32.mrf.mxu0
    %v2797 = vadd.f32 %v2641, %v2796
    %v2798 = vpop.f32.mrf.mxu0
    %2799 = vmatprep.mubr.bf16.mxu0 0
    %2800 = vmatmul.mubr.bf16.gmra.mxu0 %v2663
    %v2801 = vpop.f32.mrf.mxu0
    %v2802 = vadd.f32 %v2641, %v2801
    %v2803 = vpop.f32.mrf.mxu0
    %v2804 = vpop.f32.mrf.mxu0
    %v2805 = vadd.f32 %v2641, %v2804
    %v2806 = vpop.f32.mrf.mxu0
    %2807 = vmatprep.mubr.bf16.mxu0 0
    %2808 = vmatmul.mubr.bf16.gmra.mxu0 %v2666
    %v2809 = vpop.f32.mrf.mxu0
    %v2810 = vadd.f32 %v2641, %v2809
    %v2811 = vpop.f32.mrf.mxu0
    %v2812 = vpop.f32.mrf.mxu0
    %v2813 = vadd.f32 %v2641, %v2812
    %v2814 = vpop.f32.mrf.mxu0
    %2815 = vmatprep.mubr.bf16.mxu0 0
    %2816 = vmatmul.mubr.bf16.gmra.mxu0 %v2669
    %v2817 = vpop.f32.mrf.mxu0
    %v2818 = vadd.f32 %v2641, %v2817
    %v2819 = vpop.f32.mrf.mxu0
    %v2820 = vpop.f32.mrf.mxu0
    %v2821 = vadd.f32 %v2641, %v2820
    %v2822 = vpop.f32.mrf.mxu0
    %2823 = vmatprep.mubr.bf16.mxu0 0
    %2824 = vmatmul.mubr.bf16.gmra.mxu0 %v2672
    %v2825 = vpop.f32.mrf.mxu0
    %v2826 = vadd.f32 %v2641, %v2825
    %v2827 = vpop.f32.mrf.mxu0
    %v2828 = vpop.f32.mrf.mxu0
    %v2829 = vadd.f32 %v2641, %v2828
    %v2830 = vpop.f32.mrf.mxu0
    %2831 = vmatprep.mubr.bf16.mxu0 0
    %2832 = vmatmul.mubr.bf16.gmra.mxu0 %v2675
    %v2833 = vpop.f32.mrf.mxu0
    %v2834 = vadd.f32 %v2641, %v2833
    %v2835 = vpop.f32.mrf.mxu0
    %v2836 = vpop.f32.mrf.mxu0
    %v2837 = vadd.f32 %v2641, %v2836
    %v2838 = vpop.f32.mrf.mxu0
    %2839 = vmatprep.mubr.bf16.mxu0 0
    %2840 = vmatmul.mubr.bf16.gmra.mxu0 %v2678
    %v2841 = vpop.f32.mrf.mxu0
    %v2842 = vadd.f32 %v2641, %v2841
    %v2843 = vpop.f32.mrf.mxu0
    %v2844 = vpop.f32.mrf.mxu0
    %v2845 = vadd.f32 %v2641, %v2844
    %v2846 = vpop.f32.mrf.mxu0
    %2847 = vmatprep.mubr.bf16.mxu0 0
    %2848 = vmatmul.mubr.bf16.gmra.mxu0 %v2681
    %v2849 = vpop.f32.mrf.mxu0
    %v2850 = vadd.f32 %v2641, %v2849
    %v2851 = vpop.f32.mrf.mxu0
    %v2852 = vpop.f32.mrf.mxu0
    %v2853 = vadd.f32 %v2641, %v2852
    %v2854 = vpop.f32.mrf.mxu0
    %2855 = vmatprep.mubr.bf16.mxu0 0
    %2856 = vmatmul.mubr.bf16.gmra.mxu0 %v2684
    %v2857 = vpop.f32.mrf.mxu0
    %v2858 = vadd.f32 %v2641, %v2857
    %v2859 = vpop.f32.mrf.mxu0
    %v2860 = vpop.f32.mrf.mxu0
    %v2861 = vadd.f32 %v2641, %v2860
    %v2862 = vpop.f32.mrf.mxu0
    %2863 = vmatprep.mubr.bf16.mxu0 0
    %2864 = vmatmul.mubr.bf16.gmra.mxu0 %v2687
    %v2865 = vpop.f32.mrf.mxu0
    %v2866 = vadd.f32 %v2641, %v2865
    %v2867 = vpop.f32.mrf.mxu0
    %v2868 = vpop.f32.mrf.mxu0
    %v2869 = vadd.f32 %v2641, %v2868
    %v2870 = vpop.f32.mrf.mxu0
    %2871 = vmatprep.mubr.bf16.mxu0 0
    %2872 = vmatmul.mubr.bf16.gmra.mxu0 %v2690
    %v2873 = vpop.f32.mrf.mxu0
    %v2874 = vadd.f32 %v2641, %v2873
    %v2875 = vpop.f32.mrf.mxu0
    %v2876 = vpop.f32.mrf.mxu0
    %v2877 = vadd.f32 %v2641, %v2876
    %v2878 = vpop.f32.mrf.mxu0
    %2879 = vmatprep.mubr.bf16.mxu0 0
    %2880 = vmatmul.mubr.bf16.gmra.mxu0 %v2693
    %v2881 = vpop.f32.mrf.mxu0
    %v2882 = vadd.f32 %v2641, %v2881
    %v2883 = vpop.f32.mrf.mxu0
    %v2884 = vpop.f32.mrf.mxu0
    %v2885 = vadd.f32 %v2641, %v2884
    %v2886 = vpop.f32.mrf.mxu0
    %2887 = vmatprep.mubr.bf16.mxu0 0
    %2888 = vmatmul.mubr.bf16.gmra.mxu0 %v2696
    %v2889 = vpop.f32.mrf.mxu0
    %v2890 = vadd.f32 %v2641, %v2889
    %v2891 = vpop.f32.mrf.mxu0
    %v2892 = vpop.f32.mrf.mxu0
    %v2893 = vadd.f32 %v2641, %v2892
    %v2894 = vpop.f32.mrf.mxu0
    %2895 = vmatprep.mubr.bf16.mxu0 0
    %2896 = vmatmul.mubr.bf16.gmra.mxu0 %v2699
    %v2897 = vpop.f32.mrf.mxu0
    %v2898 = vadd.f32 %v2641, %v2897
    %v2899 = vpop.f32.mrf.mxu0
    %v2900 = vpop.f32.mrf.mxu0
    %v2901 = vadd.f32 %v2641, %v2900
    %v2902 = vpop.f32.mrf.mxu0
    %2903 = vmatprep.mubr.bf16.mxu0 0
    %2904 = vmatmul.mubr.bf16.gmra.mxu0 %v2702
    %v2905 = vpop.f32.mrf.mxu0
    %v2906 = vadd.f32 %v2641, %v2905
    %v2907 = vpop.f32.mrf.mxu0
    %v2908 = vpop.f32.mrf.mxu0
    %v2909 = vadd.f32 %v2641, %v2908
    %v2910 = vpop.f32.mrf.mxu0
    %2911 = vmatprep.mubr.bf16.mxu0 0
    %2912 = vmatmul.mubr.bf16.gmra.mxu0 %v2705
    %v2913 = vpop.f32.mrf.mxu0
    %v2914 = vadd.f32 %v2641, %v2913
    %v2915 = vpop.f32.mrf.mxu0
    %v2916 = vpop.f32.mrf.mxu0
    %v2917 = vadd.f32 %v2641, %v2916
    %v2918 = vpop.f32.mrf.mxu0
    %2919 = vmatprep.mubr.bf16.mxu0 0
    %2920 = vmatmul.mubr.bf16.gmra.mxu0 %v2708
    %v2921 = vpop.f32.mrf.mxu0
    %v2922 = vadd.f32 %v2641, %v2921
    %v2923 = vpop.f32.mrf.mxu0
    %v2924 = vpop.f32.mrf.mxu0
    %v2925 = vadd.f32 %v2641, %v2924
    %v2926 = vpop.f32.mrf.mxu0
    %2927 = vmatprep.mubr.bf16.mxu0 0
    %2928 = vmatmul.mubr.bf16.gmra.mxu0 %v2711
    %v2929 = vpop.f32.mrf.mxu0
    %v2930 = vadd.f32 %v2641, %v2929
    %v2931 = vpop.f32.mrf.mxu0
    %v2932 = vpop.f32.mrf.mxu0
    %v2933 = vadd.f32 %v2641, %v2932
    %v2934 = vpop.f32.mrf.mxu0
    %2935 = vmatprep.mubr.bf16.mxu0 0
    %2936 = vmatmul.mubr.bf16.gmra.mxu0 %v2714
    %v2937 = vpop.f32.mrf.mxu0
    %v2938 = vadd.f32 %v2641, %v2937
    %v2939 = vpop.f32.mrf.mxu0
    %v2940 = vpop.f32.mrf.mxu0
    %v2941 = vadd.f32 %v2641, %v2940
    %v2942 = vpop.f32.mrf.mxu0
    %2943 = vmatprep.mubr.bf16.mxu0 0
    %2944 = vmatmul.mubr.bf16.gmra.mxu0 %v2717
    %v2945 = vpop.f32.mrf.mxu0
    %v2946 = vadd.f32 %v2641, %v2945
    %v2947 = vpop.f32.mrf.mxu0
    %v2948 = vpop.f32.mrf.mxu0
    %v2949 = vadd.f32 %v2641, %v2948
    %v2950 = vpop.f32.mrf.mxu0
    %2951 = vmatprep.mubr.bf16.mxu0 0
    %2952 = vmatmul.mubr.bf16.gmra.mxu0 %v2720
    %v2953 = vpop.f32.mrf.mxu0
    %v2954 = vadd.f32 %v2641, %v2953
    %v2955 = vpop.f32.mrf.mxu0
    %v2956 = vpop.f32.mrf.mxu0
    %v2957 = vadd.f32 %v2641, %v2956
    %v2958 = vpop.f32.mrf.mxu0
    %2959 = vmatprep.mubr.bf16.mxu0 0
    %2960 = vmatmul.mubr.bf16.gmra.mxu0 %v2723
    %v2961 = vpop.f32.mrf.mxu0
    %v2962 = vadd.f32 %v2641, %v2961
    %v2963 = vpop.f32.mrf.mxu0
    %v2964 = vpop.f32.mrf.mxu0
    %v2965 = vadd.f32 %v2641, %v2964
    %v2966 = vpop.f32.mrf.mxu0
    %2967 = vmatprep.mubr.bf16.mxu0 0
    %2968 = vmatmul.mubr.bf16.gmra.mxu0 %v2726
    %v2969 = vpop.f32.mrf.mxu0
    %v2970 = vadd.f32 %v2641, %v2969
    %v2971 = vpop.f32.mrf.mxu0
    %v2972 = vpop.f32.mrf.mxu0
    %v2973 = vadd.f32 %v2641, %v2972
    %v2974 = vpop.f32.mrf.mxu0
    %2975 = vmatprep.mubr.bf16.mxu0 0
    %2976 = vmatmul.mubr.bf16.gmra.mxu0 %v2729
    %v2977 = vpop.f32.mrf.mxu0
    %v2978 = vadd.f32 %v2641, %v2977
    %v2979 = vpop.f32.mrf.mxu0
    %v2980 = vpop.f32.mrf.mxu0
    %v2981 = vadd.f32 %v2641, %v2980
    %v2982 = vpop.f32.mrf.mxu0
    %2983 = vmatprep.mubr.bf16.mxu0 0
    %2984 = vmatmul.mubr.bf16.gmra.mxu0 %v2732
    %v2985 = vpop.f32.mrf.mxu0
    %v2986 = vadd.f32 %v2641, %v2985
    %v2987 = vpop.f32.mrf.mxu0
    %v2988 = vpop.f32.mrf.mxu0
    %v2989 = vadd.f32 %v2641, %v2988
    %v2990 = vpop.f32.mrf.mxu0
    %2991 = vmatprep.mubr.bf16.mxu0 0
    %2992 = vmatmul.mubr.bf16.gmra.mxu0 %v2735
    %v2993 = vpop.f32.mrf.mxu0
    %v2994 = vadd.f32 %v2641, %v2993
    %v2995 = vpop.f32.mrf.mxu0
    %v2996 = vpop.f32.mrf.mxu0
    %v2997 = vadd.f32 %v2641, %v2996
    %v2998 = vpop.f32.mrf.mxu0
    %2999 = vmatprep.mubr.bf16.mxu0 0
    %3000 = vmatmul.mubr.bf16.gmra.mxu0 %v2738
    %v3001 = vpop.f32.mrf.mxu0
    %v3002 = vadd.f32 %v2641, %v3001
    %v3003 = vpop.f32.mrf.mxu0
    %v3004 = vpop.f32.mrf.mxu0
    %v3005 = vadd.f32 %v2641, %v3004
    %v3006 = vpop.f32.mrf.mxu0
    %3007 = vmatprep.mubr.bf16.mxu0 0
    %3008 = vmatmul.mubr.bf16.gmra.mxu0 %v2741
    %v3009 = vpop.f32.mrf.mxu0
    %v3010 = vadd.f32 %v2641, %v3009
    %v3011 = vpop.f32.mrf.mxu0
    %v3012 = vpop.f32.mrf.mxu0
    %v3013 = vadd.f32 %v2641, %v3012
    %v3014 = vpop.f32.mrf.mxu0
    %3015 = vmatprep.mubr.bf16.mxu0 0
    %3016 = vmatmul.mubr.bf16.gmra.mxu0 %v2744
    %v3017 = vpop.f32.mrf.mxu0
    %v3018 = vadd.f32 %v2641, %v3017
    %v3019 = vpop.f32.mrf.mxu0
    %v3020 = vpop.f32.mrf.mxu0
    %v3021 = vadd.f32 %v2641, %v3020
    %v3022 = vpop.f32.mrf.mxu0
    %3023 = vmatprep.mubr.bf16.mxu0 0
    %3024 = vmatmul.mubr.bf16.gmra.mxu0 %v2747
    %v3025 = vpop.f32.mrf.mxu0
    %v3026 = vadd.f32 %v2641, %v3025
    %v3027 = vpop.f32.mrf.mxu0
    %v3028 = vpop.f32.mrf.mxu0
    %v3029 = vadd.f32 %v2641, %v3028
    %v3030 = vpop.f32.mrf.mxu0
    %3031 = vmatprep.mubr.bf16.mxu0 0
    %3032 = vmatmul.mubr.bf16.gmra.mxu0 %v2750
    %v3033 = vpop.f32.mrf.mxu0
    %v3034 = vadd.f32 %v2641, %v3033
    %v3035 = vpop.f32.mrf.mxu0
    %v3036 = vpop.f32.mrf.mxu0
    %v3037 = vadd.f32 %v2641, %v3036
    %v3038 = vpop.f32.mrf.mxu0
    %3039 = vmatprep.mubr.bf16.mxu0 0
    %3040 = vmatmul.mubr.bf16.gmra.mxu0 %v2753
    %v3041 = vpop.f32.mrf.mxu0
    %v3042 = vadd.f32 %v2641, %v3041
    %v3043 = vpop.f32.mrf.mxu0
    %v3044 = vpop.f32.mrf.mxu0
    %v3045 = vadd.f32 %v2641, %v3044
    %v3046 = vpop.f32.mrf.mxu0
    %3047 = vdwg.mxu0
    %v3048 = vld [vmem:[%s6] sm:$0x1]
    %v3049 = vld [vmem:[%s7] sm:$0x1]
    %v3050 = vsel %vm718, %v2794, 0.0
    %v3051 = vsel %vm718, %v2797, 0.0
    %v3052 = vadd.f32 %v3050, %v3051
    %v3053 = vsel %vm718, %v2802, 0.0
    %v3054 = vadd.f32 %v3052, %v3053
    %v3055 = vsel %vm718, %v2805, 0.0
    %v3056 = vadd.f32 %v3054, %v3055
    %v3057 = vsel %vm718, %v2810, 0.0
    %v3058 = vadd.f32 %v3056, %v3057
    %v3059 = vsel %vm718, %v2813, 0.0
    %v3060 = vadd.f32 %v3058, %v3059
    %v3061 = vsel %vm718, %v2818, 0.0
    %v3062 = vadd.f32 %v3060, %v3061
    %v3063 = vsel %vm718, %v2821, 0.0
    %v3064 = vadd.f32 %v3062, %v3063
    %v3065 = vsel %vm718, %v2826, 0.0
    %v3066 = vadd.f32 %v3064, %v3065
    %v3067 = vsel %vm718, %v2829, 0.0
    %v3068 = vadd.f32 %v3066, %v3067
    %v3069 = vsel %vm718, %v2834, 0.0
    %v3070 = vadd.f32 %v3068, %v3069
    %v3071 = vsel %vm718, %v2837, 0.0
    %v3072 = vadd.f32 %v3070, %v3071
    %v3073 = vsel %vm718, %v2842, 0.0
    %v3074 = vadd.f32 %v3072, %v3073
    %v3075 = vsel %vm718, %v2845, 0.0
    %v3076 = vadd.f32 %v3074, %v3075
    %v3077 = vsel %vm718, %v2850, 0.0
    %v3078 = vadd.f32 %v3076, %v3077
    %v3079 = vsel %vm718, %v2853, 0.0
    %v3080 = vadd.f32 %v3078, %v3079
    %v3081 = vsel %vm718, %v2858, 0.0
    %v3082 = vadd.f32 %v3080, %v3081
    %v3083 = vsel %vm718, %v2861, 0.0
    %v3084 = vadd.f32 %v3082, %v3083
    %v3085 = vsel %vm718, %v2866, 0.0
    %v3086 = vadd.f32 %v3084, %v3085
    %v3087 = vsel %vm718, %v2869, 0.0
    %v3088 = vadd.f32 %v3086, %v3087
    %v3089 = vsel %vm718, %v2874, 0.0
    %v3090 = vadd.f32 %v3088, %v3089
    %v3091 = vsel %vm718, %v2877, 0.0
    %v3092 = vadd.f32 %v3090, %v3091
    %v3093 = vsel %vm718, %v2882, 0.0
    %v3094 = vadd.f32 %v3092, %v3093
    %v3095 = vsel %vm718, %v2885, 0.0
    %v3096 = vadd.f32 %v3094, %v3095
    %v3097 = vsel %vm718, %v2890, 0.0
    %v3098 = vadd.f32 %v3096, %v3097
    %v3099 = vsel %vm718, %v2893, 0.0
    %v3100 = vadd.f32 %v3098, %v3099
    %v3101 = vsel %vm718, %v2898, 0.0
    %v3102 = vadd.f32 %v3100, %v3101
    %v3103 = vsel %vm718, %v2901, 0.0
    %v3104 = vadd.f32 %v3102, %v3103
    %v3105 = vsel %vm718, %v2906, 0.0
    %v3106 = vadd.f32 %v3104, %v3105
    %v3107 = vsel %vm718, %v2909, 0.0
    %v3108 = vadd.f32 %v3106, %v3107
    %v3109 = vsel %vm718, %v2914, 0.0
    %v3110 = vadd.f32 %v3108, %v3109
    %v3111 = vsel %vm718, %v2917, 0.0
    %v3112 = vadd.f32 %v3110, %v3111
    %v3113 = vsel %vm718, %v2922, 0.0
    %v3114 = vadd.f32 %v3112, %v3113
    %v3115 = vsel %vm718, %v2925, 0.0
    %v3116 = vadd.f32 %v3114, %v3115
    %v3117 = vsel %vm718, %v2930, 0.0
    %v3118 = vadd.f32 %v3116, %v3117
    %v3119 = vsel %vm718, %v2933, 0.0
    %v3120 = vadd.f32 %v3118, %v3119
    %v3121 = vsel %vm718, %v2938, 0.0
    %v3122 = vadd.f32 %v3120, %v3121
    %v3123 = vsel %vm718, %v2941, 0.0
    %v3124 = vadd.f32 %v3122, %v3123
    %v3125 = vsel %vm718, %v2946, 0.0
    %v3126 = vadd.f32 %v3124, %v3125
    %v3127 = vsel %vm718, %v2949, 0.0
    %v3128 = vadd.f32 %v3126, %v3127
    %v3129 = vsel %vm718, %v2954, 0.0
    %v3130 = vadd.f32 %v3128, %v3129
    %v3131 = vsel %vm718, %v2957, 0.0
    %v3132 = vadd.f32 %v3130, %v3131
    %v3133 = vsel %vm718, %v2962, 0.0
    %v3134 = vadd.f32 %v3132, %v3133
    %v3135 = vsel %vm718, %v2965, 0.0
    %v3136 = vadd.f32 %v3134, %v3135
    %v3137 = vsel %vm718, %v2970, 0.0
    %v3138 = vadd.f32 %v3136, %v3137
    %v3139 = vsel %vm718, %v2973, 0.0
    %v3140 = vadd.f32 %v3138, %v3139
    %v3141 = vsel %vm718, %v2978, 0.0
    %v3142 = vadd.f32 %v3140, %v3141
    %v3143 = vsel %vm718, %v2981, 0.0
    %v3144 = vadd.f32 %v3142, %v3143
    %v3145 = vsel %vm718, %v2986, 0.0
    %v3146 = vadd.f32 %v3144, %v3145
    %v3147 = vsel %vm718, %v2989, 0.0
    %v3148 = vadd.f32 %v3146, %v3147
    %v3149 = vsel %vm718, %v2994, 0.0
    %v3150 = vadd.f32 %v3148, %v3149
    %v3151 = vsel %vm718, %v2997, 0.0
    %v3152 = vadd.f32 %v3150, %v3151
    %v3153 = vsel %vm718, %v3002, 0.0
    %v3154 = vadd.f32 %v3152, %v3153
    %v3155 = vsel %vm718, %v3005, 0.0
    %v3156 = vadd.f32 %v3154, %v3155
    %v3157 = vsel %vm718, %v3010, 0.0
    %v3158 = vadd.f32 %v3156, %v3157
    %v3159 = vsel %vm718, %v3013, 0.0
    %v3160 = vadd.f32 %v3158, %v3159
    %v3161 = vsel %vm718, %v3018, 0.0
    %v3162 = vadd.f32 %v3160, %v3161
    %v3163 = vsel %vm718, %v3021, 0.0
    %v3164 = vadd.f32 %v3162, %v3163
    %v3165 = vsel %vm718, %v3026, 0.0
    %v3166 = vadd.f32 %v3164, %v3165
    %v3167 = vsel %vm718, %v3029, 0.0
    %v3168 = vadd.f32 %v3166, %v3167
    %v3169 = vsel %vm718, %v3034, 0.0
    %v3170 = vadd.f32 %v3168, %v3169
    %v3171 = vsel %vm718, %v3037, 0.0
    %v3172 = vadd.f32 %v3170, %v3171
    %v3173 = vsel %vm718, %v3042, 0.0
    %v3174 = vadd.f32 %v3172, %v3173
    %v3175 = vsel %vm718, %v3045, 0.0
    %v3176 = vadd.f32 %v3174, %v3175
    %v3177 = vrot.slane %v3176, 4
    %v3178 = vadd.f32 %v3176, %v3177
    %v3179 = vrot.slane %v3178, 2
    %v3180 = vadd.f32 %v3178, %v3179
    %v3181 = vrot.slane %v3180, 1
    %v3182 = vadd.f32 %v3180, %v3181
    %v3183 = vmul.f32 %v2794, %v2794
    %v3184 = vmul.f32 %v2797, %v2797
    %v3185 = vmul.f32 %v2802, %v2802
    %v3186 = vmul.f32 %v2805, %v2805
    %v3187 = vmul.f32 %v2810, %v2810
    %v3188 = vmul.f32 %v2813, %v2813
    %v3189 = vmul.f32 %v2818, %v2818
    %v3190 = vmul.f32 %v2821, %v2821
    %v3191 = vmul.f32 %v2826, %v2826
    %v3192 = vmul.f32 %v2829, %v2829
    %v3193 = vmul.f32 %v2834, %v2834
    %v3194 = vmul.f32 %v2837, %v2837
    %v3195 = vmul.f32 %v2842, %v2842
    %v3196 = vmul.f32 %v2845, %v2845
    %v3197 = vmul.f32 %v2850, %v2850
    %v3198 = vmul.f32 %v2853, %v2853
    %v3199 = vmul.f32 %v2858, %v2858
    %v3200 = vmul.f32 %v2861, %v2861
    %v3201 = vmul.f32 %v2866, %v2866
    %v3202 = vmul.f32 %v2869, %v2869
    %v3203 = vmul.f32 %v2874, %v2874
    %v3204 = vmul.f32 %v2877, %v2877
    %v3205 = vmul.f32 %v2882, %v2882
    %v3206 = vmul.f32 %v2885, %v2885
    %v3207 = vmul.f32 %v2890, %v2890
    %v3208 = vmul.f32 %v2893, %v2893
    %v3209 = vmul.f32 %v2898, %v2898
    %v3210 = vmul.f32 %v2901, %v2901
    %v3211 = vmul.f32 %v2906, %v2906
    %v3212 = vmul.f32 %v2909, %v2909
    %v3213 = vmul.f32 %v2914, %v2914
    %v3214 = vmul.f32 %v2917, %v2917
    %v3215 = vmul.f32 %v2922, %v2922
    %v3216 = vmul.f32 %v2925, %v2925
    %v3217 = vmul.f32 %v2930, %v2930
    %v3218 = vmul.f32 %v2933, %v2933
    %v3219 = vmul.f32 %v2938, %v2938
    %v3220 = vmul.f32 %v2941, %v2941
    %v3221 = vmul.f32 %v2946, %v2946
    %v3222 = vmul.f32 %v2949, %v2949
    %v3223 = vmul.f32 %v2954, %v2954
    %v3224 = vmul.f32 %v2957, %v2957
    %v3225 = vmul.f32 %v2962, %v2962
    %v3226 = vmul.f32 %v2965, %v2965
    %v3227 = vmul.f32 %v2970, %v2970
    %v3228 = vmul.f32 %v2973, %v2973
    %v3229 = vmul.f32 %v2978, %v2978
    %v3230 = vmul.f32 %v2981, %v2981
    %v3231 = vmul.f32 %v2986, %v2986
    %v3232 = vmul.f32 %v2989, %v2989
    %v3233 = vmul.f32 %v2994, %v2994
    %v3234 = vmul.f32 %v2997, %v2997
    %v3235 = vmul.f32 %v3002, %v3002
    %v3236 = vmul.f32 %v3005, %v3005
    %v3237 = vmul.f32 %v3010, %v3010
    %v3238 = vmul.f32 %v3013, %v3013
    %v3239 = vmul.f32 %v3018, %v3018
    %v3240 = vmul.f32 %v3021, %v3021
    %v3241 = vmul.f32 %v3026, %v3026
    %v3242 = vmul.f32 %v3029, %v3029
    %v3243 = vmul.f32 %v3034, %v3034
    %v3244 = vmul.f32 %v3037, %v3037
    %v3245 = vmul.f32 %v3042, %v3042
    %v3246 = vmul.f32 %v3045, %v3045
    %v3247 = vsel %vm718, %v3183, 0.0
    %v3248 = vsel %vm718, %v3184, 0.0
    %v3249 = vadd.f32 %v3247, %v3248
    %v3250 = vsel %vm718, %v3185, 0.0
    %v3251 = vadd.f32 %v3249, %v3250
    %v3252 = vsel %vm718, %v3186, 0.0
    %v3253 = vadd.f32 %v3251, %v3252
    %v3254 = vsel %vm718, %v3187, 0.0
    %v3255 = vadd.f32 %v3253, %v3254
    %v3256 = vsel %vm718, %v3188, 0.0
    %v3257 = vadd.f32 %v3255, %v3256
    %v3258 = vsel %vm718, %v3189, 0.0
    %v3259 = vadd.f32 %v3257, %v3258
    %v3260 = vsel %vm718, %v3190, 0.0
    %v3261 = vadd.f32 %v3259, %v3260
    %v3262 = vsel %vm718, %v3191, 0.0
    %v3263 = vadd.f32 %v3261, %v3262
    %v3264 = vsel %vm718, %v3192, 0.0
    %v3265 = vadd.f32 %v3263, %v3264
    %v3266 = vsel %vm718, %v3193, 0.0
    %v3267 = vadd.f32 %v3265, %v3266
    %v3268 = vsel %vm718, %v3194, 0.0
    %v3269 = vadd.f32 %v3267, %v3268
    %v3270 = vsel %vm718, %v3195, 0.0
    %v3271 = vadd.f32 %v3269, %v3270
    %v3272 = vsel %vm718, %v3196, 0.0
    %v3273 = vadd.f32 %v3271, %v3272
    %v3274 = vsel %vm718, %v3197, 0.0
    %v3275 = vadd.f32 %v3273, %v3274
    %v3276 = vsel %vm718, %v3198, 0.0
    %v3277 = vadd.f32 %v3275, %v3276
    %v3278 = vsel %vm718, %v3199, 0.0
    %v3279 = vadd.f32 %v3277, %v3278
    %v3280 = vsel %vm718, %v3200, 0.0
    %v3281 = vadd.f32 %v3279, %v3280
    %v3282 = vsel %vm718, %v3201, 0.0
    %v3283 = vadd.f32 %v3281, %v3282
    %v3284 = vsel %vm718, %v3202, 0.0
    %v3285 = vadd.f32 %v3283, %v3284
    %v3286 = vsel %vm718, %v3203, 0.0
    %v3287 = vadd.f32 %v3285, %v3286
    %v3288 = vsel %vm718, %v3204, 0.0
    %v3289 = vadd.f32 %v3287, %v3288
    %v3290 = vsel %vm718, %v3205, 0.0
    %v3291 = vadd.f32 %v3289, %v3290
    %v3292 = vsel %vm718, %v3206, 0.0
    %v3293 = vadd.f32 %v3291, %v3292
    %v3294 = vsel %vm718, %v3207, 0.0
    %v3295 = vadd.f32 %v3293, %v3294
    %v3296 = vsel %vm718, %v3208, 0.0
    %v3297 = vadd.f32 %v3295, %v3296
    %v3298 = vsel %vm718, %v3209, 0.0
    %v3299 = vadd.f32 %v3297, %v3298
    %v3300 = vsel %vm718, %v3210, 0.0
    %v3301 = vadd.f32 %v3299, %v3300
    %v3302 = vsel %vm718, %v3211, 0.0
    %v3303 = vadd.f32 %v3301, %v3302
    %v3304 = vsel %vm718, %v3212, 0.0
    %v3305 = vadd.f32 %v3303, %v3304
    %v3306 = vsel %vm718, %v3213, 0.0
    %v3307 = vadd.f32 %v3305, %v3306
    %v3308 = vsel %vm718, %v3214, 0.0
    %v3309 = vadd.f32 %v3307, %v3308
    %v3310 = vsel %vm718, %v3215, 0.0
    %v3311 = vadd.f32 %v3309, %v3310
    %v3312 = vsel %vm718, %v3216, 0.0
    %v3313 = vadd.f32 %v3311, %v3312
    %v3314 = vsel %vm718, %v3217, 0.0
    %v3315 = vadd.f32 %v3313, %v3314
    %v3316 = vsel %vm718, %v3218, 0.0
    %v3317 = vadd.f32 %v3315, %v3316
    %v3318 = vsel %vm718, %v3219, 0.0
    %v3319 = vadd.f32 %v3317, %v3318
    %v3320 = vsel %vm718, %v3220, 0.0
    %v3321 = vadd.f32 %v3319, %v3320
    %v3322 = vsel %vm718, %v3221, 0.0
    %v3323 = vadd.f32 %v3321, %v3322
    %v3324 = vsel %vm718, %v3222, 0.0
    %v3325 = vadd.f32 %v3323, %v3324
    %v3326 = vsel %vm718, %v3223, 0.0
    %v3327 = vadd.f32 %v3325, %v3326
    %v3328 = vsel %vm718, %v3224, 0.0
    %v3329 = vadd.f32 %v3327, %v3328
    %v3330 = vsel %vm718, %v3225, 0.0
    %v3331 = vadd.f32 %v3329, %v3330
    %v3332 = vsel %vm718, %v3226, 0.0
    %v3333 = vadd.f32 %v3331, %v3332
    %v3334 = vsel %vm718, %v3227, 0.0
    %v3335 = vadd.f32 %v3333, %v3334
    %v3336 = vsel %vm718, %v3228, 0.0
    %v3337 = vadd.f32 %v3335, %v3336
    %v3338 = vsel %vm718, %v3229, 0.0
    %v3339 = vadd.f32 %v3337, %v3338
    %v3340 = vsel %vm718, %v3230, 0.0
    %v3341 = vadd.f32 %v3339, %v3340
    %v3342 = vsel %vm718, %v3231, 0.0
    %v3343 = vadd.f32 %v3341, %v3342
    %v3344 = vsel %vm718, %v3232, 0.0
    %v3345 = vadd.f32 %v3343, %v3344
    %v3346 = vsel %vm718, %v3233, 0.0
    %v3347 = vadd.f32 %v3345, %v3346
    %v3348 = vsel %vm718, %v3234, 0.0
    %v3349 = vadd.f32 %v3347, %v3348
    %v3350 = vsel %vm718, %v3235, 0.0
    %v3351 = vadd.f32 %v3349, %v3350
    %v3352 = vsel %vm718, %v3236, 0.0
    %v3353 = vadd.f32 %v3351, %v3352
    %v3354 = vsel %vm718, %v3237, 0.0
    %v3355 = vadd.f32 %v3353, %v3354
    %v3356 = vsel %vm718, %v3238, 0.0
    %v3357 = vadd.f32 %v3355, %v3356
    %v3358 = vsel %vm718, %v3239, 0.0
    %v3359 = vadd.f32 %v3357, %v3358
    %v3360 = vsel %vm718, %v3240, 0.0
    %v3361 = vadd.f32 %v3359, %v3360
    %v3362 = vsel %vm718, %v3241, 0.0
    %v3363 = vadd.f32 %v3361, %v3362
    %v3364 = vsel %vm718, %v3242, 0.0
    %v3365 = vadd.f32 %v3363, %v3364
    %v3366 = vsel %vm718, %v3243, 0.0
    %v3367 = vadd.f32 %v3365, %v3366
    %v3368 = vsel %vm718, %v3244, 0.0
    %v3369 = vadd.f32 %v3367, %v3368
    %v3370 = vsel %vm718, %v3245, 0.0
    %v3371 = vadd.f32 %v3369, %v3370
    %v3372 = vsel %vm718, %v3246, 0.0
    %v3373 = vadd.f32 %v3371, %v3372
    %v3374 = vrot.slane %v3373, 4
    %v3375 = vadd.f32 %v3373, %v3374
    %v3376 = vrot.slane %v3375, 2
    %v3377 = vadd.f32 %v3375, %v3376
    %v3378 = vrot.slane %v3377, 1
    %v3379 = vadd.f32 %v3377, %v3378
    %v3380 = vmul.f32 %v3182, 0.001953125
    %v3381 = vmul.f32 %v3379, 0.001953125
    %v3382 = vmul.f32 %v3380, %v3380
    %v3383 = vsub.f32 %v3381, %v3382
    %v3384 = vsub.f32 %v2794, %v3380
    %v3385 = vsub.f32 %v2797, %v3380
    %v3386 = vsub.f32 %v2802, %v3380
    %v3387 = vsub.f32 %v2805, %v3380
    %v3388 = vsub.f32 %v2810, %v3380
    %v3389 = vsub.f32 %v2813, %v3380
    %v3390 = vsub.f32 %v2818, %v3380
    %v3391 = vsub.f32 %v2821, %v3380
    %v3392 = vsub.f32 %v2826, %v3380
    %v3393 = vsub.f32 %v2829, %v3380
    %v3394 = vsub.f32 %v2834, %v3380
    %v3395 = vsub.f32 %v2837, %v3380
    %v3396 = vsub.f32 %v2842, %v3380
    %v3397 = vsub.f32 %v2845, %v3380
    %v3398 = vsub.f32 %v2850, %v3380
    %v3399 = vsub.f32 %v2853, %v3380
    %v3400 = vsub.f32 %v2858, %v3380
    %v3401 = vsub.f32 %v2861, %v3380
    %v3402 = vsub.f32 %v2866, %v3380
    %v3403 = vsub.f32 %v2869, %v3380
    %v3404 = vsub.f32 %v2874, %v3380
    %v3405 = vsub.f32 %v2877, %v3380
    %v3406 = vsub.f32 %v2882, %v3380
    %v3407 = vsub.f32 %v2885, %v3380
    %v3408 = vsub.f32 %v2890, %v3380
    %v3409 = vsub.f32 %v2893, %v3380
    %v3410 = vsub.f32 %v2898, %v3380
    %v3411 = vsub.f32 %v2901, %v3380
    %v3412 = vsub.f32 %v2906, %v3380
    %v3413 = vsub.f32 %v2909, %v3380
    %v3414 = vsub.f32 %v2914, %v3380
    %v3415 = vsub.f32 %v2917, %v3380
    %v3416 = vsub.f32 %v2922, %v3380
    %v3417 = vsub.f32 %v2925, %v3380
    %v3418 = vsub.f32 %v2930, %v3380
    %v3419 = vsub.f32 %v2933, %v3380
    %v3420 = vsub.f32 %v2938, %v3380
    %v3421 = vsub.f32 %v2941, %v3380
    %v3422 = vsub.f32 %v2946, %v3380
    %v3423 = vsub.f32 %v2949, %v3380
    %v3424 = vsub.f32 %v2954, %v3380
    %v3425 = vsub.f32 %v2957, %v3380
    %v3426 = vsub.f32 %v2962, %v3380
    %v3427 = vsub.f32 %v2965, %v3380
    %v3428 = vsub.f32 %v2970, %v3380
    %v3429 = vsub.f32 %v2973, %v3380
    %v3430 = vsub.f32 %v2978, %v3380
    %v3431 = vsub.f32 %v2981, %v3380
    %v3432 = vsub.f32 %v2986, %v3380
    %v3433 = vsub.f32 %v2989, %v3380
    %v3434 = vsub.f32 %v2994, %v3380
    %v3435 = vsub.f32 %v2997, %v3380
    %v3436 = vsub.f32 %v3002, %v3380
    %v3437 = vsub.f32 %v3005, %v3380
    %v3438 = vsub.f32 %v3010, %v3380
    %v3439 = vsub.f32 %v3013, %v3380
    %v3440 = vsub.f32 %v3018, %v3380
    %v3441 = vsub.f32 %v3021, %v3380
    %v3442 = vsub.f32 %v3026, %v3380
    %v3443 = vsub.f32 %v3029, %v3380
    %v3444 = vsub.f32 %v3034, %v3380
    %v3445 = vsub.f32 %v3037, %v3380
    %v3446 = vsub.f32 %v3042, %v3380
    %v3447 = vsub.f32 %v3045, %v3380
    %v3448 = vadd.f32 %v3383, 1e-05
    %v3449 = vrsqrt.pop %v3448
    %v3450 = vmul.f32 %v3384, %v3449
    %v3451 = vmul.f32 %v3385, %v3449
    %v3452 = vmul.f32 %v3386, %v3449
    %v3453 = vmul.f32 %v3387, %v3449
    %v3454 = vmul.f32 %v3388, %v3449
    %v3455 = vmul.f32 %v3389, %v3449
    %v3456 = vmul.f32 %v3390, %v3449
    %v3457 = vmul.f32 %v3391, %v3449
    %v3458 = vmul.f32 %v3392, %v3449
    %v3459 = vmul.f32 %v3393, %v3449
    %v3460 = vmul.f32 %v3394, %v3449
    %v3461 = vmul.f32 %v3395, %v3449
    %v3462 = vmul.f32 %v3396, %v3449
    %v3463 = vmul.f32 %v3397, %v3449
    %v3464 = vmul.f32 %v3398, %v3449
    %v3465 = vmul.f32 %v3399, %v3449
    %v3466 = vmul.f32 %v3400, %v3449
    %v3467 = vmul.f32 %v3401, %v3449
    %v3468 = vmul.f32 %v3402, %v3449
    %v3469 = vmul.f32 %v3403, %v3449
    %v3470 = vmul.f32 %v3404, %v3449
    %v3471 = vmul.f32 %v3405, %v3449
    %v3472 = vmul.f32 %v3406, %v3449
    %v3473 = vmul.f32 %v3407, %v3449
    %v3474 = vmul.f32 %v3408, %v3449
    %v3475 = vmul.f32 %v3409, %v3449
    %v3476 = vmul.f32 %v3410, %v3449
    %v3477 = vmul.f32 %v3411, %v3449
    %v3478 = vmul.f32 %v3412, %v3449
    %v3479 = vmul.f32 %v3413, %v3449
    %v3480 = vmul.f32 %v3414, %v3449
    %v3481 = vmul.f32 %v3415, %v3449
    %v3482 = vmul.f32 %v3416, %v3449
    %v3483 = vmul.f32 %v3417, %v3449
    %v3484 = vmul.f32 %v3418, %v3449
    %v3485 = vmul.f32 %v3419, %v3449
    %v3486 = vmul.f32 %v3420, %v3449
    %v3487 = vmul.f32 %v3421, %v3449
    %v3488 = vmul.f32 %v3422, %v3449
    %v3489 = vmul.f32 %v3423, %v3449
    %v3490 = vmul.f32 %v3424, %v3449
    %v3491 = vmul.f32 %v3425, %v3449
    %v3492 = vmul.f32 %v3426, %v3449
    %v3493 = vmul.f32 %v3427, %v3449
    %v3494 = vmul.f32 %v3428, %v3449
    %v3495 = vmul.f32 %v3429, %v3449
    %v3496 = vmul.f32 %v3430, %v3449
    %v3497 = vmul.f32 %v3431, %v3449
    %v3498 = vmul.f32 %v3432, %v3449
    %v3499 = vmul.f32 %v3433, %v3449
    %v3500 = vmul.f32 %v3434, %v3449
    %v3501 = vmul.f32 %v3435, %v3449
    %v3502 = vmul.f32 %v3436, %v3449
    %v3503 = vmul.f32 %v3437, %v3449
    %v3504 = vmul.f32 %v3438, %v3449
    %v3505 = vmul.f32 %v3439, %v3449
    %v3506 = vmul.f32 %v3440, %v3449
    %v3507 = vmul.f32 %v3441, %v3449
    %v3508 = vmul.f32 %v3442, %v3449
    %v3509 = vmul.f32 %v3443, %v3449
    %v3510 = vmul.f32 %v3444, %v3449
    %v3511 = vmul.f32 %v3445, %v3449
    %v3512 = vmul.f32 %v3446, %v3449
    %v3513 = vmul.f32 %v3447, %v3449
    %v3515 = vlaneseq
    %v3516 = vshrl.u32 %v3515, 7
    %v3517 = vsub.s32 0, %v3516
    %v3518 = vrot.slane %v3048, %v3517
    %v3520 = vmul.f32 %v3450, %v3518
    %v3521 = vmul.f32 %v3451, %v3518
    %v3522 = vmul.f32 %v3452, %v3518
    %v3523 = vmul.f32 %v3453, %v3518
    %v3524 = vmul.f32 %v3454, %v3518
    %v3525 = vmul.f32 %v3455, %v3518
    %v3526 = vmul.f32 %v3456, %v3518
    %v3527 = vmul.f32 %v3457, %v3518
    %v3528 = vmul.f32 %v3458, %v3518
    %v3529 = vmul.f32 %v3459, %v3518
    %v3530 = vmul.f32 %v3460, %v3518
    %v3531 = vmul.f32 %v3461, %v3518
    %v3532 = vmul.f32 %v3462, %v3518
    %v3533 = vmul.f32 %v3463, %v3518
    %v3534 = vmul.f32 %v3464, %v3518
    %v3535 = vmul.f32 %v3465, %v3518
    %v3536 = vmul.f32 %v3466, %v3518
    %v3537 = vmul.f32 %v3467, %v3518
    %v3538 = vmul.f32 %v3468, %v3518
    %v3539 = vmul.f32 %v3469, %v3518
    %v3540 = vmul.f32 %v3470, %v3518
    %v3541 = vmul.f32 %v3471, %v3518
    %v3542 = vmul.f32 %v3472, %v3518
    %v3543 = vmul.f32 %v3473, %v3518
    %v3544 = vmul.f32 %v3474, %v3518
    %v3545 = vmul.f32 %v3475, %v3518
    %v3546 = vmul.f32 %v3476, %v3518
    %v3547 = vmul.f32 %v3477, %v3518
    %v3548 = vmul.f32 %v3478, %v3518
    %v3549 = vmul.f32 %v3479, %v3518
    %v3550 = vmul.f32 %v3480, %v3518
    %v3551 = vmul.f32 %v3481, %v3518
    %v3552 = vmul.f32 %v3482, %v3518
    %v3553 = vmul.f32 %v3483, %v3518
    %v3554 = vmul.f32 %v3484, %v3518
    %v3555 = vmul.f32 %v3485, %v3518
    %v3556 = vmul.f32 %v3486, %v3518
    %v3557 = vmul.f32 %v3487, %v3518
    %v3558 = vmul.f32 %v3488, %v3518
    %v3559 = vmul.f32 %v3489, %v3518
    %v3560 = vmul.f32 %v3490, %v3518
    %v3561 = vmul.f32 %v3491, %v3518
    %v3562 = vmul.f32 %v3492, %v3518
    %v3563 = vmul.f32 %v3493, %v3518
    %v3564 = vmul.f32 %v3494, %v3518
    %v3565 = vmul.f32 %v3495, %v3518
    %v3566 = vmul.f32 %v3496, %v3518
    %v3567 = vmul.f32 %v3497, %v3518
    %v3568 = vmul.f32 %v3498, %v3518
    %v3569 = vmul.f32 %v3499, %v3518
    %v3570 = vmul.f32 %v3500, %v3518
    %v3571 = vmul.f32 %v3501, %v3518
    %v3572 = vmul.f32 %v3502, %v3518
    %v3573 = vmul.f32 %v3503, %v3518
    %v3574 = vmul.f32 %v3504, %v3518
    %v3575 = vmul.f32 %v3505, %v3518
    %v3576 = vmul.f32 %v3506, %v3518
    %v3577 = vmul.f32 %v3507, %v3518
    %v3578 = vmul.f32 %v3508, %v3518
    %v3579 = vmul.f32 %v3509, %v3518
    %v3580 = vmul.f32 %v3510, %v3518
    %v3581 = vmul.f32 %v3511, %v3518
    %v3582 = vmul.f32 %v3512, %v3518
    %v3583 = vmul.f32 %v3513, %v3518
    %v3585 = vlaneseq
    %v3586 = vshrl.u32 %v3585, 7
    %v3587 = vsub.s32 0, %v3586
    %v3588 = vrot.slane %v3049, %v3587
    %v3590 = vadd.f32 %v3520, %v3588
    %v3591 = vadd.f32 %v3521, %v3588
    %v3592 = vadd.f32 %v3522, %v3588
    %v3593 = vadd.f32 %v3523, %v3588
    %v3594 = vadd.f32 %v3524, %v3588
    %v3595 = vadd.f32 %v3525, %v3588
    %v3596 = vadd.f32 %v3526, %v3588
    %v3597 = vadd.f32 %v3527, %v3588
    %v3598 = vadd.f32 %v3528, %v3588
    %v3599 = vadd.f32 %v3529, %v3588
    %v3600 = vadd.f32 %v3530, %v3588
    %v3601 = vadd.f32 %v3531, %v3588
    %v3602 = vadd.f32 %v3532, %v3588
    %v3603 = vadd.f32 %v3533, %v3588
    %v3604 = vadd.f32 %v3534, %v3588
    %v3605 = vadd.f32 %v3535, %v3588
    %v3606 = vadd.f32 %v3536, %v3588
    %v3607 = vadd.f32 %v3537, %v3588
    %v3608 = vadd.f32 %v3538, %v3588
    %v3609 = vadd.f32 %v3539, %v3588
    %v3610 = vadd.f32 %v3540, %v3588
    %v3611 = vadd.f32 %v3541, %v3588
    %v3612 = vadd.f32 %v3542, %v3588
    %v3613 = vadd.f32 %v3543, %v3588
    %v3614 = vadd.f32 %v3544, %v3588
    %v3615 = vadd.f32 %v3545, %v3588
    %v3616 = vadd.f32 %v3546, %v3588
    %v3617 = vadd.f32 %v3547, %v3588
    %v3618 = vadd.f32 %v3548, %v3588
    %v3619 = vadd.f32 %v3549, %v3588
    %v3620 = vadd.f32 %v3550, %v3588
    %v3621 = vadd.f32 %v3551, %v3588
    %v3622 = vadd.f32 %v3552, %v3588
    %v3623 = vadd.f32 %v3553, %v3588
    %v3624 = vadd.f32 %v3554, %v3588
    %v3625 = vadd.f32 %v3555, %v3588
    %v3626 = vadd.f32 %v3556, %v3588
    %v3627 = vadd.f32 %v3557, %v3588
    %v3628 = vadd.f32 %v3558, %v3588
    %v3629 = vadd.f32 %v3559, %v3588
    %v3630 = vadd.f32 %v3560, %v3588
    %v3631 = vadd.f32 %v3561, %v3588
    %v3632 = vadd.f32 %v3562, %v3588
    %v3633 = vadd.f32 %v3563, %v3588
    %v3634 = vadd.f32 %v3564, %v3588
    %v3635 = vadd.f32 %v3565, %v3588
    %v3636 = vadd.f32 %v3566, %v3588
    %v3637 = vadd.f32 %v3567, %v3588
    %v3638 = vadd.f32 %v3568, %v3588
    %v3639 = vadd.f32 %v3569, %v3588
    %v3640 = vadd.f32 %v3570, %v3588
    %v3641 = vadd.f32 %v3571, %v3588
    %v3642 = vadd.f32 %v3572, %v3588
    %v3643 = vadd.f32 %v3573, %v3588
    %v3644 = vadd.f32 %v3574, %v3588
    %v3645 = vadd.f32 %v3575, %v3588
    %v3646 = vadd.f32 %v3576, %v3588
    %v3647 = vadd.f32 %v3577, %v3588
    %v3648 = vadd.f32 %v3578, %v3588
    %v3649 = vadd.f32 %v3579, %v3588
    %v3650 = vadd.f32 %v3580, %v3588
    %v3651 = vadd.f32 %v3581, %v3588
    %v3652 = vadd.f32 %v3582, %v3588
    %v3653 = vadd.f32 %v3583, %v3588
    %v3654 = vsub.f32 0.0, %v3590
    %v3655 = vsub.f32 0.0, %v3591
    %v3656 = vsub.f32 0.0, %v3592
    %v3657 = vsub.f32 0.0, %v3593
    %v3658 = vsub.f32 0.0, %v3594
    %v3659 = vsub.f32 0.0, %v3595
    %v3660 = vsub.f32 0.0, %v3596
    %v3661 = vsub.f32 0.0, %v3597
    %v3662 = vsub.f32 0.0, %v3598
    %v3663 = vsub.f32 0.0, %v3599
    %v3664 = vsub.f32 0.0, %v3600
    %v3665 = vsub.f32 0.0, %v3601
    %v3666 = vsub.f32 0.0, %v3602
    %v3667 = vsub.f32 0.0, %v3603
    %v3668 = vsub.f32 0.0, %v3604
    %v3669 = vsub.f32 0.0, %v3605
    %v3670 = vsub.f32 0.0, %v3606
    %v3671 = vsub.f32 0.0, %v3607
    %v3672 = vsub.f32 0.0, %v3608
    %v3673 = vsub.f32 0.0, %v3609
    %v3674 = vsub.f32 0.0, %v3610
    %v3675 = vsub.f32 0.0, %v3611
    %v3676 = vsub.f32 0.0, %v3612
    %v3677 = vsub.f32 0.0, %v3613
    %v3678 = vsub.f32 0.0, %v3614
    %v3679 = vsub.f32 0.0, %v3615
    %v3680 = vsub.f32 0.0, %v3616
    %v3681 = vsub.f32 0.0, %v3617
    %v3682 = vsub.f32 0.0, %v3618
    %v3683 = vsub.f32 0.0, %v3619
    %v3684 = vsub.f32 0.0, %v3620
    %v3685 = vsub.f32 0.0, %v3621
    %v3686 = vsub.f32 0.0, %v3622
    %v3687 = vsub.f32 0.0, %v3623
    %v3688 = vsub.f32 0.0, %v3624
    %v3689 = vsub.f32 0.0, %v3625
    %v3690 = vsub.f32 0.0, %v3626
    %v3691 = vsub.f32 0.0, %v3627
    %v3692 = vsub.f32 0.0, %v3628
    %v3693 = vsub.f32 0.0, %v3629
    %v3694 = vsub.f32 0.0, %v3630
    %v3695 = vsub.f32 0.0, %v3631
    %v3696 = vsub.f32 0.0, %v3632
    %v3697 = vsub.f32 0.0, %v3633
    %v3698 = vsub.f32 0.0, %v3634
    %v3699 = vsub.f32 0.0, %v3635
    %v3700 = vsub.f32 0.0, %v3636
    %v3701 = vsub.f32 0.0, %v3637
    %v3702 = vsub.f32 0.0, %v3638
    %v3703 = vsub.f32 0.0, %v3639
    %v3704 = vsub.f32 0.0, %v3640
    %v3705 = vsub.f32 0.0, %v3641
    %v3706 = vsub.f32 0.0, %v3642
    %v3707 = vsub.f32 0.0, %v3643
    %v3708 = vsub.f32 0.0, %v3644
    %v3709 = vsub.f32 0.0, %v3645
    %v3710 = vsub.f32 0.0, %v3646
    %v3711 = vsub.f32 0.0, %v3647
    %v3712 = vsub.f32 0.0, %v3648
    %v3713 = vsub.f32 0.0, %v3649
    %v3714 = vsub.f32 0.0, %v3650
    %v3715 = vsub.f32 0.0, %v3651
    %v3716 = vsub.f32 0.0, %v3652
    %v3717 = vsub.f32 0.0, %v3653
    %v3718 = vmul.f32 %v3654, 1.442695
    %v3719 = vpow.pop %v3718
    %v3720 = vmul.f32 %v3655, 1.442695
    %v3721 = vpow.pop %v3720
    %v3722 = vmul.f32 %v3656, 1.442695
    %v3723 = vpow.pop %v3722
    %v3724 = vmul.f32 %v3657, 1.442695
    %v3725 = vpow.pop %v3724
    %v3726 = vmul.f32 %v3658, 1.442695
    %v3727 = vpow.pop %v3726
    %v3728 = vmul.f32 %v3659, 1.442695
    %v3729 = vpow.pop %v3728
    %v3730 = vmul.f32 %v3660, 1.442695
    %v3731 = vpow.pop %v3730
    %v3732 = vmul.f32 %v3661, 1.442695
    %v3733 = vpow.pop %v3732
    %v3734 = vmul.f32 %v3662, 1.442695
    %v3735 = vpow.pop %v3734
    %v3736 = vmul.f32 %v3663, 1.442695
    %v3737 = vpow.pop %v3736
    %v3738 = vmul.f32 %v3664, 1.442695
    %v3739 = vpow.pop %v3738
    %v3740 = vmul.f32 %v3665, 1.442695
    %v3741 = vpow.pop %v3740
    %v3742 = vmul.f32 %v3666, 1.442695
    %v3743 = vpow.pop %v3742
    %v3744 = vmul.f32 %v3667, 1.442695
    %v3745 = vpow.pop %v3744
    %v3746 = vmul.f32 %v3668, 1.442695
    %v3747 = vpow.pop %v3746
    %v3748 = vmul.f32 %v3669, 1.442695
    %v3749 = vpow.pop %v3748
    %v3750 = vmul.f32 %v3670, 1.442695
    %v3751 = vpow.pop %v3750
    %v3752 = vmul.f32 %v3671, 1.442695
    %v3753 = vpow.pop %v3752
    %v3754 = vmul.f32 %v3672, 1.442695
    %v3755 = vpow.pop %v3754
    %v3756 = vmul.f32 %v3673, 1.442695
    %v3757 = vpow.pop %v3756
    %v3758 = vmul.f32 %v3674, 1.442695
    %v3759 = vpow.pop %v3758
    %v3760 = vmul.f32 %v3675, 1.442695
    %v3761 = vpow.pop %v3760
    %v3762 = vmul.f32 %v3676, 1.442695
    %v3763 = vpow.pop %v3762
    %v3764 = vmul.f32 %v3677, 1.442695
    %v3765 = vpow.pop %v3764
    %v3766 = vmul.f32 %v3678, 1.442695
    %v3767 = vpow.pop %v3766
    %v3768 = vmul.f32 %v3679, 1.442695
    %v3769 = vpow.pop %v3768
    %v3770 = vmul.f32 %v3680, 1.442695
    %v3771 = vpow.pop %v3770
    %v3772 = vmul.f32 %v3681, 1.442695
    %v3773 = vpow.pop %v3772
    %v3774 = vmul.f32 %v3682, 1.442695
    %v3775 = vpow.pop %v3774
    %v3776 = vmul.f32 %v3683, 1.442695
    %v3777 = vpow.pop %v3776
    %v3778 = vmul.f32 %v3684, 1.442695
    %v3779 = vpow.pop %v3778
    %v3780 = vmul.f32 %v3685, 1.442695
    %v3781 = vpow.pop %v3780
    %v3782 = vmul.f32 %v3686, 1.442695
    %v3783 = vpow.pop %v3782
    %v3784 = vmul.f32 %v3687, 1.442695
    %v3785 = vpow.pop %v3784
    %v3786 = vmul.f32 %v3688, 1.442695
    %v3787 = vpow.pop %v3786
    %v3788 = vmul.f32 %v3689, 1.442695
    %v3789 = vpow.pop %v3788
    %v3790 = vmul.f32 %v3690, 1.442695
    %v3791 = vpow.pop %v3790
    %v3792 = vmul.f32 %v3691, 1.442695
    %v3793 = vpow.pop %v3792
    %v3794 = vmul.f32 %v3692, 1.442695
    %v3795 = vpow.pop %v3794
    %v3796 = vmul.f32 %v3693, 1.442695
    %v3797 = vpow.pop %v3796
    %v3798 = vmul.f32 %v3694, 1.442695
    %v3799 = vpow.pop %v3798
    %v3800 = vmul.f32 %v3695, 1.442695
    %v3801 = vpow.pop %v3800
    %v3802 = vmul.f32 %v3696, 1.442695
    %v3803 = vpow.pop %v3802
    %v3804 = vmul.f32 %v3697, 1.442695
    %v3805 = vpow.pop %v3804
    %v3806 = vmul.f32 %v3698, 1.442695
    %v3807 = vpow.pop %v3806
    %v3808 = vmul.f32 %v3699, 1.442695
    %v3809 = vpow.pop %v3808
    %v3810 = vmul.f32 %v3700, 1.442695
    %v3811 = vpow.pop %v3810
    %v3812 = vmul.f32 %v3701, 1.442695
    %v3813 = vpow.pop %v3812
    %v3814 = vmul.f32 %v3702, 1.442695
    %v3815 = vpow.pop %v3814
    %v3816 = vmul.f32 %v3703, 1.442695
    %v3817 = vpow.pop %v3816
    %v3818 = vmul.f32 %v3704, 1.442695
    %v3819 = vpow.pop %v3818
    %v3820 = vmul.f32 %v3705, 1.442695
    %v3821 = vpow.pop %v3820
    %v3822 = vmul.f32 %v3706, 1.442695
    %v3823 = vpow.pop %v3822
    %v3824 = vmul.f32 %v3707, 1.442695
    %v3825 = vpow.pop %v3824
    %v3826 = vmul.f32 %v3708, 1.442695
    %v3827 = vpow.pop %v3826
    %v3828 = vmul.f32 %v3709, 1.442695
    %v3829 = vpow.pop %v3828
    %v3830 = vmul.f32 %v3710, 1.442695
    %v3831 = vpow.pop %v3830
    %v3832 = vmul.f32 %v3711, 1.442695
    %v3833 = vpow.pop %v3832
    %v3834 = vmul.f32 %v3712, 1.442695
    %v3835 = vpow.pop %v3834
    %v3836 = vmul.f32 %v3713, 1.442695
    %v3837 = vpow.pop %v3836
    %v3838 = vmul.f32 %v3714, 1.442695
    %v3839 = vpow.pop %v3838
    %v3840 = vmul.f32 %v3715, 1.442695
    %v3841 = vpow.pop %v3840
    %v3842 = vmul.f32 %v3716, 1.442695
    %v3843 = vpow.pop %v3842
    %v3844 = vmul.f32 %v3717, 1.442695
    %v3845 = vpow.pop %v3844
    %v3846 = vadd.f32 %v3719, 1.0
    %v3847 = vadd.f32 %v3721, 1.0
    %v3848 = vadd.f32 %v3723, 1.0
    %v3849 = vadd.f32 %v3725, 1.0
    %v3850 = vadd.f32 %v3727, 1.0
    %v3851 = vadd.f32 %v3729, 1.0
    %v3852 = vadd.f32 %v3731, 1.0
    %v3853 = vadd.f32 %v3733, 1.0
    %v3854 = vadd.f32 %v3735, 1.0
    %v3855 = vadd.f32 %v3737, 1.0
    %v3856 = vadd.f32 %v3739, 1.0
    %v3857 = vadd.f32 %v3741, 1.0
    %v3858 = vadd.f32 %v3743, 1.0
    %v3859 = vadd.f32 %v3745, 1.0
    %v3860 = vadd.f32 %v3747, 1.0
    %v3861 = vadd.f32 %v3749, 1.0
    %v3862 = vadd.f32 %v3751, 1.0
    %v3863 = vadd.f32 %v3753, 1.0
    %v3864 = vadd.f32 %v3755, 1.0
    %v3865 = vadd.f32 %v3757, 1.0
    %v3866 = vadd.f32 %v3759, 1.0
    %v3867 = vadd.f32 %v3761, 1.0
    %v3868 = vadd.f32 %v3763, 1.0
    %v3869 = vadd.f32 %v3765, 1.0
    %v3870 = vadd.f32 %v3767, 1.0
    %v3871 = vadd.f32 %v3769, 1.0
    %v3872 = vadd.f32 %v3771, 1.0
    %v3873 = vadd.f32 %v3773, 1.0
    %v3874 = vadd.f32 %v3775, 1.0
    %v3875 = vadd.f32 %v3777, 1.0
    %v3876 = vadd.f32 %v3779, 1.0
    %v3877 = vadd.f32 %v3781, 1.0
    %v3878 = vadd.f32 %v3783, 1.0
    %v3879 = vadd.f32 %v3785, 1.0
    %v3880 = vadd.f32 %v3787, 1.0
    %v3881 = vadd.f32 %v3789, 1.0
    %v3882 = vadd.f32 %v3791, 1.0
    %v3883 = vadd.f32 %v3793, 1.0
    %v3884 = vadd.f32 %v3795, 1.0
    %v3885 = vadd.f32 %v3797, 1.0
    %v3886 = vadd.f32 %v3799, 1.0
    %v3887 = vadd.f32 %v3801, 1.0
    %v3888 = vadd.f32 %v3803, 1.0
    %v3889 = vadd.f32 %v3805, 1.0
    %v3890 = vadd.f32 %v3807, 1.0
    %v3891 = vadd.f32 %v3809, 1.0
    %v3892 = vadd.f32 %v3811, 1.0
    %v3893 = vadd.f32 %v3813, 1.0
    %v3894 = vadd.f32 %v3815, 1.0
    %v3895 = vadd.f32 %v3817, 1.0
    %v3896 = vadd.f32 %v3819, 1.0
    %v3897 = vadd.f32 %v3821, 1.0
    %v3898 = vadd.f32 %v3823, 1.0
    %v3899 = vadd.f32 %v3825, 1.0
    %v3900 = vadd.f32 %v3827, 1.0
    %v3901 = vadd.f32 %v3829, 1.0
    %v3902 = vadd.f32 %v3831, 1.0
    %v3903 = vadd.f32 %v3833, 1.0
    %v3904 = vadd.f32 %v3835, 1.0
    %v3905 = vadd.f32 %v3837, 1.0
    %v3906 = vadd.f32 %v3839, 1.0
    %v3907 = vadd.f32 %v3841, 1.0
    %v3908 = vadd.f32 %v3843, 1.0
    %v3909 = vadd.f32 %v3845, 1.0
    %v3910 = vrcp.pop %v3846
    %v3911 = vrcp.pop %v3847
    %v3912 = vrcp.pop %v3848
    %v3913 = vrcp.pop %v3849
    %v3914 = vrcp.pop %v3850
    %v3915 = vrcp.pop %v3851
    %v3916 = vrcp.pop %v3852
    %v3917 = vrcp.pop %v3853
    %v3918 = vrcp.pop %v3854
    %v3919 = vrcp.pop %v3855
    %v3920 = vrcp.pop %v3856
    %v3921 = vrcp.pop %v3857
    %v3922 = vrcp.pop %v3858
    %v3923 = vrcp.pop %v3859
    %v3924 = vrcp.pop %v3860
    %v3925 = vrcp.pop %v3861
    %v3926 = vrcp.pop %v3862
    %v3927 = vrcp.pop %v3863
    %v3928 = vrcp.pop %v3864
    %v3929 = vrcp.pop %v3865
    %v3930 = vrcp.pop %v3866
    %v3931 = vrcp.pop %v3867
    %v3932 = vrcp.pop %v3868
    %v3933 = vrcp.pop %v3869
    %v3934 = vrcp.pop %v3870
    %v3935 = vrcp.pop %v3871
    %v3936 = vrcp.pop %v3872
    %v3937 = vrcp.pop %v3873
    %v3938 = vrcp.pop %v3874
    %v3939 = vrcp.pop %v3875
    %v3940 = vrcp.pop %v3876
    %v3941 = vrcp.pop %v3877
    %v3942 = vrcp.pop %v3878
    %v3943 = vrcp.pop %v3879
    %v3944 = vrcp.pop %v3880
    %v3945 = vrcp.pop %v3881
    %v3946 = vrcp.pop %v3882
    %v3947 = vrcp.pop %v3883
    %v3948 = vrcp.pop %v3884
    %v3949 = vrcp.pop %v3885
    %v3950 = vrcp.pop %v3886
    %v3951 = vrcp.pop %v3887
    %v3952 = vrcp.pop %v3888
    %v3953 = vrcp.pop %v3889
    %v3954 = vrcp.pop %v3890
    %v3955 = vrcp.pop %v3891
    %v3956 = vrcp.pop %v3892
    %v3957 = vrcp.pop %v3893
    %v3958 = vrcp.pop %v3894
    %v3959 = vrcp.pop %v3895
    %v3960 = vrcp.pop %v3896
    %v3961 = vrcp.pop %v3897
    %v3962 = vrcp.pop %v3898
    %v3963 = vrcp.pop %v3899
    %v3964 = vrcp.pop %v3900
    %v3965 = vrcp.pop %v3901
    %v3966 = vrcp.pop %v3902
    %v3967 = vrcp.pop %v3903
    %v3968 = vrcp.pop %v3904
    %v3969 = vrcp.pop %v3905
    %v3970 = vrcp.pop %v3906
    %v3971 = vrcp.pop %v3907
    %v3972 = vrcp.pop %v3908
    %v3973 = vrcp.pop %v3909
    %v3974 = vmul.f32 %v3590, %v3910
    %v3975 = vmul.f32 %v3591, %v3911
    %v3976 = vmul.f32 %v3592, %v3912
    %v3977 = vmul.f32 %v3593, %v3913
    %v3978 = vmul.f32 %v3594, %v3914
    %v3979 = vmul.f32 %v3595, %v3915
    %v3980 = vmul.f32 %v3596, %v3916
    %v3981 = vmul.f32 %v3597, %v3917
    %v3982 = vmul.f32 %v3598, %v3918
    %v3983 = vmul.f32 %v3599, %v3919
    %v3984 = vmul.f32 %v3600, %v3920
    %v3985 = vmul.f32 %v3601, %v3921
    %v3986 = vmul.f32 %v3602, %v3922
    %v3987 = vmul.f32 %v3603, %v3923
    %v3988 = vmul.f32 %v3604, %v3924
    %v3989 = vmul.f32 %v3605, %v3925
    %v3990 = vmul.f32 %v3606, %v3926
    %v3991 = vmul.f32 %v3607, %v3927
    %v3992 = vmul.f32 %v3608, %v3928
    %v3993 = vmul.f32 %v3609, %v3929
    %v3994 = vmul.f32 %v3610, %v3930
    %v3995 = vmul.f32 %v3611, %v3931
    %v3996 = vmul.f32 %v3612, %v3932
    %v3997 = vmul.f32 %v3613, %v3933
    %v3998 = vmul.f32 %v3614, %v3934
    %v3999 = vmul.f32 %v3615, %v3935
    %v4000 = vmul.f32 %v3616, %v3936
    %v4001 = vmul.f32 %v3617, %v3937
    %v4002 = vmul.f32 %v3618, %v3938
    %v4003 = vmul.f32 %v3619, %v3939
    %v4004 = vmul.f32 %v3620, %v3940
    %v4005 = vmul.f32 %v3621, %v3941
    %v4006 = vmul.f32 %v3622, %v3942
    %v4007 = vmul.f32 %v3623, %v3943
    %v4008 = vmul.f32 %v3624, %v3944
    %v4009 = vmul.f32 %v3625, %v3945
    %v4010 = vmul.f32 %v3626, %v3946
    %v4011 = vmul.f32 %v3627, %v3947
    %v4012 = vmul.f32 %v3628, %v3948
    %v4013 = vmul.f32 %v3629, %v3949
    %v4014 = vmul.f32 %v3630, %v3950
    %v4015 = vmul.f32 %v3631, %v3951
    %v4016 = vmul.f32 %v3632, %v3952
    %v4017 = vmul.f32 %v3633, %v3953
    %v4018 = vmul.f32 %v3634, %v3954
    %v4019 = vmul.f32 %v3635, %v3955
    %v4020 = vmul.f32 %v3636, %v3956
    %v4021 = vmul.f32 %v3637, %v3957
    %v4022 = vmul.f32 %v3638, %v3958
    %v4023 = vmul.f32 %v3639, %v3959
    %v4024 = vmul.f32 %v3640, %v3960
    %v4025 = vmul.f32 %v3641, %v3961
    %v4026 = vmul.f32 %v3642, %v3962
    %v4027 = vmul.f32 %v3643, %v3963
    %v4028 = vmul.f32 %v3644, %v3964
    %v4029 = vmul.f32 %v3645, %v3965
    %v4030 = vmul.f32 %v3646, %v3966
    %v4031 = vmul.f32 %v3647, %v3967
    %v4032 = vmul.f32 %v3648, %v3968
    %v4033 = vmul.f32 %v3649, %v3969
    %v4034 = vmul.f32 %v3650, %v3970
    %v4035 = vmul.f32 %v3651, %v3971
    %v4036 = vmul.f32 %v3652, %v3972
    %v4037 = vmul.f32 %v3653, %v3973
    %v4053 = vrot.slane 0.0, 7
    %v4054 = vrot.slane %v4022, 7
    %v4055 = vrot.slane %v4023, 7
    %v4056 = vrot.slane %v4024, 7
    %v4057 = vrot.slane %v4025, 7
    %v4058 = vrot.slane %v4026, 7
    %v4059 = vrot.slane %v4027, 7
    %v4060 = vrot.slane %v4028, 7
    %v4061 = vrot.slane %v4030, 7
    %v4062 = vrot.slane %v4031, 7
    %v4063 = vrot.slane %v4032, 7
    %v4064 = vrot.slane %v4033, 7
    %v4065 = vrot.slane %v4034, 7
    %v4066 = vrot.slane %v4035, 7
    %v4067 = vrot.slane %v4036, 7
    %vm4083 = vcmask 1040384
    %v4084 = vsel %vm4083, 0.0, %v4053
    %v4085 = vsel %vm4083, 0.0, %v4054
    %v4086 = vsel %vm4083, 0.0, %v4055
    %v4087 = vsel %vm4083, 0.0, %v4056
    %v4088 = vsel %vm4083, 0.0, %v4057
    %v4089 = vsel %vm4083, 0.0, %v4058
    %v4090 = vsel %vm4083, 0.0, %v4059
    %v4091 = vsel %vm4083, 0.0, %v4060
    %v4092 = vsel %vm4083, 0.0, %v4061
    %v4093 = vsel %vm4083, 0.0, %v4062
    %v4094 = vsel %vm4083, 0.0, %v4063
    %v4095 = vsel %vm4083, 0.0, %v4064
    %v4096 = vsel %vm4083, 0.0, %v4065
    %v4097 = vsel %vm4083, 0.0, %v4066
    %v4098 = vsel %vm4083, 0.0, %v4067
    %v4115 = vrot.slane %v3990, 7
    %v4116 = vrot.slane %v3991, 7
    %v4117 = vrot.slane %v3992, 7
    %v4118 = vrot.slane %v3993, 7
    %v4119 = vrot.slane %v3994, 7
    %v4120 = vrot.slane %v3995, 7
    %v4121 = vrot.slane %v3996, 7
    %v4122 = vrot.slane %v3997, 7
    %v4123 = vrot.slane %v3998, 7
    %v4124 = vrot.slane %v3999, 7
    %v4125 = vrot.slane %v4000, 7
    %v4126 = vrot.slane %v4001, 7
    %v4127 = vrot.slane %v4002, 7
    %v4128 = vrot.slane %v4003, 7
    %v4129 = vrot.slane %v4004, 7
    %v4130 = vrot.slane %v4005, 7
    %v4147 = vsel %vm4083, 0.0, %v4115
    %v4148 = vsel %vm4083, 0.0, %v4116
    %v4149 = vsel %vm4083, 0.0, %v4117
    %v4150 = vsel %vm4083, 0.0, %v4118
    %v4151 = vsel %vm4083, 0.0, %v4119
    %v4152 = vsel %vm4083, 0.0, %v4120
    %v4153 = vsel %vm4083, 0.0, %v4121
    %v4154 = vsel %vm4083, 0.0, %v4122
    %v4155 = vsel %vm4083, 0.0, %v4123
    %v4156 = vsel %vm4083, 0.0, %v4124
    %v4157 = vsel %vm4083, 0.0, %v4125
    %v4158 = vsel %vm4083, 0.0, %v4126
    %v4159 = vsel %vm4083, 0.0, %v4127
    %v4160 = vsel %vm4083, 0.0, %v4128
    %v4161 = vsel %vm4083, 0.0, %v4129
    %v4162 = vsel %vm4083, 0.0, %v4130
    %v4165 = vrot.slane %v4029, 7
    %v4166 = vrot.slane %v4037, 7
    %v4169 = vsel %vm4083, 0.0, %v4165
    %v4170 = vsel %vm4083, 0.0, %v4166
    %4185 = vrot.lane.b32.xlu0 0.0, 8
    %v4186 = vpop.permute.xlu0 %4185
    %4187 = vrot.lane.b32.xlu0 %v4006, 8
    %v4188 = vpop.permute.xlu0 %4187
    %4189 = vrot.lane.b32.xlu0 %v4007, 8
    %v4190 = vpop.permute.xlu0 %4189
    %4191 = vrot.lane.b32.xlu0 %v4008, 8
    %v4192 = vpop.permute.xlu0 %4191
    %4193 = vrot.lane.b32.xlu0 %v4009, 8
    %v4194 = vpop.permute.xlu0 %4193
    %4195 = vrot.lane.b32.xlu0 %v4010, 8
    %v4196 = vpop.permute.xlu0 %4195
    %4197 = vrot.lane.b32.xlu0 %v4011, 8
    %v4198 = vpop.permute.xlu0 %4197
    %4199 = vrot.lane.b32.xlu0 %v4012, 8
    %v4200 = vpop.permute.xlu0 %4199
    %4201 = vrot.lane.b32.xlu0 %v4014, 8
    %v4202 = vpop.permute.xlu0 %4201
    %4203 = vrot.lane.b32.xlu0 %v4015, 8
    %v4204 = vpop.permute.xlu0 %4203
    %4205 = vrot.lane.b32.xlu0 %v4016, 8
    %v4206 = vpop.permute.xlu0 %4205
    %4207 = vrot.lane.b32.xlu0 %v4017, 8
    %v4208 = vpop.permute.xlu0 %4207
    %4209 = vrot.lane.b32.xlu0 %v4018, 8
    %v4210 = vpop.permute.xlu0 %4209
    %4211 = vrot.lane.b32.xlu0 %v4019, 8
    %v4212 = vpop.permute.xlu0 %4211
    %4213 = vrot.lane.b32.xlu0 %v4020, 8
    %v4214 = vpop.permute.xlu0 %4213
    %4230 = vrot.lane.b32.xlu0 0.0, 16
    %v4231 = vpop.permute.xlu0 %4230
    %4232 = vrot.lane.b32.xlu0 %v4022, 16
    %v4233 = vpop.permute.xlu0 %4232
    %4234 = vrot.lane.b32.xlu0 %v4023, 16
    %v4235 = vpop.permute.xlu0 %4234
    %4236 = vrot.lane.b32.xlu0 %v4024, 16
    %v4237 = vpop.permute.xlu0 %4236
    %4238 = vrot.lane.b32.xlu0 %v4025, 16
    %v4239 = vpop.permute.xlu0 %4238
    %4240 = vrot.lane.b32.xlu0 %v4026, 16
    %v4241 = vpop.permute.xlu0 %4240
    %4242 = vrot.lane.b32.xlu0 %v4027, 16
    %v4243 = vpop.permute.xlu0 %4242
    %4244 = vrot.lane.b32.xlu0 %v4028, 16
    %v4245 = vpop.permute.xlu0 %4244
    %4246 = vrot.lane.b32.xlu0 %v4030, 16
    %v4247 = vpop.permute.xlu0 %4246
    %4248 = vrot.lane.b32.xlu0 %v4031, 16
    %v4249 = vpop.permute.xlu0 %4248
    %4250 = vrot.lane.b32.xlu0 %v4032, 16
    %v4251 = vpop.permute.xlu0 %4250
    %4252 = vrot.lane.b32.xlu0 %v4033, 16
    %v4253 = vpop.permute.xlu0 %4252
    %4254 = vrot.lane.b32.xlu0 %v4034, 16
    %v4255 = vpop.permute.xlu0 %4254
    %4256 = vrot.lane.b32.xlu0 %v4035, 16
    %v4257 = vpop.permute.xlu0 %4256
    %4258 = vrot.lane.b32.xlu0 %v4036, 16
    %v4259 = vpop.permute.xlu0 %4258
    %4291 = vrot.lane.b32.xlu0 %v4147, 24
    %v4292 = vpop.permute.xlu0 %4291
    %4293 = vrot.lane.b32.xlu0 %v4148, 24
    %v4294 = vpop.permute.xlu0 %4293
    %4295 = vrot.lane.b32.xlu0 %v4149, 24
    %v4296 = vpop.permute.xlu0 %4295
    %4297 = vrot.lane.b32.xlu0 %v4150, 24
    %v4298 = vpop.permute.xlu0 %4297
    %4299 = vrot.lane.b32.xlu0 %v4151, 24
    %v4300 = vpop.permute.xlu0 %4299
    %4301 = vrot.lane.b32.xlu0 %v4152, 24
    %v4302 = vpop.permute.xlu0 %4301
    %4303 = vrot.lane.b32.xlu0 %v4153, 24
    %v4304 = vpop.permute.xlu0 %4303
    %4305 = vrot.lane.b32.xlu0 %v4154, 24
    %v4306 = vpop.permute.xlu0 %4305
    %4307 = vrot.lane.b32.xlu0 %v4155, 24
    %v4308 = vpop.permute.xlu0 %4307
    %4309 = vrot.lane.b32.xlu0 %v4156, 24
    %v4310 = vpop.permute.xlu0 %4309
    %4311 = vrot.lane.b32.xlu0 %v4157, 24
    %v4312 = vpop.permute.xlu0 %4311
    %4313 = vrot.lane.b32.xlu0 %v4158, 24
    %v4314 = vpop.permute.xlu0 %4313
    %4315 = vrot.lane.b32.xlu0 %v4159, 24
    %v4316 = vpop.permute.xlu0 %4315
    %4317 = vrot.lane.b32.xlu0 %v4160, 24
    %v4318 = vpop.permute.xlu0 %4317
    %4319 = vrot.lane.b32.xlu0 %v4161, 24
    %v4320 = vpop.permute.xlu0 %4319
    %4321 = vrot.lane.b32.xlu0 %v4162, 24
    %v4322 = vpop.permute.xlu0 %4321
    %4355 = vrot.lane.b32.xlu0 %v3974, 32
    %v4356 = vpop.permute.xlu0 %4355
    %4357 = vrot.lane.b32.xlu0 %v3975, 32
    %v4358 = vpop.permute.xlu0 %4357
    %4359 = vrot.lane.b32.xlu0 %v3976, 32
    %v4360 = vpop.permute.xlu0 %4359
    %4361 = vrot.lane.b32.xlu0 %v3977, 32
    %v4362 = vpop.permute.xlu0 %4361
    %4363 = vrot.lane.b32.xlu0 %v3978, 32
    %v4364 = vpop.permute.xlu0 %4363
    %4365 = vrot.lane.b32.xlu0 %v3979, 32
    %v4366 = vpop.permute.xlu0 %4365
    %4367 = vrot.lane.b32.xlu0 %v3980, 32
    %v4368 = vpop.permute.xlu0 %4367
    %4369 = vrot.lane.b32.xlu0 %v3981, 32
    %v4370 = vpop.permute.xlu0 %4369
    %4371 = vrot.lane.b32.xlu0 %v3982, 32
    %v4372 = vpop.permute.xlu0 %4371
    %4373 = vrot.lane.b32.xlu0 %v3983, 32
    %v4374 = vpop.permute.xlu0 %4373
    %4375 = vrot.lane.b32.xlu0 %v3984, 32
    %v4376 = vpop.permute.xlu0 %4375
    %4377 = vrot.lane.b32.xlu0 %v3985, 32
    %v4378 = vpop.permute.xlu0 %4377
    %4379 = vrot.lane.b32.xlu0 %v3986, 32
    %v4380 = vpop.permute.xlu0 %4379
    %4381 = vrot.lane.b32.xlu0 %v3987, 32
    %v4382 = vpop.permute.xlu0 %4381
    %4383 = vrot.lane.b32.xlu0 %v3988, 32
    %v4384 = vpop.permute.xlu0 %4383
    %4385 = vrot.lane.b32.xlu0 %v3989, 32
    %v4386 = vpop.permute.xlu0 %4385
    %4403 = vrot.lane.b32.xlu0 %v3990, 40
    %v4404 = vpop.permute.xlu0 %4403
    %4405 = vrot.lane.b32.xlu0 %v3991, 40
    %v4406 = vpop.permute.xlu0 %4405
    %4407 = vrot.lane.b32.xlu0 %v3992, 40
    %v4408 = vpop.permute.xlu0 %4407
    %4409 = vrot.lane.b32.xlu0 %v3993, 40
    %v4410 = vpop.permute.xlu0 %4409
    %4411 = vrot.lane.b32.xlu0 %v3994, 40
    %v4412 = vpop.permute.xlu0 %4411
    %4413 = vrot.lane.b32.xlu0 %v3995, 40
    %v4414 = vpop.permute.xlu0 %4413
    %4415 = vrot.lane.b32.xlu0 %v3996, 40
    %v4416 = vpop.permute.xlu0 %4415
    %4417 = vrot.lane.b32.xlu0 %v3997, 40
    %v4418 = vpop.permute.xlu0 %4417
    %4419 = vrot.lane.b32.xlu0 %v3998, 40
    %v4420 = vpop.permute.xlu0 %4419
    %4421 = vrot.lane.b32.xlu0 %v3999, 40
    %v4422 = vpop.permute.xlu0 %4421
    %4423 = vrot.lane.b32.xlu0 %v4000, 40
    %v4424 = vpop.permute.xlu0 %4423
    %4425 = vrot.lane.b32.xlu0 %v4001, 40
    %v4426 = vpop.permute.xlu0 %4425
    %4427 = vrot.lane.b32.xlu0 %v4002, 40
    %v4428 = vpop.permute.xlu0 %4427
    %4429 = vrot.lane.b32.xlu0 %v4003, 40
    %v4430 = vpop.permute.xlu0 %4429
    %4431 = vrot.lane.b32.xlu0 %v4004, 40
    %v4432 = vpop.permute.xlu0 %4431
    %4433 = vrot.lane.b32.xlu0 %v4005, 40
    %v4434 = vpop.permute.xlu0 %4433
    %4467 = vrot.lane.b32.xlu0 %v4085, 48
    %v4468 = vpop.permute.xlu0 %4467
    %4469 = vrot.lane.b32.xlu0 %v4086, 48
    %v4470 = vpop.permute.xlu0 %4469
    %4471 = vrot.lane.b32.xlu0 %v4087, 48
    %v4472 = vpop.permute.xlu0 %4471
    %4473 = vrot.lane.b32.xlu0 %v4088, 48
    %v4474 = vpop.permute.xlu0 %4473
    %4475 = vrot.lane.b32.xlu0 %v4089, 48
    %v4476 = vpop.permute.xlu0 %4475
    %4477 = vrot.lane.b32.xlu0 %v4090, 48
    %v4478 = vpop.permute.xlu0 %4477
    %4479 = vrot.lane.b32.xlu0 %v4091, 48
    %v4480 = vpop.permute.xlu0 %4479
    %4481 = vrot.lane.b32.xlu0 %v4169, 48
    %v4482 = vpop.permute.xlu0 %4481
    %4483 = vrot.lane.b32.xlu0 %v4092, 48
    %v4484 = vpop.permute.xlu0 %4483
    %4485 = vrot.lane.b32.xlu0 %v4093, 48
    %v4486 = vpop.permute.xlu0 %4485
    %4487 = vrot.lane.b32.xlu0 %v4094, 48
    %v4488 = vpop.permute.xlu0 %4487
    %4489 = vrot.lane.b32.xlu0 %v4095, 48
    %v4490 = vpop.permute.xlu0 %4489
    %4491 = vrot.lane.b32.xlu0 %v4096, 48
    %v4492 = vpop.permute.xlu0 %4491
    %4493 = vrot.lane.b32.xlu0 %v4097, 48
    %v4494 = vpop.permute.xlu0 %4493
    %4495 = vrot.lane.b32.xlu0 %v4098, 48
    %v4496 = vpop.permute.xlu0 %4495
    %4497 = vrot.lane.b32.xlu0 %v4170, 48
    %v4498 = vpop.permute.xlu0 %4497
    %4517 = vrot.lane.b32.xlu0 %v4006, 56
    %v4518 = vpop.permute.xlu0 %4517
    %4519 = vrot.lane.b32.xlu0 %v4007, 56
    %v4520 = vpop.permute.xlu0 %4519
    %4521 = vrot.lane.b32.xlu0 %v4008, 56
    %v4522 = vpop.permute.xlu0 %4521
    %4523 = vrot.lane.b32.xlu0 %v4009, 56
    %v4524 = vpop.permute.xlu0 %4523
    %4525 = vrot.lane.b32.xlu0 %v4010, 56
    %v4526 = vpop.permute.xlu0 %4525
    %4527 = vrot.lane.b32.xlu0 %v4011, 56
    %v4528 = vpop.permute.xlu0 %4527
    %4529 = vrot.lane.b32.xlu0 %v4012, 56
    %v4530 = vpop.permute.xlu0 %4529
    %4531 = vrot.lane.b32.xlu0 %v4013, 56
    %v4532 = vpop.permute.xlu0 %4531
    %4533 = vrot.lane.b32.xlu0 %v4014, 56
    %v4534 = vpop.permute.xlu0 %4533
    %4535 = vrot.lane.b32.xlu0 %v4015, 56
    %v4536 = vpop.permute.xlu0 %4535
    %4537 = vrot.lane.b32.xlu0 %v4016, 56
    %v4538 = vpop.permute.xlu0 %4537
    %4539 = vrot.lane.b32.xlu0 %v4017, 56
    %v4540 = vpop.permute.xlu0 %4539
    %4541 = vrot.lane.b32.xlu0 %v4018, 56
    %v4542 = vpop.permute.xlu0 %4541
    %4543 = vrot.lane.b32.xlu0 %v4019, 56
    %v4544 = vpop.permute.xlu0 %4543
    %4545 = vrot.lane.b32.xlu0 %v4020, 56
    %v4546 = vpop.permute.xlu0 %4545
    %4547 = vrot.lane.b32.xlu0 %v4021, 56
    %v4548 = vpop.permute.xlu0 %4547
    %4565 = vrot.lane.b32.xlu0 %v4022, 64
    %v4566 = vpop.permute.xlu0 %4565
    %4567 = vrot.lane.b32.xlu0 %v4023, 64
    %v4568 = vpop.permute.xlu0 %4567
    %4569 = vrot.lane.b32.xlu0 %v4024, 64
    %v4570 = vpop.permute.xlu0 %4569
    %4571 = vrot.lane.b32.xlu0 %v4025, 64
    %v4572 = vpop.permute.xlu0 %4571
    %4573 = vrot.lane.b32.xlu0 %v4026, 64
    %v4574 = vpop.permute.xlu0 %4573
    %4575 = vrot.lane.b32.xlu0 %v4027, 64
    %v4576 = vpop.permute.xlu0 %4575
    %4577 = vrot.lane.b32.xlu0 %v4028, 64
    %v4578 = vpop.permute.xlu0 %4577
    %4579 = vrot.lane.b32.xlu0 %v4029, 64
    %v4580 = vpop.permute.xlu0 %4579
    %4581 = vrot.lane.b32.xlu0 %v4030, 64
    %v4582 = vpop.permute.xlu0 %4581
    %4583 = vrot.lane.b32.xlu0 %v4031, 64
    %v4584 = vpop.permute.xlu0 %4583
    %4585 = vrot.lane.b32.xlu0 %v4032, 64
    %v4586 = vpop.permute.xlu0 %4585
    %4587 = vrot.lane.b32.xlu0 %v4033, 64
    %v4588 = vpop.permute.xlu0 %4587
    %4589 = vrot.lane.b32.xlu0 %v4034, 64
    %v4590 = vpop.permute.xlu0 %4589
    %4591 = vrot.lane.b32.xlu0 %v4035, 64
    %v4592 = vpop.permute.xlu0 %4591
    %4593 = vrot.lane.b32.xlu0 %v4036, 64
    %v4594 = vpop.permute.xlu0 %4593
    %4595 = vrot.lane.b32.xlu0 %v4037, 64
    %v4596 = vpop.permute.xlu0 %4595
    %v4613 = vsel %vm718, %v4084, %v4186
    %v4614 = vsel %vm718, %v4085, %v4188
    %v4615 = vsel %vm718, %v4086, %v4190
    %v4616 = vsel %vm718, %v4087, %v4192
    %v4617 = vsel %vm718, %v4088, %v4194
    %v4618 = vsel %vm718, %v4089, %v4196
    %v4619 = vsel %vm718, %v4090, %v4198
    %v4620 = vsel %vm718, %v4091, %v4200
    %v4621 = vsel %vm718, %v4092, %v4202
    %v4622 = vsel %vm718, %v4093, %v4204
    %v4623 = vsel %vm718, %v4094, %v4206
    %v4624 = vsel %vm718, %v4095, %v4208
    %v4625 = vsel %vm718, %v4096, %v4210
    %v4626 = vsel %vm718, %v4097, %v4212
    %v4627 = vsel %vm718, %v4098, %v4214
    %v4628 = vsel %vm752, %v4613, %v4231
    %v4629 = vsel %vm752, %v4614, %v4233
    %v4630 = vsel %vm752, %v4615, %v4235
    %v4631 = vsel %vm752, %v4616, %v4237
    %v4632 = vsel %vm752, %v4617, %v4239
    %v4633 = vsel %vm752, %v4618, %v4241
    %v4634 = vsel %vm752, %v4619, %v4243
    %v4635 = vsel %vm752, %v4620, %v4245
    %v4636 = vsel %vm752, %v4621, %v4247
    %v4637 = vsel %vm752, %v4622, %v4249
    %v4638 = vsel %vm752, %v4623, %v4251
    %v4639 = vsel %vm752, %v4624, %v4253
    %v4640 = vsel %vm752, %v4625, %v4255
    %v4641 = vsel %vm752, %v4626, %v4257
    %v4642 = vsel %vm752, %v4627, %v4259
    %v4643 = vsel %vm786, %v4628, %v4292
    %v4644 = vsel %vm786, %v4629, %v4294
    %v4645 = vsel %vm786, %v4630, %v4296
    %v4646 = vsel %vm786, %v4631, %v4298
    %v4647 = vsel %vm786, %v4632, %v4300
    %v4648 = vsel %vm786, %v4633, %v4302
    %v4649 = vsel %vm786, %v4634, %v4304
    %v4650 = vsel %vm786, %v4635, %v4306
    %v4651 = vsel %vm786, %v4628, %v4308
    %v4652 = vsel %vm786, %v4636, %v4310
    %v4653 = vsel %vm786, %v4637, %v4312
    %v4654 = vsel %vm786, %v4638, %v4314
    %v4655 = vsel %vm786, %v4639, %v4316
    %v4656 = vsel %vm786, %v4640, %v4318
    %v4657 = vsel %vm786, %v4641, %v4320
    %v4658 = vsel %vm786, %v4642, %v4322
    %v4659 = vsel %vm820, %v4643, %v4356
    %v4660 = vsel %vm820, %v4644, %v4358
    %v4661 = vsel %vm820, %v4645, %v4360
    %v4662 = vsel %vm820, %v4646, %v4362
    %v4663 = vsel %vm820, %v4647, %v4364
    %v4664 = vsel %vm820, %v4648, %v4366
    %v4665 = vsel %vm820, %v4649, %v4368
    %v4666 = vsel %vm820, %v4650, %v4370
    %v4667 = vsel %vm820, %v4651, %v4372
    %v4668 = vsel %vm820, %v4652, %v4374
    %v4669 = vsel %vm820, %v4653, %v4376
    %v4670 = vsel %vm820, %v4654, %v4378
    %v4671 = vsel %vm820, %v4655, %v4380
    %v4672 = vsel %vm820, %v4656, %v4382
    %v4673 = vsel %vm820, %v4657, %v4384
    %v4674 = vsel %vm820, %v4658, %v4386
    %vm4675 = vcmask 326656
    %v4676 = vsel %vm4675, %v4659, %v4404
    %v4677 = vsel %vm4675, %v4660, %v4406
    %v4678 = vsel %vm4675, %v4661, %v4408
    %v4679 = vsel %vm4675, %v4662, %v4410
    %v4680 = vsel %vm4675, %v4663, %v4412
    %v4681 = vsel %vm4675, %v4664, %v4414
    %v4682 = vsel %vm4675, %v4665, %v4416
    %v4683 = vsel %vm4675, %v4666, %v4418
    %v4684 = vsel %vm4675, %v4667, %v4420
    %v4685 = vsel %vm4675, %v4668, %v4422
    %v4686 = vsel %vm4675, %v4669, %v4424
    %v4687 = vsel %vm4675, %v4670, %v4426
    %v4688 = vsel %vm4675, %v4671, %v4428
    %v4689 = vsel %vm4675, %v4672, %v4430
    %v4690 = vsel %vm4675, %v4673, %v4432
    %v4691 = vsel %vm4675, %v4674, %v4434
    %vm4692 = vcmask 392192
    %v4693 = vsel %vm4692, %v4676, %v4468
    %v4694 = vsel %vm4692, %v4677, %v4470
    %v4695 = vsel %vm4692, %v4678, %v4472
    %v4696 = vsel %vm4692, %v4679, %v4474
    %v4697 = vsel %vm4692, %v4680, %v4476
    %v4698 = vsel %vm4692, %v4681, %v4478
    %v4699 = vsel %vm4692, %v4682, %v4480
    %v4700 = vsel %vm4692, %v4683, %v4482
    %v4701 = vsel %vm4692, %v4684, %v4484
    %v4702 = vsel %vm4692, %v4685, %v4486
    %v4703 = vsel %vm4692, %v4686, %v4488
    %v4704 = vsel %vm4692, %v4687, %v4490
    %v4705 = vsel %vm4692, %v4688, %v4492
    %v4706 = vsel %vm4692, %v4689, %v4494
    %v4707 = vsel %vm4692, %v4690, %v4496
    %v4708 = vsel %vm4692, %v4691, %v4498
    %vm4709 = vcmask 457728
    %v4710 = vsel %vm4709, %v4693, %v4518
    %v4711 = vsel %vm4709, %v4694, %v4520
    %v4712 = vsel %vm4709, %v4695, %v4522
    %v4713 = vsel %vm4709, %v4696, %v4524
    %v4714 = vsel %vm4709, %v4697, %v4526
    %v4715 = vsel %vm4709, %v4698, %v4528
    %v4716 = vsel %vm4709, %v4699, %v4530
    %v4717 = vsel %vm4709, %v4700, %v4532
    %v4718 = vsel %vm4709, %v4701, %v4534
    %v4719 = vsel %vm4709, %v4702, %v4536
    %v4720 = vsel %vm4709, %v4703, %v4538
    %v4721 = vsel %vm4709, %v4704, %v4540
    %v4722 = vsel %vm4709, %v4705, %v4542
    %v4723 = vsel %vm4709, %v4706, %v4544
    %v4724 = vsel %vm4709, %v4707, %v4546
    %v4725 = vsel %vm4709, %v4708, %v4548
    %vm4726 = vcmask 523264
    %v4727 = vsel %vm4726, %v4710, %v4566
    %v4728 = vsel %vm4726, %v4711, %v4568
    %v4729 = vsel %vm4726, %v4712, %v4570
    %v4730 = vsel %vm4726, %v4713, %v4572
    %v4731 = vsel %vm4726, %v4714, %v4574
    %v4732 = vsel %vm4726, %v4715, %v4576
    %v4733 = vsel %vm4726, %v4716, %v4578
    %v4734 = vsel %vm4726, %v4717, %v4580
    %v4735 = vsel %vm4726, %v4718, %v4582
    %v4736 = vsel %vm4726, %v4719, %v4584
    %v4737 = vsel %vm4726, %v4720, %v4586
    %v4738 = vsel %vm4726, %v4721, %v4588
    %v4739 = vsel %vm4726, %v4722, %v4590
    %v4740 = vsel %vm4726, %v4723, %v4592
    %v4741 = vsel %vm4726, %v4724, %v4594
    %v4742 = vsel %vm4726, %v4725, %v4596
    %v4743 = vpack.c.bf16 %v4728, %v4727
    %v4744 = vpack.c.bf16 %v4730, %v4729
    %v4745 = vpack.c.bf16 %v4732, %v4731
    %v4746 = vpack.c.bf16 %v4734, %v4733
    %v4747 = vpack.c.bf16 %v4736, %v4735
    %v4748 = vpack.c.bf16 %v4738, %v4737
    %v4749 = vpack.c.bf16 %v4740, %v4739
    %v4750 = vpack.c.bf16 %v4742, %v4741
    %v4751 = vld [vmem:[%s8] sm:$0xf]
    %v4752 = vld [vmem:[%s8 + $0x4] sm:$0xf]
    %v4753 = vld [vmem:[%s8 + $0x8] sm:$0xf]
    %v4754 = vld [vmem:[%s8 + $0xc] sm:$0xf]
    %v4755 = vld [vmem:[%s8 + $0x10] sm:$0xf]
    %v4756 = vld [vmem:[%s8 + $0x14] sm:$0xf]
    %v4757 = vld [vmem:[%s8 + $0x18] sm:$0xf]
    %v4758 = vld [vmem:[%s8 + $0x1c] sm:$0xf]
    %v4759 = vld [vmem:[%s8 + $0x20] sm:$0xf]
    %v4760 = vld [vmem:[%s9] sm:$0x1]
    %v4762 = vlaneseq
    %v4763 = vshrl.u32 %v4762, 7
    %v4764 = vsub.s32 0, %v4763
    %v4765 = vrot.slane %v4760, %v4764
    %v4776 = vunpack.c.l.b16 %v4751
    %v4777 = vunpack.c.l.b16 %v4752
    %v4778 = vunpack.c.l.b16 %v4753
    %v4779 = vunpack.c.l.b16 %v4754
    %v4780 = vunpack.c.l.b16 %v4755
    %v4781 = vunpack.c.l.b16 %v4756
    %v4782 = vunpack.c.l.b16 %v4757
    %v4783 = vunpack.c.l.b16 %v4758
    %v4784 = vunpack.c.l.b16 %v4759
    %v4785 = vpack.c.b16 %v4777, %v4776
    %v4786 = vpack.c.b16 %v4779, %v4778
    %v4787 = vpack.c.b16 %v4781, %v4780
    %v4788 = vpack.c.b16 %v4783, %v4782
    %v4789 = vpack.c.b16 %v4784, %v4784
    %vm4794 = vcmask 588800
    %v4796 = vsel %vm4794, %v4743, 0
    %v4799 = vsel %vm4794, %v4744, 0
    %v4802 = vsel %vm4794, %v4745, 0
    %v4805 = vsel %vm4794, %v4746, 0
    %v4808 = vsel %vm4794, %v4747, 0
    %v4811 = vsel %vm4794, %v4748, 0
    %v4814 = vsel %vm4794, %v4749, 0
    %v4817 = vsel %vm4794, %v4750, 0
    %vm4819 = vcmask 1043456
    %v4821 = vsel %vm4819, %v4789, 0
    %4823 = vmatprep.subr.bf16.mxu0 0
    %4824 = vmatpush1.bf16.msra.mxu0 0
    %4825 = vmatprep.subr.bf16.mxu0 0
    %4826 = vmatpush1.bf16.msra.mxu0 0
    %4827 = vmatprep.subr.bf16.mxu0 0
    %4828 = vmatpush1.bf16.msra.mxu0 0
    %4829 = vmatprep.subr.bf16.mxu0 0
    %4830 = vmatpush1.bf16.msra.mxu0 %v4821
    %4831 = vmatprep.subr.bf16.mxu0 0
    %4832 = vmatpush1.bf16.msra.mxu0 %v4788
    %4833 = vmatprep.subr.bf16.mxu0 0
    %4834 = vmatpush1.bf16.msra.mxu0 %v4787
    %4835 = vmatprep.subr.bf16.mxu0 0
    %4836 = vmatpush1.bf16.msra.mxu0 %v4786
    %4837 = vmatprep.subr.bf16.mxu0 0
    %4838 = vmatpush1.bf16.msra.mxu0 %v4785
    %4839 = vmatprep.subr.bf16.mxu0 0
    %4840 = vmatpush2.bf16.msra.mxu0 0
    %4841 = vmatprep.subr.bf16.mxu0 0
    %4842 = vmatpush2.bf16.msra.mxu0 0
    %4843 = vmatprep.subr.bf16.mxu0 0
    %4844 = vmatpush2.bf16.msra.mxu0 0
    %4845 = vmatprep.subr.bf16.mxu0 0
    %4846 = vmatpush2.bf16.msra.mxu0 0
    %4847 = vmatprep.subr.bf16.mxu0 0
    %4848 = vmatpush2.bf16.msra.mxu0 0
    %4849 = vmatprep.subr.bf16.mxu0 0
    %4850 = vmatpush2.bf16.msra.mxu0 0
    %4851 = vmatprep.subr.bf16.mxu0 0
    %4852 = vmatpush2.bf16.msra.mxu0 0
    %4853 = vmatprep.subr.bf16.mxu0 0
    %4854 = vmatpush2.bf16.msra.mxu0 0
    %4855 = vmatprep.mubr.bf16.mxu0 0
    %4856 = vmatmul.mubr.bf16.gmra.mxu0 %v4796
    %v4857 = vpop.f32.mrf.mxu0
    %v4858 = vadd.f32 %v4765, %v4857
    %v4859 = vpop.f32.mrf.mxu0
    %v4860 = vpop.f32.mrf.mxu0
    %v4861 = vadd.f32 %v4765, %v4860
    %v4862 = vpop.f32.mrf.mxu0
    %4863 = vmatprep.mubr.bf16.mxu0 0
    %4864 = vmatmul.mubr.bf16.gmra.mxu0 %v4799
    %v4865 = vpop.f32.mrf.mxu0
    %v4866 = vadd.f32 %v4765, %v4865
    %v4867 = vpop.f32.mrf.mxu0
    %v4868 = vpop.f32.mrf.mxu0
    %v4869 = vadd.f32 %v4765, %v4868
    %v4870 = vpop.f32.mrf.mxu0
    %4871 = vmatprep.mubr.bf16.mxu0 0
    %4872 = vmatmul.mubr.bf16.gmra.mxu0 %v4802
    %v4873 = vpop.f32.mrf.mxu0
    %v4874 = vadd.f32 %v4765, %v4873
    %v4875 = vpop.f32.mrf.mxu0
    %v4876 = vpop.f32.mrf.mxu0
    %v4877 = vadd.f32 %v4765, %v4876
    %v4878 = vpop.f32.mrf.mxu0
    %4879 = vmatprep.mubr.bf16.mxu0 0
    %4880 = vmatmul.mubr.bf16.gmra.mxu0 %v4805
    %v4881 = vpop.f32.mrf.mxu0
    %v4882 = vadd.f32 %v4765, %v4881
    %v4883 = vpop.f32.mrf.mxu0
    %v4884 = vpop.f32.mrf.mxu0
    %v4885 = vadd.f32 %v4765, %v4884
    %v4886 = vpop.f32.mrf.mxu0
    %4887 = vmatprep.mubr.bf16.mxu0 0
    %4888 = vmatmul.mubr.bf16.gmra.mxu0 %v4808
    %v4889 = vpop.f32.mrf.mxu0
    %v4890 = vadd.f32 %v4765, %v4889
    %v4891 = vpop.f32.mrf.mxu0
    %v4892 = vpop.f32.mrf.mxu0
    %v4893 = vadd.f32 %v4765, %v4892
    %v4894 = vpop.f32.mrf.mxu0
    %4895 = vmatprep.mubr.bf16.mxu0 0
    %4896 = vmatmul.mubr.bf16.gmra.mxu0 %v4811
    %v4897 = vpop.f32.mrf.mxu0
    %v4898 = vadd.f32 %v4765, %v4897
    %v4899 = vpop.f32.mrf.mxu0
    %v4900 = vpop.f32.mrf.mxu0
    %v4901 = vadd.f32 %v4765, %v4900
    %v4902 = vpop.f32.mrf.mxu0
    %4903 = vmatprep.mubr.bf16.mxu0 0
    %4904 = vmatmul.mubr.bf16.gmra.mxu0 %v4814
    %v4905 = vpop.f32.mrf.mxu0
    %v4906 = vadd.f32 %v4765, %v4905
    %v4907 = vpop.f32.mrf.mxu0
    %v4908 = vpop.f32.mrf.mxu0
    %v4909 = vadd.f32 %v4765, %v4908
    %v4910 = vpop.f32.mrf.mxu0
    %4911 = vmatprep.mubr.bf16.mxu0 0
    %4912 = vmatmul.mubr.bf16.gmra.mxu0 %v4817
    %v4913 = vpop.f32.mrf.mxu0
    %v4914 = vadd.f32 %v4765, %v4913
    %v4915 = vpop.f32.mrf.mxu0
    %v4916 = vpop.f32.mrf.mxu0
    %v4917 = vadd.f32 %v4765, %v4916
    %v4918 = vpop.f32.mrf.mxu0
    %4919 = vdwg.mxu0
    %v4920 = vld [vmem:[%s10] sm:$0x1]
    %v4921 = vld [vmem:[%s11] sm:$0x1]
    %v4922 = vsel %vm752, %v4858, 0.0
    %v4923 = vsel %vm752, %v4861, 0.0
    %v4924 = vadd.f32 %v4922, %v4923
    %v4925 = vsel %vm752, %v4866, 0.0
    %v4926 = vadd.f32 %v4924, %v4925
    %v4927 = vsel %vm752, %v4869, 0.0
    %v4928 = vadd.f32 %v4926, %v4927
    %v4929 = vsel %vm752, %v4874, 0.0
    %v4930 = vadd.f32 %v4928, %v4929
    %v4931 = vsel %vm752, %v4877, 0.0
    %v4932 = vadd.f32 %v4930, %v4931
    %v4933 = vsel %vm752, %v4882, 0.0
    %v4934 = vadd.f32 %v4932, %v4933
    %v4935 = vsel %vm752, %v4885, 0.0
    %v4936 = vadd.f32 %v4934, %v4935
    %v4937 = vsel %vm752, %v4890, 0.0
    %v4938 = vadd.f32 %v4936, %v4937
    %v4939 = vsel %vm752, %v4893, 0.0
    %v4940 = vadd.f32 %v4938, %v4939
    %v4941 = vsel %vm752, %v4898, 0.0
    %v4942 = vadd.f32 %v4940, %v4941
    %v4943 = vsel %vm752, %v4901, 0.0
    %v4944 = vadd.f32 %v4942, %v4943
    %v4945 = vsel %vm752, %v4906, 0.0
    %v4946 = vadd.f32 %v4944, %v4945
    %v4947 = vsel %vm752, %v4909, 0.0
    %v4948 = vadd.f32 %v4946, %v4947
    %v4949 = vsel %vm752, %v4914, 0.0
    %v4950 = vadd.f32 %v4948, %v4949
    %v4951 = vsel %vm752, %v4917, 0.0
    %v4952 = vadd.f32 %v4950, %v4951
    %v4953 = vrot.slane %v4952, 4
    %v4954 = vadd.f32 %v4952, %v4953
    %v4955 = vrot.slane %v4954, 2
    %v4956 = vadd.f32 %v4954, %v4955
    %v4957 = vrot.slane %v4956, 1
    %v4958 = vadd.f32 %v4956, %v4957
    %v4959 = vmul.f32 %v4858, %v4858
    %v4960 = vmul.f32 %v4861, %v4861
    %v4961 = vmul.f32 %v4866, %v4866
    %v4962 = vmul.f32 %v4869, %v4869
    %v4963 = vmul.f32 %v4874, %v4874
    %v4964 = vmul.f32 %v4877, %v4877
    %v4965 = vmul.f32 %v4882, %v4882
    %v4966 = vmul.f32 %v4885, %v4885
    %v4967 = vmul.f32 %v4890, %v4890
    %v4968 = vmul.f32 %v4893, %v4893
    %v4969 = vmul.f32 %v4898, %v4898
    %v4970 = vmul.f32 %v4901, %v4901
    %v4971 = vmul.f32 %v4906, %v4906
    %v4972 = vmul.f32 %v4909, %v4909
    %v4973 = vmul.f32 %v4914, %v4914
    %v4974 = vmul.f32 %v4917, %v4917
    %v4975 = vsel %vm752, %v4959, 0.0
    %v4976 = vsel %vm752, %v4960, 0.0
    %v4977 = vadd.f32 %v4975, %v4976
    %v4978 = vsel %vm752, %v4961, 0.0
    %v4979 = vadd.f32 %v4977, %v4978
    %v4980 = vsel %vm752, %v4962, 0.0
    %v4981 = vadd.f32 %v4979, %v4980
    %v4982 = vsel %vm752, %v4963, 0.0
    %v4983 = vadd.f32 %v4981, %v4982
    %v4984 = vsel %vm752, %v4964, 0.0
    %v4985 = vadd.f32 %v4983, %v4984
    %v4986 = vsel %vm752, %v4965, 0.0
    %v4987 = vadd.f32 %v4985, %v4986
    %v4988 = vsel %vm752, %v4966, 0.0
    %v4989 = vadd.f32 %v4987, %v4988
    %v4990 = vsel %vm752, %v4967, 0.0
    %v4991 = vadd.f32 %v4989, %v4990
    %v4992 = vsel %vm752, %v4968, 0.0
    %v4993 = vadd.f32 %v4991, %v4992
    %v4994 = vsel %vm752, %v4969, 0.0
    %v4995 = vadd.f32 %v4993, %v4994
    %v4996 = vsel %vm752, %v4970, 0.0
    %v4997 = vadd.f32 %v4995, %v4996
    %v4998 = vsel %vm752, %v4971, 0.0
    %v4999 = vadd.f32 %v4997, %v4998
    %v5000 = vsel %vm752, %v4972, 0.0
    %v5001 = vadd.f32 %v4999, %v5000
    %v5002 = vsel %vm752, %v4973, 0.0
    %v5003 = vadd.f32 %v5001, %v5002
    %v5004 = vsel %vm752, %v4974, 0.0
    %v5005 = vadd.f32 %v5003, %v5004
    %v5006 = vrot.slane %v5005, 4
    %v5007 = vadd.f32 %v5005, %v5006
    %v5008 = vrot.slane %v5007, 2
    %v5009 = vadd.f32 %v5007, %v5008
    %v5010 = vrot.slane %v5009, 1
    %v5011 = vadd.f32 %v5009, %v5010
    %v5012 = vmul.f32 %v4958, 0.0078125
    %v5013 = vmul.f32 %v5011, 0.0078125
    %v5014 = vmul.f32 %v5012, %v5012
    %v5015 = vsub.f32 %v5013, %v5014
    %v5016 = vsub.f32 %v4858, %v5012
    %v5017 = vsub.f32 %v4861, %v5012
    %v5018 = vsub.f32 %v4866, %v5012
    %v5019 = vsub.f32 %v4869, %v5012
    %v5020 = vsub.f32 %v4874, %v5012
    %v5021 = vsub.f32 %v4877, %v5012
    %v5022 = vsub.f32 %v4882, %v5012
    %v5023 = vsub.f32 %v4885, %v5012
    %v5024 = vsub.f32 %v4890, %v5012
    %v5025 = vsub.f32 %v4893, %v5012
    %v5026 = vsub.f32 %v4898, %v5012
    %v5027 = vsub.f32 %v4901, %v5012
    %v5028 = vsub.f32 %v4906, %v5012
    %v5029 = vsub.f32 %v4909, %v5012
    %v5030 = vsub.f32 %v4914, %v5012
    %v5031 = vsub.f32 %v4917, %v5012
    %v5032 = vadd.f32 %v5015, 1e-05
    %v5033 = vrsqrt.pop %v5032
    %v5034 = vmul.f32 %v5016, %v5033
    %v5035 = vmul.f32 %v5017, %v5033
    %v5036 = vmul.f32 %v5018, %v5033
    %v5037 = vmul.f32 %v5019, %v5033
    %v5038 = vmul.f32 %v5020, %v5033
    %v5039 = vmul.f32 %v5021, %v5033
    %v5040 = vmul.f32 %v5022, %v5033
    %v5041 = vmul.f32 %v5023, %v5033
    %v5042 = vmul.f32 %v5024, %v5033
    %v5043 = vmul.f32 %v5025, %v5033
    %v5044 = vmul.f32 %v5026, %v5033
    %v5045 = vmul.f32 %v5027, %v5033
    %v5046 = vmul.f32 %v5028, %v5033
    %v5047 = vmul.f32 %v5029, %v5033
    %v5048 = vmul.f32 %v5030, %v5033
    %v5049 = vmul.f32 %v5031, %v5033
    %v5051 = vlaneseq
    %v5052 = vshrl.u32 %v5051, 7
    %v5053 = vsub.s32 0, %v5052
    %v5054 = vrot.slane %v4920, %v5053
    %v5056 = vmul.f32 %v5034, %v5054
    %v5057 = vmul.f32 %v5035, %v5054
    %v5058 = vmul.f32 %v5036, %v5054
    %v5059 = vmul.f32 %v5037, %v5054
    %v5060 = vmul.f32 %v5038, %v5054
    %v5061 = vmul.f32 %v5039, %v5054
    %v5062 = vmul.f32 %v5040, %v5054
    %v5063 = vmul.f32 %v5041, %v5054
    %v5064 = vmul.f32 %v5042, %v5054
    %v5065 = vmul.f32 %v5043, %v5054
    %v5066 = vmul.f32 %v5044, %v5054
    %v5067 = vmul.f32 %v5045, %v5054
    %v5068 = vmul.f32 %v5046, %v5054
    %v5069 = vmul.f32 %v5047, %v5054
    %v5070 = vmul.f32 %v5048, %v5054
    %v5071 = vmul.f32 %v5049, %v5054
    %v5073 = vlaneseq
    %v5074 = vshrl.u32 %v5073, 7
    %v5075 = vsub.s32 0, %v5074
    %v5076 = vrot.slane %v4921, %v5075
    %v5078 = vadd.f32 %v5056, %v5076
    %v5079 = vadd.f32 %v5057, %v5076
    %v5080 = vadd.f32 %v5058, %v5076
    %v5081 = vadd.f32 %v5059, %v5076
    %v5082 = vadd.f32 %v5060, %v5076
    %v5083 = vadd.f32 %v5061, %v5076
    %v5084 = vadd.f32 %v5062, %v5076
    %v5085 = vadd.f32 %v5063, %v5076
    %v5086 = vadd.f32 %v5064, %v5076
    %v5087 = vadd.f32 %v5065, %v5076
    %v5088 = vadd.f32 %v5066, %v5076
    %v5089 = vadd.f32 %v5067, %v5076
    %v5090 = vadd.f32 %v5068, %v5076
    %v5091 = vadd.f32 %v5069, %v5076
    %v5092 = vadd.f32 %v5070, %v5076
    %v5093 = vadd.f32 %v5071, %v5076
    %v5094 = vsub.f32 0.0, %v5078
    %v5095 = vsub.f32 0.0, %v5079
    %v5096 = vsub.f32 0.0, %v5080
    %v5097 = vsub.f32 0.0, %v5081
    %v5098 = vsub.f32 0.0, %v5082
    %v5099 = vsub.f32 0.0, %v5083
    %v5100 = vsub.f32 0.0, %v5084
    %v5101 = vsub.f32 0.0, %v5085
    %v5102 = vsub.f32 0.0, %v5086
    %v5103 = vsub.f32 0.0, %v5087
    %v5104 = vsub.f32 0.0, %v5088
    %v5105 = vsub.f32 0.0, %v5089
    %v5106 = vsub.f32 0.0, %v5090
    %v5107 = vsub.f32 0.0, %v5091
    %v5108 = vsub.f32 0.0, %v5092
    %v5109 = vsub.f32 0.0, %v5093
    %v5110 = vmul.f32 %v5094, 1.442695
    %v5111 = vpow.pop %v5110
    %v5112 = vmul.f32 %v5095, 1.442695
    %v5113 = vpow.pop %v5112
    %v5114 = vmul.f32 %v5096, 1.442695
    %v5115 = vpow.pop %v5114
    %v5116 = vmul.f32 %v5097, 1.442695
    %v5117 = vpow.pop %v5116
    %v5118 = vmul.f32 %v5098, 1.442695
    %v5119 = vpow.pop %v5118
    %v5120 = vmul.f32 %v5099, 1.442695
    %v5121 = vpow.pop %v5120
    %v5122 = vmul.f32 %v5100, 1.442695
    %v5123 = vpow.pop %v5122
    %v5124 = vmul.f32 %v5101, 1.442695
    %v5125 = vpow.pop %v5124
    %v5126 = vmul.f32 %v5102, 1.442695
    %v5127 = vpow.pop %v5126
    %v5128 = vmul.f32 %v5103, 1.442695
    %v5129 = vpow.pop %v5128
    %v5130 = vmul.f32 %v5104, 1.442695
    %v5131 = vpow.pop %v5130
    %v5132 = vmul.f32 %v5105, 1.442695
    %v5133 = vpow.pop %v5132
    %v5134 = vmul.f32 %v5106, 1.442695
    %v5135 = vpow.pop %v5134
    %v5136 = vmul.f32 %v5107, 1.442695
    %v5137 = vpow.pop %v5136
    %v5138 = vmul.f32 %v5108, 1.442695
    %v5139 = vpow.pop %v5138
    %v5140 = vmul.f32 %v5109, 1.442695
    %v5141 = vpow.pop %v5140
    %v5142 = vadd.f32 %v5111, 1.0
    %v5143 = vadd.f32 %v5113, 1.0
    %v5144 = vadd.f32 %v5115, 1.0
    %v5145 = vadd.f32 %v5117, 1.0
    %v5146 = vadd.f32 %v5119, 1.0
    %v5147 = vadd.f32 %v5121, 1.0
    %v5148 = vadd.f32 %v5123, 1.0
    %v5149 = vadd.f32 %v5125, 1.0
    %v5150 = vadd.f32 %v5127, 1.0
    %v5151 = vadd.f32 %v5129, 1.0
    %v5152 = vadd.f32 %v5131, 1.0
    %v5153 = vadd.f32 %v5133, 1.0
    %v5154 = vadd.f32 %v5135, 1.0
    %v5155 = vadd.f32 %v5137, 1.0
    %v5156 = vadd.f32 %v5139, 1.0
    %v5157 = vadd.f32 %v5141, 1.0
    %v5158 = vrcp.pop %v5142
    %v5159 = vrcp.pop %v5143
    %v5160 = vrcp.pop %v5144
    %v5161 = vrcp.pop %v5145
    %v5162 = vrcp.pop %v5146
    %v5163 = vrcp.pop %v5147
    %v5164 = vrcp.pop %v5148
    %v5165 = vrcp.pop %v5149
    %v5166 = vrcp.pop %v5150
    %v5167 = vrcp.pop %v5151
    %v5168 = vrcp.pop %v5152
    %v5169 = vrcp.pop %v5153
    %v5170 = vrcp.pop %v5154
    %v5171 = vrcp.pop %v5155
    %v5172 = vrcp.pop %v5156
    %v5173 = vrcp.pop %v5157
    %v5174 = vmul.f32 %v5078, %v5158
    %v5175 = vmul.f32 %v5079, %v5159
    %v5176 = vmul.f32 %v5080, %v5160
    %v5177 = vmul.f32 %v5081, %v5161
    %v5178 = vmul.f32 %v5082, %v5162
    %v5179 = vmul.f32 %v5083, %v5163
    %v5180 = vmul.f32 %v5084, %v5164
    %v5181 = vmul.f32 %v5085, %v5165
    %v5182 = vmul.f32 %v5086, %v5166
    %v5183 = vmul.f32 %v5087, %v5167
    %v5184 = vmul.f32 %v5088, %v5168
    %v5185 = vmul.f32 %v5089, %v5169
    %v5186 = vmul.f32 %v5090, %v5170
    %v5187 = vmul.f32 %v5091, %v5171
    %v5188 = vmul.f32 %v5092, %v5172
    %v5189 = vmul.f32 %v5093, %v5173
    %5190 = vst.msk [vmem:[#allocation2] sm:$0xff] %vm752, %v5174
    %5191 = vst.msk [vmem:[#allocation2 + $0x8] sm:$0xff] %vm752, %v5175
    %5192 = vst.msk [vmem:[#allocation2 + $0x10] sm:$0xff] %vm752, %v5176
    %5193 = vst.msk [vmem:[#allocation2 + $0x18] sm:$0xff] %vm752, %v5177
    %5194 = vst.msk [vmem:[#allocation2 + $0x20] sm:$0xff] %vm752, %v5178
    %5195 = vst.msk [vmem:[#allocation2 + $0x28] sm:$0xff] %vm752, %v5179
    %5196 = vst.msk [vmem:[#allocation2 + $0x30] sm:$0xff] %vm752, %v5180
    %5197 = vst.msk [vmem:[#allocation2 + $0x38] sm:$0xff] %vm752, %v5181
    %5198 = vst.msk [vmem:[#allocation2 + $0x40] sm:$0xff] %vm752, %v5182
    %5199 = vst.msk [vmem:[#allocation2 + $0x48] sm:$0xff] %vm752, %v5183
    %5200 = vst.msk [vmem:[#allocation2 + $0x50] sm:$0xff] %vm752, %v5184
    %5201 = vst.msk [vmem:[#allocation2 + $0x58] sm:$0xff] %vm752, %v5185
    %5202 = vst.msk [vmem:[#allocation2 + $0x60] sm:$0xff] %vm752, %v5186
    %5203 = vst.msk [vmem:[#allocation2 + $0x68] sm:$0xff] %vm752, %v5187
    %5204 = vst.msk [vmem:[#allocation2 + $0x70] sm:$0xff] %vm752, %v5188
    %5205 = vst.msk [vmem:[#allocation2 + $0x78] sm:$0xff] %vm752, %v5189
    // Predicated region
    $region50: #{conv_block_forward.1} parent=1 // pred_check
      _
    $region51: #{conv_block_forward.1} parent=1 // pred_check_branch
      %5207 = sbr.rel (0) target = $region53
    $region52: #{conv_block_forward.1} parent=1 // pred_region
      %s5209 = ssub.s32 2048, 2048
      %5210 = vsyncadd [#allocation3], %s5209
      %s5211 = sshll.u32 [#allocation2], 4
      %s5212 = int_to_ptr.vmem [resolvable:$true] %s5211
      %5217 = dma.vmem_to_hbm [thread:$0]  %s5212, 2048, %s12, [#allocation3], 128, 128, 8
    $region53: #{conv_block_forward.1} parent=1 // pred_fallthru
      _
    // Predicated region
    $region54: #{conv_block_forward.1} parent=1 // pred_check
      _
    $region55: #{conv_block_forward.1} parent=1 // pred_check_branch
      %5219 = sbr.rel (0) target = $region57
    $region56: #{conv_block_forward.1} parent=1 // pred_region
      %5220 = dma.done [#allocation3], 2048
    $region57: #{conv_block_forward.1} parent=1 // pred_fallthru
      _
    %5221 = vsyncpa [#allocation3], 1

</llo_original>
